<compile_context>
chip_gen: v7x
topology: tpu7x:2x2x1
jax: 0.10.0
libtpu: 0.0.40
codegen_flags: <defaults>
</compile_context>

<pallas_src>
import functools
import math

import jax
import jax.numpy as jnp
from jax import lax
from jax.experimental import pallas as pl
from jax.experimental.pallas import tpu as pltpu


# ----------------------------------------------------------------------------
# Fused multi-layer GRU kernel (all layers + all timesteps, one batch tile).
# ----------------------------------------------------------------------------
def _cpc_gru_fused_kernel(nb_layers, H_pad, L, *refs):
    # refs layout:
    #   refs[0]                    : x_ref (L, Nb, D)   time-major input tile
    #   refs[1+3l : 4+3l]          : wi (I_l, 3*H_pad), wh (H_pad, 3*H_pad),
    #                                bias (2, 3*H_pad)  [row0: folded, row1: b_hn]
    #   refs[1 + 3*nb_layers]      : out_ref (Nb, H_pad)  final hidden state
    x_ref = refs[0]
    out_ref = refs[1 + 3 * nb_layers]
    Nb = out_ref.shape[0]
    G = 3 * H_pad

    # Layer-0 input: (L, Nb, D) -> (L*Nb, D). Nb is a multiple of 8 sublanes,
    # so collapsing the leading dims is layout-preserving.
    x2d = x_ref[...].reshape(L * Nb, x_ref.shape[2])

    h = jnp.zeros((Nb, H_pad), jnp.float32)
    for layer in range(nb_layers):
        wi_ref, wh_ref, b_ref = refs[1 + 3 * layer: 4 + 3 * layer]
        wi = wi_ref[...]                              # (I_l, 3*H_pad)
        wh = wh_ref[...]                              # (H_pad, 3*H_pad)
        b_fold = b_ref[0:1, :]                        # (1, 3*H_pad)
        # b_hn must stay inside r * (gh_n + b_hn); hoist its broadcast.
        b_hn = jnp.broadcast_to(b_ref[1:2, 0:H_pad], (Nb, H_pad))

        # Batched input-side gate projection for ALL timesteps at once
        # (one big MXU matmul off the serial chain), biases folded in.
        gi_all = jnp.dot(x2d, wi, preferred_element_type=jnp.float32) + b_fold
        gi_all = gi_all.reshape(L, Nb, G)

        last_layer = layer == nb_layers - 1
        h = jnp.zeros((Nb, H_pad), jnp.float32)
        h_list = []
        # Sequential recurrence: only gh = h @ wh remains per step.
        # L is small & static here -> static unroll keeps the chain visible.
        for t in range(L):
            gi = gi_all[t]                                            # (Nb, G)
            gh = jnp.dot(h, wh, preferred_element_type=jnp.float32)   # (Nb, G)
            # PyTorch GRU gates (order r, z, n); slices are 128-lane aligned.
            r = jax.nn.sigmoid(gi[:, 0:H_pad] + gh[:, 0:H_pad])
            z = jax.nn.sigmoid(gi[:, H_pad:2 * H_pad] + gh[:, H_pad:2 * H_pad])
            n = jnp.tanh(gi[:, 2 * H_pad:] + r * (gh[:, 2 * H_pad:] + b_hn))
            h = (1.0 - z) * n + z * h
            if not last_layer:
                h_list.append(h)

        if not last_layer:
            # Next layer's input sequence stays in vregs: (L*Nb, H_pad).
            x2d = jnp.concatenate(h_list, axis=0)

    out_ref[...] = h.astype(out_ref.dtype)


# ----------------------------------------------------------------------------
# CPCAggregator forward: (N, D, L) -> (N, aggregator_dim)
# ----------------------------------------------------------------------------
def cpc_aggregator_forward(X, params, *, batch_tile=None):
    """X: (N, D, L). params: list of (w_ih, w_hh, b_ih, b_hh) per GRU layer."""
    N, D, L = X.shape
    nb_layers = len(params)
    H = params[0][1].shape[1]                 # w_hh: (3H, H)
    H_pad = ((H + 127) // 128) * 128          # lane-aligned gate width
    G = 3 * H_pad

    # (N, D, L) -> time-major (L, N, D).  (See TODO at top about producing
    # this layout upstream in a real pipeline.)
    x_seq = jnp.transpose(X, (2, 0, 1)).astype(jnp.float32)

    # Batch tile: multiple of 8 sublanes; grid over batch is "parallel".
    if batch_tile is None:
        batch_tile = min(max(8, ((N + 7) // 8) * 8), 64)
    Nb = batch_tile
    num_tiles = -(-N // Nb)
    N_pad = num_tiles * Nb
    if N_pad != N:
        x_seq = jnp.pad(x_seq, ((0, 0), (0, N_pad - N), (0, 0)))

    inputs = [x_seq]
    in_specs = [pl.BlockSpec((L, Nb, D), lambda b: (0, b, 0))]

    for layer, (w_ih, w_hh, b_ih, b_hh) in enumerate(params):
        I = w_ih.shape[1]
        I_pad = I if layer == 0 else H_pad    # layer>0 input is padded hidden
        wi = jnp.zeros((I_pad, G), jnp.float32)
        wh = jnp.zeros((H_pad, G), jnp.float32)
        for g in range(3):
            wi = wi.at[:I, g * H_pad: g * H_pad + H].set(
                w_ih[g * H:(g + 1) * H, :].T.astype(jnp.float32))
            wh = wh.at[:H, g * H_pad: g * H_pad + H].set(
                w_hh[g * H:(g + 1) * H, :].T.astype(jnp.float32))
        bias = jnp.zeros((2, G), jnp.float32)
        # row 0: b_ih(+b_hh for r,z) folded into the batched GI epilogue.
        bias = bias.at[0, 0:H].set((b_ih[0:H] + b_hh[0:H]).astype(jnp.float32))
        bias = bias.at[0, H_pad:H_pad + H].set(
            (b_ih[H:2 * H] + b_hh[H:2 * H]).astype(jnp.float32))
        bias = bias.at[0, 2 * H_pad:2 * H_pad + H].set(
            b_ih[2 * H:3 * H].astype(jnp.float32))
        # row 1: b_hn (kept inside r * (gh_n + b_hn)).
        bias = bias.at[1, 0:H].set(b_hh[2 * H:3 * H].astype(jnp.float32))

        inputs += [wi, wh, bias]
        in_specs += [
            pl.BlockSpec((I_pad, G), lambda b: (0, 0)),
            pl.BlockSpec((H_pad, G), lambda b: (0, 0)),
            pl.BlockSpec((2, G), lambda b: (0, 0)),
        ]

    kernel = functools.partial(_cpc_gru_fused_kernel, nb_layers, H_pad, L)

    out = pl.pallas_call(
        kernel,
        out_shape=jax.ShapeDtypeStruct((N_pad, H_pad), jnp.float32),
        grid_spec=pl.GridSpec(
            grid=(num_tiles,),
            in_specs=in_specs,
            out_specs=pl.BlockSpec((Nb, H_pad), lambda b: (b, 0)),
        ),
        compiler_params=pltpu.CompilerParams(
            # Batch tiles are independent GRU chains -> shardable across TCs;
            # the time recurrence stays strictly inside the kernel body.
            dimension_semantics=("parallel",),
        ),
    )(*inputs)

    return out[:N, :H]   # strip batch + lane padding


# ----------------------------------------------------------------------------
# Pure-JAX reference (lax.scan GRU) for correctness checking.
# ----------------------------------------------------------------------------
def gru_reference(X, params):
    x_seq = jnp.transpose(X, (2, 0, 1)).astype(jnp.float32)  # (L, N, D)
    for (w_ih, w_hh, b_ih, b_hh) in params:
        H = w_hh.shape[1]
        N = x_seq.shape[1]

        def step(h, x):
            gi = x @ w_ih.T + b_ih
            gh = h @ w_hh.T + b_hh
            r = jax.nn.sigmoid(gi[:, :H] + gh[:, :H])
            z = jax.nn.sigmoid(gi[:, H:2 * H] + gh[:, H:2 * H])
            n = jnp.tanh(gi[:, 2 * H:] + r * gh[:, 2 * H:])
            h_new = (1.0 - z) * n + z * h
            return h_new, h_new

        h0 = jnp.zeros((N, H), jnp.float32)
        _, outs = lax.scan(step, h0, x_seq)
        x_seq = outs
    return x_seq[-1]


# ----------------------------------------------------------------------------
# Deterministic parameter init (PyTorch GRU shapes, gate order r,z,n).
# ----------------------------------------------------------------------------
def init_gru_params(key, nb_layers, encoder_dim, aggregator_dim):
    params = []
    H = aggregator_dim
    k = 1.0 / math.sqrt(H)
    for layer in range(nb_layers):
        I = encoder_dim if layer == 0 else H
        key, k1, k2, k3, k4 = jax.random.split(key, 5)
        w_ih = jax.random.uniform(k1, (3 * H, I), jnp.float32, -k, k)
        w_hh = jax.random.uniform(k2, (3 * H, H), jnp.float32, -k, k)
        b_ih = jax.random.uniform(k3, (3 * H,), jnp.float32, -k, k)
        b_hh = jax.random.uniform(k4, (3 * H,), jnp.float32, -k, k)
        params.append((w_ih, w_hh, b_ih, b_hh))
    return params


if __name__ == "__main__":
    # Small shapes consistent with the module's forward: X is (N, D, L)
    N, D, L = 2, 16, 8          # batch, encoder_dim, sequence length
    nb_layers = 2
    aggregator_dim = 32

    key = jax.random.PRNGKey(0)
    key, kx = jax.random.split(key)
    X = jax.random.normal(kx, (N, D, L), jnp.float32)

    params = init_gru_params(key, nb_layers, D, aggregator_dim)

    out = jax.block_until_ready(cpc_aggregator_forward(X, params))
    assert out.shape == (N, aggregator_dim)

    ref = jax.block_until_ready(gru_reference(X, params))
    assert jnp.allclose(out, ref, atol=1e-4, rtol=1e-4), (
        f"max abs err {jnp.max(jnp.abs(out - ref))}")

    print("KERNEL_OK")
</pallas_src>

<mosaic_0001>
module attributes {stable_mosaic.version = 11 : i64} {
  func.func @_cpc_gru_fused_kernel(%arg0: i32, %arg1: memref<8x8x16xf32, #tpu.memory_space<vmem>>, %arg2: memref<16x384xf32, #tpu.memory_space<vmem>>, %arg3: memref<128x384xf32, #tpu.memory_space<vmem>>, %arg4: memref<2x384xf32, #tpu.memory_space<vmem>>, %arg5: memref<128x384xf32, #tpu.memory_space<vmem>>, %arg6: memref<128x384xf32, #tpu.memory_space<vmem>>, %arg7: memref<2x384xf32, #tpu.memory_space<vmem>>, %arg8: memref<8x128xf32, #tpu.memory_space<vmem>>) attributes {dimension_semantics = [#tpu.dimension_semantics<parallel>], iteration_bounds = array<i64: 1>, scalar_prefetch = 0 : i64, scratch_operands = 0 : i64, tpu.core_type = #tpu.core_type<tc>, window_params = [{transform_indices = @transform_0, window_bounds = array<i64: 8, 8, 16>}, {pipeline_mode = #tpu.pipeline_mode<synchronous>, transform_indices = @transform_1, window_bounds = array<i64: 16, 384>}, {pipeline_mode = #tpu.pipeline_mode<synchronous>, transform_indices = @transform_2, window_bounds = array<i64: 128, 384>}, {pipeline_mode = #tpu.pipeline_mode<synchronous>, transform_indices = @transform_3, window_bounds = array<i64: 2, 384>}, {pipeline_mode = #tpu.pipeline_mode<synchronous>, transform_indices = @transform_4, window_bounds = array<i64: 128, 384>}, {pipeline_mode = #tpu.pipeline_mode<synchronous>, transform_indices = @transform_5, window_bounds = array<i64: 128, 384>}, {pipeline_mode = #tpu.pipeline_mode<synchronous>, transform_indices = @transform_6, window_bounds = array<i64: 2, 384>}, {transform_indices = @transform_7, window_bounds = array<i64: 8, 128>}]} {
    %c0 = arith.constant 0 : index
    %c0_0 = arith.constant 0 : index
    %c0_1 = arith.constant 0 : index
    %0 = vector.load %arg1[%c0, %c0_0, %c0_1] : memref<8x8x16xf32, #tpu.memory_space<vmem>>, vector<8x8x16xf32>
    %1 = vector.shape_cast %0 : vector<8x8x16xf32> to vector<64x16xf32>
    %c0_2 = arith.constant 0 : index
    %c0_3 = arith.constant 0 : index
    %2 = vector.load %arg2[%c0_2, %c0_3] : memref<16x384xf32, #tpu.memory_space<vmem>>, vector<16x384xf32>
    %c0_4 = arith.constant 0 : index
    %c0_5 = arith.constant 0 : index
    %3 = vector.load %arg3[%c0_4, %c0_5] : memref<128x384xf32, #tpu.memory_space<vmem>>, vector<128x384xf32>
    %c0_6 = arith.constant 0 : index
    %c0_7 = arith.constant 0 : index
    %4 = vector.load %arg4[%c0_6, %c0_7] : memref<2x384xf32, #tpu.memory_space<vmem>>, vector<1x384xf32>
    %c1 = arith.constant 1 : index
    %c0_8 = arith.constant 0 : index
    %5 = vector.load %arg4[%c1, %c0_8] : memref<2x384xf32, #tpu.memory_space<vmem>>, vector<1x128xf32>
    %6 = vector.shape_cast %5 : vector<1x128xf32> to vector<1x128xf32>
    %7 = vector.broadcast %6 : vector<1x128xf32> to vector<8x128xf32>
    %cst = arith.constant dense<0.000000e+00> : vector<64x384xf32>
    %8 = tpu.matmul %1, %2, %cst {dimension_numbers = #tpu.dot_dimension_numbers<[1], [0], [0], [1], [0, 0, 1, 1], [], []>} : vector<64x16xf32>, vector<16x384xf32>, vector<64x384xf32> -> vector<64x384xf32>
    %9 = vector.broadcast %4 : vector<1x384xf32> to vector<64x384xf32>
    %10 = arith.addf %8, %9 : vector<64x384xf32>
    %11 = vector.shape_cast %10 : vector<64x384xf32> to vector<8x8x384xf32>
    %cst_9 = arith.constant 0.000000e+00 : f32
    %12 = vector.broadcast %cst_9 : f32 to vector<8x128xf32>
    %13 = vector.extract_strided_slice %11 {offsets = [0, 0, 0], sizes = [1, 8, 384], strides = [1, 1, 1]} : vector<8x8x384xf32> to vector<1x8x384xf32>
    %14 = vector.shape_cast %13 : vector<1x8x384xf32> to vector<8x384xf32>
    %cst_10 = arith.constant dense<0.000000e+00> : vector<8x384xf32>
    %15 = tpu.matmul %12, %3, %cst_10 {dimension_numbers = #tpu.dot_dimension_numbers<[1], [0], [0], [1], [0, 0, 1, 1], [], []>} : vector<8x128xf32>, vector<128x384xf32>, vector<8x384xf32> -> vector<8x384xf32>
    %16 = vector.extract_strided_slice %14 {offsets = [0, 0], sizes = [8, 128], strides = [1, 1]} : vector<8x384xf32> to vector<8x128xf32>
    %17 = vector.extract_strided_slice %15 {offsets = [0, 0], sizes = [8, 128], strides = [1, 1]} : vector<8x384xf32> to vector<8x128xf32>
    %18 = arith.addf %16, %17 : vector<8x128xf32>
    %19 = arith.negf %18 : vector<8x128xf32>
    %20 = math.exp %19 : vector<8x128xf32>
    %cst_11 = arith.constant 1.000000e+00 : f32
    %21 = vector.broadcast %cst_11 : f32 to vector<8x128xf32>
    %22 = arith.addf %21, %20 : vector<8x128xf32>
    %23 = arith.divf %21, %22 : vector<8x128xf32>
    %24 = vector.extract_strided_slice %14 {offsets = [0, 128], sizes = [8, 128], strides = [1, 1]} : vector<8x384xf32> to vector<8x128xf32>
    %25 = vector.extract_strided_slice %15 {offsets = [0, 128], sizes = [8, 128], strides = [1, 1]} : vector<8x384xf32> to vector<8x128xf32>
    %26 = arith.addf %24, %25 : vector<8x128xf32>
    %27 = arith.negf %26 : vector<8x128xf32>
    %28 = math.exp %27 : vector<8x128xf32>
    %cst_12 = arith.constant 1.000000e+00 : f32
    %29 = vector.broadcast %cst_12 : f32 to vector<8x128xf32>
    %30 = arith.addf %29, %28 : vector<8x128xf32>
    %31 = arith.divf %29, %30 : vector<8x128xf32>
    %32 = vector.extract_strided_slice %14 {offsets = [0, 256], sizes = [8, 128], strides = [1, 1]} : vector<8x384xf32> to vector<8x128xf32>
    %33 = vector.extract_strided_slice %15 {offsets = [0, 256], sizes = [8, 128], strides = [1, 1]} : vector<8x384xf32> to vector<8x128xf32>
    %34 = arith.addf %33, %7 : vector<8x128xf32>
    %35 = arith.mulf %23, %34 : vector<8x128xf32>
    %36 = arith.addf %32, %35 : vector<8x128xf32>
    %37 = math.tanh %36 : vector<8x128xf32>
    %cst_13 = arith.constant 1.000000e+00 : f32
    %38 = vector.broadcast %cst_13 : f32 to vector<8x128xf32>
    %39 = arith.subf %38, %31 : vector<8x128xf32>
    %40 = arith.mulf %39, %37 : vector<8x128xf32>
    %41 = arith.mulf %31, %12 : vector<8x128xf32>
    %42 = arith.addf %40, %41 : vector<8x128xf32>
    %43 = vector.extract_strided_slice %11 {offsets = [1, 0, 0], sizes = [1, 8, 384], strides = [1, 1, 1]} : vector<8x8x384xf32> to vector<1x8x384xf32>
    %44 = vector.shape_cast %43 : vector<1x8x384xf32> to vector<8x384xf32>
    %cst_14 = arith.constant dense<0.000000e+00> : vector<8x384xf32>
    %45 = tpu.matmul %42, %3, %cst_14 {dimension_numbers = #tpu.dot_dimension_numbers<[1], [0], [0], [1], [0, 0, 1, 1], [], []>} : vector<8x128xf32>, vector<128x384xf32>, vector<8x384xf32> -> vector<8x384xf32>
    %46 = vector.extract_strided_slice %44 {offsets = [0, 0], sizes = [8, 128], strides = [1, 1]} : vector<8x384xf32> to vector<8x128xf32>
    %47 = vector.extract_strided_slice %45 {offsets = [0, 0], sizes = [8, 128], strides = [1, 1]} : vector<8x384xf32> to vector<8x128xf32>
    %48 = arith.addf %46, %47 : vector<8x128xf32>
    %49 = arith.negf %48 : vector<8x128xf32>
    %50 = math.exp %49 : vector<8x128xf32>
    %cst_15 = arith.constant 1.000000e+00 : f32
    %51 = vector.broadcast %cst_15 : f32 to vector<8x128xf32>
    %52 = arith.addf %51, %50 : vector<8x128xf32>
    %53 = arith.divf %51, %52 : vector<8x128xf32>
    %54 = vector.extract_strided_slice %44 {offsets = [0, 128], sizes = [8, 128], strides = [1, 1]} : vector<8x384xf32> to vector<8x128xf32>
    %55 = vector.extract_strided_slice %45 {offsets = [0, 128], sizes = [8, 128], strides = [1, 1]} : vector<8x384xf32> to vector<8x128xf32>
    %56 = arith.addf %54, %55 : vector<8x128xf32>
    %57 = arith.negf %56 : vector<8x128xf32>
    %58 = math.exp %57 : vector<8x128xf32>
    %cst_16 = arith.constant 1.000000e+00 : f32
    %59 = vector.broadcast %cst_16 : f32 to vector<8x128xf32>
    %60 = arith.addf %59, %58 : vector<8x128xf32>
    %61 = arith.divf %59, %60 : vector<8x128xf32>
    %62 = vector.extract_strided_slice %44 {offsets = [0, 256], sizes = [8, 128], strides = [1, 1]} : vector<8x384xf32> to vector<8x128xf32>
    %63 = vector.extract_strided_slice %45 {offsets = [0, 256], sizes = [8, 128], strides = [1, 1]} : vector<8x384xf32> to vector<8x128xf32>
    %64 = arith.addf %63, %7 : vector<8x128xf32>
    %65 = arith.mulf %53, %64 : vector<8x128xf32>
    %66 = arith.addf %62, %65 : vector<8x128xf32>
    %67 = math.tanh %66 : vector<8x128xf32>
    %cst_17 = arith.constant 1.000000e+00 : f32
    %68 = vector.broadcast %cst_17 : f32 to vector<8x128xf32>
    %69 = arith.subf %68, %61 : vector<8x128xf32>
    %70 = arith.mulf %69, %67 : vector<8x128xf32>
    %71 = arith.mulf %61, %42 : vector<8x128xf32>
    %72 = arith.addf %70, %71 : vector<8x128xf32>
    %73 = vector.extract_strided_slice %11 {offsets = [2, 0, 0], sizes = [1, 8, 384], strides = [1, 1, 1]} : vector<8x8x384xf32> to vector<1x8x384xf32>
    %74 = vector.shape_cast %73 : vector<1x8x384xf32> to vector<8x384xf32>
    %cst_18 = arith.constant dense<0.000000e+00> : vector<8x384xf32>
    %75 = tpu.matmul %72, %3, %cst_18 {dimension_numbers = #tpu.dot_dimension_numbers<[1], [0], [0], [1], [0, 0, 1, 1], [], []>} : vector<8x128xf32>, vector<128x384xf32>, vector<8x384xf32> -> vector<8x384xf32>
    %76 = vector.extract_strided_slice %74 {offsets = [0, 0], sizes = [8, 128], strides = [1, 1]} : vector<8x384xf32> to vector<8x128xf32>
    %77 = vector.extract_strided_slice %75 {offsets = [0, 0], sizes = [8, 128], strides = [1, 1]} : vector<8x384xf32> to vector<8x128xf32>
    %78 = arith.addf %76, %77 : vector<8x128xf32>
    %79 = arith.negf %78 : vector<8x128xf32>
    %80 = math.exp %79 : vector<8x128xf32>
    %cst_19 = arith.constant 1.000000e+00 : f32
    %81 = vector.broadcast %cst_19 : f32 to vector<8x128xf32>
    %82 = arith.addf %81, %80 : vector<8x128xf32>
    %83 = arith.divf %81, %82 : vector<8x128xf32>
    %84 = vector.extract_strided_slice %74 {offsets = [0, 128], sizes = [8, 128], strides = [1, 1]} : vector<8x384xf32> to vector<8x128xf32>
    %85 = vector.extract_strided_slice %75 {offsets = [0, 128], sizes = [8, 128], strides = [1, 1]} : vector<8x384xf32> to vector<8x128xf32>
    %86 = arith.addf %84, %85 : vector<8x128xf32>
    %87 = arith.negf %86 : vector<8x128xf32>
    %88 = math.exp %87 : vector<8x128xf32>
    %cst_20 = arith.constant 1.000000e+00 : f32
    %89 = vector.broadcast %cst_20 : f32 to vector<8x128xf32>
    %90 = arith.addf %89, %88 : vector<8x128xf32>
    %91 = arith.divf %89, %90 : vector<8x128xf32>
    %92 = vector.extract_strided_slice %74 {offsets = [0, 256], sizes = [8, 128], strides = [1, 1]} : vector<8x384xf32> to vector<8x128xf32>
    %93 = vector.extract_strided_slice %75 {offsets = [0, 256], sizes = [8, 128], strides = [1, 1]} : vector<8x384xf32> to vector<8x128xf32>
    %94 = arith.addf %93, %7 : vector<8x128xf32>
    %95 = arith.mulf %83, %94 : vector<8x128xf32>
    %96 = arith.addf %92, %95 : vector<8x128xf32>
    %97 = math.tanh %96 : vector<8x128xf32>
    %cst_21 = arith.constant 1.000000e+00 : f32
    %98 = vector.broadcast %cst_21 : f32 to vector<8x128xf32>
    %99 = arith.subf %98, %91 : vector<8x128xf32>
    %100 = arith.mulf %99, %97 : vector<8x128xf32>
    %101 = arith.mulf %91, %72 : vector<8x128xf32>
    %102 = arith.addf %100, %101 : vector<8x128xf32>
    %103 = vector.extract_strided_slice %11 {offsets = [3, 0, 0], sizes = [1, 8, 384], strides = [1, 1, 1]} : vector<8x8x384xf32> to vector<1x8x384xf32>
    %104 = vector.shape_cast %103 : vector<1x8x384xf32> to vector<8x384xf32>
    %cst_22 = arith.constant dense<0.000000e+00> : vector<8x384xf32>
    %105 = tpu.matmul %102, %3, %cst_22 {dimension_numbers = #tpu.dot_dimension_numbers<[1], [0], [0], [1], [0, 0, 1, 1], [], []>} : vector<8x128xf32>, vector<128x384xf32>, vector<8x384xf32> -> vector<8x384xf32>
    %106 = vector.extract_strided_slice %104 {offsets = [0, 0], sizes = [8, 128], strides = [1, 1]} : vector<8x384xf32> to vector<8x128xf32>
    %107 = vector.extract_strided_slice %105 {offsets = [0, 0], sizes = [8, 128], strides = [1, 1]} : vector<8x384xf32> to vector<8x128xf32>
    %108 = arith.addf %106, %107 : vector<8x128xf32>
    %109 = arith.negf %108 : vector<8x128xf32>
    %110 = math.exp %109 : vector<8x128xf32>
    %cst_23 = arith.constant 1.000000e+00 : f32
    %111 = vector.broadcast %cst_23 : f32 to vector<8x128xf32>
    %112 = arith.addf %111, %110 : vector<8x128xf32>
    %113 = arith.divf %111, %112 : vector<8x128xf32>
    %114 = vector.extract_strided_slice %104 {offsets = [0, 128], sizes = [8, 128], strides = [1, 1]} : vector<8x384xf32> to vector<8x128xf32>
    %115 = vector.extract_strided_slice %105 {offsets = [0, 128], sizes = [8, 128], strides = [1, 1]} : vector<8x384xf32> to vector<8x128xf32>
    %116 = arith.addf %114, %115 : vector<8x128xf32>
    %117 = arith.negf %116 : vector<8x128xf32>
    %118 = math.exp %117 : vector<8x128xf32>
    %cst_24 = arith.constant 1.000000e+00 : f32
    %119 = vector.broadcast %cst_24 : f32 to vector<8x128xf32>
    %120 = arith.addf %119, %118 : vector<8x128xf32>
    %121 = arith.divf %119, %120 : vector<8x128xf32>
    %122 = vector.extract_strided_slice %104 {offsets = [0, 256], sizes = [8, 128], strides = [1, 1]} : vector<8x384xf32> to vector<8x128xf32>
    %123 = vector.extract_strided_slice %105 {offsets = [0, 256], sizes = [8, 128], strides = [1, 1]} : vector<8x384xf32> to vector<8x128xf32>
    %124 = arith.addf %123, %7 : vector<8x128xf32>
    %125 = arith.mulf %113, %124 : vector<8x128xf32>
    %126 = arith.addf %122, %125 : vector<8x128xf32>
    %127 = math.tanh %126 : vector<8x128xf32>
    %cst_25 = arith.constant 1.000000e+00 : f32
    %128 = vector.broadcast %cst_25 : f32 to vector<8x128xf32>
    %129 = arith.subf %128, %121 : vector<8x128xf32>
    %130 = arith.mulf %129, %127 : vector<8x128xf32>
    %131 = arith.mulf %121, %102 : vector<8x128xf32>
    %132 = arith.addf %130, %131 : vector<8x128xf32>
    %133 = vector.extract_strided_slice %11 {offsets = [4, 0, 0], sizes = [1, 8, 384], strides = [1, 1, 1]} : vector<8x8x384xf32> to vector<1x8x384xf32>
    %134 = vector.shape_cast %133 : vector<1x8x384xf32> to vector<8x384xf32>
    %cst_26 = arith.constant dense<0.000000e+00> : vector<8x384xf32>
    %135 = tpu.matmul %132, %3, %cst_26 {dimension_numbers = #tpu.dot_dimension_numbers<[1], [0], [0], [1], [0, 0, 1, 1], [], []>} : vector<8x128xf32>, vector<128x384xf32>, vector<8x384xf32> -> vector<8x384xf32>
    %136 = vector.extract_strided_slice %134 {offsets = [0, 0], sizes = [8, 128], strides = [1, 1]} : vector<8x384xf32> to vector<8x128xf32>
    %137 = vector.extract_strided_slice %135 {offsets = [0, 0], sizes = [8, 128], strides = [1, 1]} : vector<8x384xf32> to vector<8x128xf32>
    %138 = arith.addf %136, %137 : vector<8x128xf32>
    %139 = arith.negf %138 : vector<8x128xf32>
    %140 = math.exp %139 : vector<8x128xf32>
    %cst_27 = arith.constant 1.000000e+00 : f32
    %141 = vector.broadcast %cst_27 : f32 to vector<8x128xf32>
    %142 = arith.addf %141, %140 : vector<8x128xf32>
    %143 = arith.divf %141, %142 : vector<8x128xf32>
    %144 = vector.extract_strided_slice %134 {offsets = [0, 128], sizes = [8, 128], strides = [1, 1]} : vector<8x384xf32> to vector<8x128xf32>
    %145 = vector.extract_strided_slice %135 {offsets = [0, 128], sizes = [8, 128], strides = [1, 1]} : vector<8x384xf32> to vector<8x128xf32>
    %146 = arith.addf %144, %145 : vector<8x128xf32>
    %147 = arith.negf %146 : vector<8x128xf32>
    %148 = math.exp %147 : vector<8x128xf32>
    %cst_28 = arith.constant 1.000000e+00 : f32
    %149 = vector.broadcast %cst_28 : f32 to vector<8x128xf32>
    %150 = arith.addf %149, %148 : vector<8x128xf32>
    %151 = arith.divf %149, %150 : vector<8x128xf32>
    %152 = vector.extract_strided_slice %134 {offsets = [0, 256], sizes = [8, 128], strides = [1, 1]} : vector<8x384xf32> to vector<8x128xf32>
    %153 = vector.extract_strided_slice %135 {offsets = [0, 256], sizes = [8, 128], strides = [1, 1]} : vector<8x384xf32> to vector<8x128xf32>
    %154 = arith.addf %153, %7 : vector<8x128xf32>
    %155 = arith.mulf %143, %154 : vector<8x128xf32>
    %156 = arith.addf %152, %155 : vector<8x128xf32>
    %157 = math.tanh %156 : vector<8x128xf32>
    %cst_29 = arith.constant 1.000000e+00 : f32
    %158 = vector.broadcast %cst_29 : f32 to vector<8x128xf32>
    %159 = arith.subf %158, %151 : vector<8x128xf32>
    %160 = arith.mulf %159, %157 : vector<8x128xf32>
    %161 = arith.mulf %151, %132 : vector<8x128xf32>
    %162 = arith.addf %160, %161 : vector<8x128xf32>
    %163 = vector.extract_strided_slice %11 {offsets = [5, 0, 0], sizes = [1, 8, 384], strides = [1, 1, 1]} : vector<8x8x384xf32> to vector<1x8x384xf32>
    %164 = vector.shape_cast %163 : vector<1x8x384xf32> to vector<8x384xf32>
    %cst_30 = arith.constant dense<0.000000e+00> : vector<8x384xf32>
    %165 = tpu.matmul %162, %3, %cst_30 {dimension_numbers = #tpu.dot_dimension_numbers<[1], [0], [0], [1], [0, 0, 1, 1], [], []>} : vector<8x128xf32>, vector<128x384xf32>, vector<8x384xf32> -> vector<8x384xf32>
    %166 = vector.extract_strided_slice %164 {offsets = [0, 0], sizes = [8, 128], strides = [1, 1]} : vector<8x384xf32> to vector<8x128xf32>
    %167 = vector.extract_strided_slice %165 {offsets = [0, 0], sizes = [8, 128], strides = [1, 1]} : vector<8x384xf32> to vector<8x128xf32>
    %168 = arith.addf %166, %167 : vector<8x128xf32>
    %169 = arith.negf %168 : vector<8x128xf32>
    %170 = math.exp %169 : vector<8x128xf32>
    %cst_31 = arith.constant 1.000000e+00 : f32
    %171 = vector.broadcast %cst_31 : f32 to vector<8x128xf32>
    %172 = arith.addf %171, %170 : vector<8x128xf32>
    %173 = arith.divf %171, %172 : vector<8x128xf32>
    %174 = vector.extract_strided_slice %164 {offsets = [0, 128], sizes = [8, 128], strides = [1, 1]} : vector<8x384xf32> to vector<8x128xf32>
    %175 = vector.extract_strided_slice %165 {offsets = [0, 128], sizes = [8, 128], strides = [1, 1]} : vector<8x384xf32> to vector<8x128xf32>
    %176 = arith.addf %174, %175 : vector<8x128xf32>
    %177 = arith.negf %176 : vector<8x128xf32>
    %178 = math.exp %177 : vector<8x128xf32>
    %cst_32 = arith.constant 1.000000e+00 : f32
    %179 = vector.broadcast %cst_32 : f32 to vector<8x128xf32>
    %180 = arith.addf %179, %178 : vector<8x128xf32>
    %181 = arith.divf %179, %180 : vector<8x128xf32>
    %182 = vector.extract_strided_slice %164 {offsets = [0, 256], sizes = [8, 128], strides = [1, 1]} : vector<8x384xf32> to vector<8x128xf32>
    %183 = vector.extract_strided_slice %165 {offsets = [0, 256], sizes = [8, 128], strides = [1, 1]} : vector<8x384xf32> to vector<8x128xf32>
    %184 = arith.addf %183, %7 : vector<8x128xf32>
    %185 = arith.mulf %173, %184 : vector<8x128xf32>
    %186 = arith.addf %182, %185 : vector<8x128xf32>
    %187 = math.tanh %186 : vector<8x128xf32>
    %cst_33 = arith.constant 1.000000e+00 : f32
    %188 = vector.broadcast %cst_33 : f32 to vector<8x128xf32>
    %189 = arith.subf %188, %181 : vector<8x128xf32>
    %190 = arith.mulf %189, %187 : vector<8x128xf32>
    %191 = arith.mulf %181, %162 : vector<8x128xf32>
    %192 = arith.addf %190, %191 : vector<8x128xf32>
    %193 = vector.extract_strided_slice %11 {offsets = [6, 0, 0], sizes = [1, 8, 384], strides = [1, 1, 1]} : vector<8x8x384xf32> to vector<1x8x384xf32>
    %194 = vector.shape_cast %193 : vector<1x8x384xf32> to vector<8x384xf32>
    %cst_34 = arith.constant dense<0.000000e+00> : vector<8x384xf32>
    %195 = tpu.matmul %192, %3, %cst_34 {dimension_numbers = #tpu.dot_dimension_numbers<[1], [0], [0], [1], [0, 0, 1, 1], [], []>} : vector<8x128xf32>, vector<128x384xf32>, vector<8x384xf32> -> vector<8x384xf32>
    %196 = vector.extract_strided_slice %194 {offsets = [0, 0], sizes = [8, 128], strides = [1, 1]} : vector<8x384xf32> to vector<8x128xf32>
    %197 = vector.extract_strided_slice %195 {offsets = [0, 0], sizes = [8, 128], strides = [1, 1]} : vector<8x384xf32> to vector<8x128xf32>
    %198 = arith.addf %196, %197 : vector<8x128xf32>
    %199 = arith.negf %198 : vector<8x128xf32>
    %200 = math.exp %199 : vector<8x128xf32>
    %cst_35 = arith.constant 1.000000e+00 : f32
    %201 = vector.broadcast %cst_35 : f32 to vector<8x128xf32>
    %202 = arith.addf %201, %200 : vector<8x128xf32>
    %203 = arith.divf %201, %202 : vector<8x128xf32>
    %204 = vector.extract_strided_slice %194 {offsets = [0, 128], sizes = [8, 128], strides = [1, 1]} : vector<8x384xf32> to vector<8x128xf32>
    %205 = vector.extract_strided_slice %195 {offsets = [0, 128], sizes = [8, 128], strides = [1, 1]} : vector<8x384xf32> to vector<8x128xf32>
    %206 = arith.addf %204, %205 : vector<8x128xf32>
    %207 = arith.negf %206 : vector<8x128xf32>
    %208 = math.exp %207 : vector<8x128xf32>
    %cst_36 = arith.constant 1.000000e+00 : f32
    %209 = vector.broadcast %cst_36 : f32 to vector<8x128xf32>
    %210 = arith.addf %209, %208 : vector<8x128xf32>
    %211 = arith.divf %209, %210 : vector<8x128xf32>
    %212 = vector.extract_strided_slice %194 {offsets = [0, 256], sizes = [8, 128], strides = [1, 1]} : vector<8x384xf32> to vector<8x128xf32>
    %213 = vector.extract_strided_slice %195 {offsets = [0, 256], sizes = [8, 128], strides = [1, 1]} : vector<8x384xf32> to vector<8x128xf32>
    %214 = arith.addf %213, %7 : vector<8x128xf32>
    %215 = arith.mulf %203, %214 : vector<8x128xf32>
    %216 = arith.addf %212, %215 : vector<8x128xf32>
    %217 = math.tanh %216 : vector<8x128xf32>
    %cst_37 = arith.constant 1.000000e+00 : f32
    %218 = vector.broadcast %cst_37 : f32 to vector<8x128xf32>
    %219 = arith.subf %218, %211 : vector<8x128xf32>
    %220 = arith.mulf %219, %217 : vector<8x128xf32>
    %221 = arith.mulf %211, %192 : vector<8x128xf32>
    %222 = arith.addf %220, %221 : vector<8x128xf32>
    %223 = vector.extract_strided_slice %11 {offsets = [7, 0, 0], sizes = [1, 8, 384], strides = [1, 1, 1]} : vector<8x8x384xf32> to vector<1x8x384xf32>
    %224 = vector.shape_cast %223 : vector<1x8x384xf32> to vector<8x384xf32>
    %cst_38 = arith.constant dense<0.000000e+00> : vector<8x384xf32>
    %225 = tpu.matmul %222, %3, %cst_38 {dimension_numbers = #tpu.dot_dimension_numbers<[1], [0], [0], [1], [0, 0, 1, 1], [], []>} : vector<8x128xf32>, vector<128x384xf32>, vector<8x384xf32> -> vector<8x384xf32>
    %226 = vector.extract_strided_slice %224 {offsets = [0, 0], sizes = [8, 128], strides = [1, 1]} : vector<8x384xf32> to vector<8x128xf32>
    %227 = vector.extract_strided_slice %225 {offsets = [0, 0], sizes = [8, 128], strides = [1, 1]} : vector<8x384xf32> to vector<8x128xf32>
    %228 = arith.addf %226, %227 : vector<8x128xf32>
    %229 = arith.negf %228 : vector<8x128xf32>
    %230 = math.exp %229 : vector<8x128xf32>
    %cst_39 = arith.constant 1.000000e+00 : f32
    %231 = vector.broadcast %cst_39 : f32 to vector<8x128xf32>
    %232 = arith.addf %231, %230 : vector<8x128xf32>
    %233 = arith.divf %231, %232 : vector<8x128xf32>
    %234 = vector.extract_strided_slice %224 {offsets = [0, 128], sizes = [8, 128], strides = [1, 1]} : vector<8x384xf32> to vector<8x128xf32>
    %235 = vector.extract_strided_slice %225 {offsets = [0, 128], sizes = [8, 128], strides = [1, 1]} : vector<8x384xf32> to vector<8x128xf32>
    %236 = arith.addf %234, %235 : vector<8x128xf32>
    %237 = arith.negf %236 : vector<8x128xf32>
    %238 = math.exp %237 : vector<8x128xf32>
    %cst_40 = arith.constant 1.000000e+00 : f32
    %239 = vector.broadcast %cst_40 : f32 to vector<8x128xf32>
    %240 = arith.addf %239, %238 : vector<8x128xf32>
    %241 = arith.divf %239, %240 : vector<8x128xf32>
    %242 = vector.extract_strided_slice %224 {offsets = [0, 256], sizes = [8, 128], strides = [1, 1]} : vector<8x384xf32> to vector<8x128xf32>
    %243 = vector.extract_strided_slice %225 {offsets = [0, 256], sizes = [8, 128], strides = [1, 1]} : vector<8x384xf32> to vector<8x128xf32>
    %244 = arith.addf %243, %7 : vector<8x128xf32>
    %245 = arith.mulf %233, %244 : vector<8x128xf32>
    %246 = arith.addf %242, %245 : vector<8x128xf32>
    %247 = math.tanh %246 : vector<8x128xf32>
    %cst_41 = arith.constant 1.000000e+00 : f32
    %248 = vector.broadcast %cst_41 : f32 to vector<8x128xf32>
    %249 = arith.subf %248, %241 : vector<8x128xf32>
    %250 = arith.mulf %249, %247 : vector<8x128xf32>
    %251 = arith.mulf %241, %222 : vector<8x128xf32>
    %252 = arith.addf %250, %251 : vector<8x128xf32>
    %253 = tpu.concatenate %42, %72, %102, %132, %162, %192, %222, %252 in 0 : vector<8x128xf32>, vector<8x128xf32>, vector<8x128xf32>, vector<8x128xf32>, vector<8x128xf32>, vector<8x128xf32>, vector<8x128xf32>, vector<8x128xf32> -> vector<64x128xf32>
    %c0_42 = arith.constant 0 : index
    %c0_43 = arith.constant 0 : index
    %254 = vector.load %arg5[%c0_42, %c0_43] : memref<128x384xf32, #tpu.memory_space<vmem>>, vector<128x384xf32>
    %c0_44 = arith.constant 0 : index
    %c0_45 = arith.constant 0 : index
    %255 = vector.load %arg6[%c0_44, %c0_45] : memref<128x384xf32, #tpu.memory_space<vmem>>, vector<128x384xf32>
    %c0_46 = arith.constant 0 : index
    %c0_47 = arith.constant 0 : index
    %256 = vector.load %arg7[%c0_46, %c0_47] : memref<2x384xf32, #tpu.memory_space<vmem>>, vector<1x384xf32>
    %c1_48 = arith.constant 1 : index
    %c0_49 = arith.constant 0 : index
    %257 = vector.load %arg7[%c1_48, %c0_49] : memref<2x384xf32, #tpu.memory_space<vmem>>, vector<1x128xf32>
    %258 = vector.shape_cast %257 : vector<1x128xf32> to vector<1x128xf32>
    %259 = vector.broadcast %258 : vector<1x128xf32> to vector<8x128xf32>
    %cst_50 = arith.constant dense<0.000000e+00> : vector<64x384xf32>
    %260 = tpu.matmul %253, %254, %cst_50 {dimension_numbers = #tpu.dot_dimension_numbers<[1], [0], [0], [1], [0, 0, 1, 1], [], []>} : vector<64x128xf32>, vector<128x384xf32>, vector<64x384xf32> -> vector<64x384xf32>
    %261 = vector.broadcast %256 : vector<1x384xf32> to vector<64x384xf32>
    %262 = arith.addf %260, %261 : vector<64x384xf32>
    %263 = vector.shape_cast %262 : vector<64x384xf32> to vector<8x8x384xf32>
    %cst_51 = arith.constant 0.000000e+00 : f32
    %264 = vector.broadcast %cst_51 : f32 to vector<8x128xf32>
    %265 = vector.extract_strided_slice %263 {offsets = [0, 0, 0], sizes = [1, 8, 384], strides = [1, 1, 1]} : vector<8x8x384xf32> to vector<1x8x384xf32>
    %266 = vector.shape_cast %265 : vector<1x8x384xf32> to vector<8x384xf32>
    %cst_52 = arith.constant dense<0.000000e+00> : vector<8x384xf32>
    %267 = tpu.matmul %264, %255, %cst_52 {dimension_numbers = #tpu.dot_dimension_numbers<[1], [0], [0], [1], [0, 0, 1, 1], [], []>} : vector<8x128xf32>, vector<128x384xf32>, vector<8x384xf32> -> vector<8x384xf32>
    %268 = vector.extract_strided_slice %266 {offsets = [0, 0], sizes = [8, 128], strides = [1, 1]} : vector<8x384xf32> to vector<8x128xf32>
    %269 = vector.extract_strided_slice %267 {offsets = [0, 0], sizes = [8, 128], strides = [1, 1]} : vector<8x384xf32> to vector<8x128xf32>
    %270 = arith.addf %268, %269 : vector<8x128xf32>
    %271 = arith.negf %270 : vector<8x128xf32>
    %272 = math.exp %271 : vector<8x128xf32>
    %cst_53 = arith.constant 1.000000e+00 : f32
    %273 = vector.broadcast %cst_53 : f32 to vector<8x128xf32>
    %274 = arith.addf %273, %272 : vector<8x128xf32>
    %275 = arith.divf %273, %274 : vector<8x128xf32>
    %276 = vector.extract_strided_slice %266 {offsets = [0, 128], sizes = [8, 128], strides = [1, 1]} : vector<8x384xf32> to vector<8x128xf32>
    %277 = vector.extract_strided_slice %267 {offsets = [0, 128], sizes = [8, 128], strides = [1, 1]} : vector<8x384xf32> to vector<8x128xf32>
    %278 = arith.addf %276, %277 : vector<8x128xf32>
    %279 = arith.negf %278 : vector<8x128xf32>
    %280 = math.exp %279 : vector<8x128xf32>
    %cst_54 = arith.constant 1.000000e+00 : f32
    %281 = vector.broadcast %cst_54 : f32 to vector<8x128xf32>
    %282 = arith.addf %281, %280 : vector<8x128xf32>
    %283 = arith.divf %281, %282 : vector<8x128xf32>
    %284 = vector.extract_strided_slice %266 {offsets = [0, 256], sizes = [8, 128], strides = [1, 1]} : vector<8x384xf32> to vector<8x128xf32>
    %285 = vector.extract_strided_slice %267 {offsets = [0, 256], sizes = [8, 128], strides = [1, 1]} : vector<8x384xf32> to vector<8x128xf32>
    %286 = arith.addf %285, %259 : vector<8x128xf32>
    %287 = arith.mulf %275, %286 : vector<8x128xf32>
    %288 = arith.addf %284, %287 : vector<8x128xf32>
    %289 = math.tanh %288 : vector<8x128xf32>
    %cst_55 = arith.constant 1.000000e+00 : f32
    %290 = vector.broadcast %cst_55 : f32 to vector<8x128xf32>
    %291 = arith.subf %290, %283 : vector<8x128xf32>
    %292 = arith.mulf %291, %289 : vector<8x128xf32>
    %293 = arith.mulf %283, %264 : vector<8x128xf32>
    %294 = arith.addf %292, %293 : vector<8x128xf32>
    %295 = vector.extract_strided_slice %263 {offsets = [1, 0, 0], sizes = [1, 8, 384], strides = [1, 1, 1]} : vector<8x8x384xf32> to vector<1x8x384xf32>
    %296 = vector.shape_cast %295 : vector<1x8x384xf32> to vector<8x384xf32>
    %cst_56 = arith.constant dense<0.000000e+00> : vector<8x384xf32>
    %297 = tpu.matmul %294, %255, %cst_56 {dimension_numbers = #tpu.dot_dimension_numbers<[1], [0], [0], [1], [0, 0, 1, 1], [], []>} : vector<8x128xf32>, vector<128x384xf32>, vector<8x384xf32> -> vector<8x384xf32>
    %298 = vector.extract_strided_slice %296 {offsets = [0, 0], sizes = [8, 128], strides = [1, 1]} : vector<8x384xf32> to vector<8x128xf32>
    %299 = vector.extract_strided_slice %297 {offsets = [0, 0], sizes = [8, 128], strides = [1, 1]} : vector<8x384xf32> to vector<8x128xf32>
    %300 = arith.addf %298, %299 : vector<8x128xf32>
    %301 = arith.negf %300 : vector<8x128xf32>
    %302 = math.exp %301 : vector<8x128xf32>
    %cst_57 = arith.constant 1.000000e+00 : f32
    %303 = vector.broadcast %cst_57 : f32 to vector<8x128xf32>
    %304 = arith.addf %303, %302 : vector<8x128xf32>
    %305 = arith.divf %303, %304 : vector<8x128xf32>
    %306 = vector.extract_strided_slice %296 {offsets = [0, 128], sizes = [8, 128], strides = [1, 1]} : vector<8x384xf32> to vector<8x128xf32>
    %307 = vector.extract_strided_slice %297 {offsets = [0, 128], sizes = [8, 128], strides = [1, 1]} : vector<8x384xf32> to vector<8x128xf32>
    %308 = arith.addf %306, %307 : vector<8x128xf32>
    %309 = arith.negf %308 : vector<8x128xf32>
    %310 = math.exp %309 : vector<8x128xf32>
    %cst_58 = arith.constant 1.000000e+00 : f32
    %311 = vector.broadcast %cst_58 : f32 to vector<8x128xf32>
    %312 = arith.addf %311, %310 : vector<8x128xf32>
    %313 = arith.divf %311, %312 : vector<8x128xf32>
    %314 = vector.extract_strided_slice %296 {offsets = [0, 256], sizes = [8, 128], strides = [1, 1]} : vector<8x384xf32> to vector<8x128xf32>
    %315 = vector.extract_strided_slice %297 {offsets = [0, 256], sizes = [8, 128], strides = [1, 1]} : vector<8x384xf32> to vector<8x128xf32>
    %316 = arith.addf %315, %259 : vector<8x128xf32>
    %317 = arith.mulf %305, %316 : vector<8x128xf32>
    %318 = arith.addf %314, %317 : vector<8x128xf32>
    %319 = math.tanh %318 : vector<8x128xf32>
    %cst_59 = arith.constant 1.000000e+00 : f32
    %320 = vector.broadcast %cst_59 : f32 to vector<8x128xf32>
    %321 = arith.subf %320, %313 : vector<8x128xf32>
    %322 = arith.mulf %321, %319 : vector<8x128xf32>
    %323 = arith.mulf %313, %294 : vector<8x128xf32>
    %324 = arith.addf %322, %323 : vector<8x128xf32>
    %325 = vector.extract_strided_slice %263 {offsets = [2, 0, 0], sizes = [1, 8, 384], strides = [1, 1, 1]} : vector<8x8x384xf32> to vector<1x8x384xf32>
    %326 = vector.shape_cast %325 : vector<1x8x384xf32> to vector<8x384xf32>
    %cst_60 = arith.constant dense<0.000000e+00> : vector<8x384xf32>
    %327 = tpu.matmul %324, %255, %cst_60 {dimension_numbers = #tpu.dot_dimension_numbers<[1], [0], [0], [1], [0, 0, 1, 1], [], []>} : vector<8x128xf32>, vector<128x384xf32>, vector<8x384xf32> -> vector<8x384xf32>
    %328 = vector.extract_strided_slice %326 {offsets = [0, 0], sizes = [8, 128], strides = [1, 1]} : vector<8x384xf32> to vector<8x128xf32>
    %329 = vector.extract_strided_slice %327 {offsets = [0, 0], sizes = [8, 128], strides = [1, 1]} : vector<8x384xf32> to vector<8x128xf32>
    %330 = arith.addf %328, %329 : vector<8x128xf32>
    %331 = arith.negf %330 : vector<8x128xf32>
    %332 = math.exp %331 : vector<8x128xf32>
    %cst_61 = arith.constant 1.000000e+00 : f32
    %333 = vector.broadcast %cst_61 : f32 to vector<8x128xf32>
    %334 = arith.addf %333, %332 : vector<8x128xf32>
    %335 = arith.divf %333, %334 : vector<8x128xf32>
    %336 = vector.extract_strided_slice %326 {offsets = [0, 128], sizes = [8, 128], strides = [1, 1]} : vector<8x384xf32> to vector<8x128xf32>
    %337 = vector.extract_strided_slice %327 {offsets = [0, 128], sizes = [8, 128], strides = [1, 1]} : vector<8x384xf32> to vector<8x128xf32>
    %338 = arith.addf %336, %337 : vector<8x128xf32>
    %339 = arith.negf %338 : vector<8x128xf32>
    %340 = math.exp %339 : vector<8x128xf32>
    %cst_62 = arith.constant 1.000000e+00 : f32
    %341 = vector.broadcast %cst_62 : f32 to vector<8x128xf32>
    %342 = arith.addf %341, %340 : vector<8x128xf32>
    %343 = arith.divf %341, %342 : vector<8x128xf32>
    %344 = vector.extract_strided_slice %326 {offsets = [0, 256], sizes = [8, 128], strides = [1, 1]} : vector<8x384xf32> to vector<8x128xf32>
    %345 = vector.extract_strided_slice %327 {offsets = [0, 256], sizes = [8, 128], strides = [1, 1]} : vector<8x384xf32> to vector<8x128xf32>
    %346 = arith.addf %345, %259 : vector<8x128xf32>
    %347 = arith.mulf %335, %346 : vector<8x128xf32>
    %348 = arith.addf %344, %347 : vector<8x128xf32>
    %349 = math.tanh %348 : vector<8x128xf32>
    %cst_63 = arith.constant 1.000000e+00 : f32
    %350 = vector.broadcast %cst_63 : f32 to vector<8x128xf32>
    %351 = arith.subf %350, %343 : vector<8x128xf32>
    %352 = arith.mulf %351, %349 : vector<8x128xf32>
    %353 = arith.mulf %343, %324 : vector<8x128xf32>
    %354 = arith.addf %352, %353 : vector<8x128xf32>
    %355 = vector.extract_strided_slice %263 {offsets = [3, 0, 0], sizes = [1, 8, 384], strides = [1, 1, 1]} : vector<8x8x384xf32> to vector<1x8x384xf32>
    %356 = vector.shape_cast %355 : vector<1x8x384xf32> to vector<8x384xf32>
    %cst_64 = arith.constant dense<0.000000e+00> : vector<8x384xf32>
    %357 = tpu.matmul %354, %255, %cst_64 {dimension_numbers = #tpu.dot_dimension_numbers<[1], [0], [0], [1], [0, 0, 1, 1], [], []>} : vector<8x128xf32>, vector<128x384xf32>, vector<8x384xf32> -> vector<8x384xf32>
    %358 = vector.extract_strided_slice %356 {offsets = [0, 0], sizes = [8, 128], strides = [1, 1]} : vector<8x384xf32> to vector<8x128xf32>
    %359 = vector.extract_strided_slice %357 {offsets = [0, 0], sizes = [8, 128], strides = [1, 1]} : vector<8x384xf32> to vector<8x128xf32>
    %360 = arith.addf %358, %359 : vector<8x128xf32>
    %361 = arith.negf %360 : vector<8x128xf32>
    %362 = math.exp %361 : vector<8x128xf32>
    %cst_65 = arith.constant 1.000000e+00 : f32
    %363 = vector.broadcast %cst_65 : f32 to vector<8x128xf32>
    %364 = arith.addf %363, %362 : vector<8x128xf32>
    %365 = arith.divf %363, %364 : vector<8x128xf32>
    %366 = vector.extract_strided_slice %356 {offsets = [0, 128], sizes = [8, 128], strides = [1, 1]} : vector<8x384xf32> to vector<8x128xf32>
    %367 = vector.extract_strided_slice %357 {offsets = [0, 128], sizes = [8, 128], strides = [1, 1]} : vector<8x384xf32> to vector<8x128xf32>
    %368 = arith.addf %366, %367 : vector<8x128xf32>
    %369 = arith.negf %368 : vector<8x128xf32>
    %370 = math.exp %369 : vector<8x128xf32>
    %cst_66 = arith.constant 1.000000e+00 : f32
    %371 = vector.broadcast %cst_66 : f32 to vector<8x128xf32>
    %372 = arith.addf %371, %370 : vector<8x128xf32>
    %373 = arith.divf %371, %372 : vector<8x128xf32>
    %374 = vector.extract_strided_slice %356 {offsets = [0, 256], sizes = [8, 128], strides = [1, 1]} : vector<8x384xf32> to vector<8x128xf32>
    %375 = vector.extract_strided_slice %357 {offsets = [0, 256], sizes = [8, 128], strides = [1, 1]} : vector<8x384xf32> to vector<8x128xf32>
    %376 = arith.addf %375, %259 : vector<8x128xf32>
    %377 = arith.mulf %365, %376 : vector<8x128xf32>
    %378 = arith.addf %374, %377 : vector<8x128xf32>
    %379 = math.tanh %378 : vector<8x128xf32>
    %cst_67 = arith.constant 1.000000e+00 : f32
    %380 = vector.broadcast %cst_67 : f32 to vector<8x128xf32>
    %381 = arith.subf %380, %373 : vector<8x128xf32>
    %382 = arith.mulf %381, %379 : vector<8x128xf32>
    %383 = arith.mulf %373, %354 : vector<8x128xf32>
    %384 = arith.addf %382, %383 : vector<8x128xf32>
    %385 = vector.extract_strided_slice %263 {offsets = [4, 0, 0], sizes = [1, 8, 384], strides = [1, 1, 1]} : vector<8x8x384xf32> to vector<1x8x384xf32>
    %386 = vector.shape_cast %385 : vector<1x8x384xf32> to vector<8x384xf32>
    %cst_68 = arith.constant dense<0.000000e+00> : vector<8x384xf32>
    %387 = tpu.matmul %384, %255, %cst_68 {dimension_numbers = #tpu.dot_dimension_numbers<[1], [0], [0], [1], [0, 0, 1, 1], [], []>} : vector<8x128xf32>, vector<128x384xf32>, vector<8x384xf32> -> vector<8x384xf32>
    %388 = vector.extract_strided_slice %386 {offsets = [0, 0], sizes = [8, 128], strides = [1, 1]} : vector<8x384xf32> to vector<8x128xf32>
    %389 = vector.extract_strided_slice %387 {offsets = [0, 0], sizes = [8, 128], strides = [1, 1]} : vector<8x384xf32> to vector<8x128xf32>
    %390 = arith.addf %388, %389 : vector<8x128xf32>
    %391 = arith.negf %390 : vector<8x128xf32>
    %392 = math.exp %391 : vector<8x128xf32>
    %cst_69 = arith.constant 1.000000e+00 : f32
    %393 = vector.broadcast %cst_69 : f32 to vector<8x128xf32>
    %394 = arith.addf %393, %392 : vector<8x128xf32>
    %395 = arith.divf %393, %394 : vector<8x128xf32>
    %396 = vector.extract_strided_slice %386 {offsets = [0, 128], sizes = [8, 128], strides = [1, 1]} : vector<8x384xf32> to vector<8x128xf32>
    %397 = vector.extract_strided_slice %387 {offsets = [0, 128], sizes = [8, 128], strides = [1, 1]} : vector<8x384xf32> to vector<8x128xf32>
    %398 = arith.addf %396, %397 : vector<8x128xf32>
    %399 = arith.negf %398 : vector<8x128xf32>
    %400 = math.exp %399 : vector<8x128xf32>
    %cst_70 = arith.constant 1.000000e+00 : f32
    %401 = vector.broadcast %cst_70 : f32 to vector<8x128xf32>
    %402 = arith.addf %401, %400 : vector<8x128xf32>
    %403 = arith.divf %401, %402 : vector<8x128xf32>
    %404 = vector.extract_strided_slice %386 {offsets = [0, 256], sizes = [8, 128], strides = [1, 1]} : vector<8x384xf32> to vector<8x128xf32>
    %405 = vector.extract_strided_slice %387 {offsets = [0, 256], sizes = [8, 128], strides = [1, 1]} : vector<8x384xf32> to vector<8x128xf32>
    %406 = arith.addf %405, %259 : vector<8x128xf32>
    %407 = arith.mulf %395, %406 : vector<8x128xf32>
    %408 = arith.addf %404, %407 : vector<8x128xf32>
    %409 = math.tanh %408 : vector<8x128xf32>
    %cst_71 = arith.constant 1.000000e+00 : f32
    %410 = vector.broadcast %cst_71 : f32 to vector<8x128xf32>
    %411 = arith.subf %410, %403 : vector<8x128xf32>
    %412 = arith.mulf %411, %409 : vector<8x128xf32>
    %413 = arith.mulf %403, %384 : vector<8x128xf32>
    %414 = arith.addf %412, %413 : vector<8x128xf32>
    %415 = vector.extract_strided_slice %263 {offsets = [5, 0, 0], sizes = [1, 8, 384], strides = [1, 1, 1]} : vector<8x8x384xf32> to vector<1x8x384xf32>
    %416 = vector.shape_cast %415 : vector<1x8x384xf32> to vector<8x384xf32>
    %cst_72 = arith.constant dense<0.000000e+00> : vector<8x384xf32>
    %417 = tpu.matmul %414, %255, %cst_72 {dimension_numbers = #tpu.dot_dimension_numbers<[1], [0], [0], [1], [0, 0, 1, 1], [], []>} : vector<8x128xf32>, vector<128x384xf32>, vector<8x384xf32> -> vector<8x384xf32>
    %418 = vector.extract_strided_slice %416 {offsets = [0, 0], sizes = [8, 128], strides = [1, 1]} : vector<8x384xf32> to vector<8x128xf32>
    %419 = vector.extract_strided_slice %417 {offsets = [0, 0], sizes = [8, 128], strides = [1, 1]} : vector<8x384xf32> to vector<8x128xf32>
    %420 = arith.addf %418, %419 : vector<8x128xf32>
    %421 = arith.negf %420 : vector<8x128xf32>
    %422 = math.exp %421 : vector<8x128xf32>
    %cst_73 = arith.constant 1.000000e+00 : f32
    %423 = vector.broadcast %cst_73 : f32 to vector<8x128xf32>
    %424 = arith.addf %423, %422 : vector<8x128xf32>
    %425 = arith.divf %423, %424 : vector<8x128xf32>
    %426 = vector.extract_strided_slice %416 {offsets = [0, 128], sizes = [8, 128], strides = [1, 1]} : vector<8x384xf32> to vector<8x128xf32>
    %427 = vector.extract_strided_slice %417 {offsets = [0, 128], sizes = [8, 128], strides = [1, 1]} : vector<8x384xf32> to vector<8x128xf32>
    %428 = arith.addf %426, %427 : vector<8x128xf32>
    %429 = arith.negf %428 : vector<8x128xf32>
    %430 = math.exp %429 : vector<8x128xf32>
    %cst_74 = arith.constant 1.000000e+00 : f32
    %431 = vector.broadcast %cst_74 : f32 to vector<8x128xf32>
    %432 = arith.addf %431, %430 : vector<8x128xf32>
    %433 = arith.divf %431, %432 : vector<8x128xf32>
    %434 = vector.extract_strided_slice %416 {offsets = [0, 256], sizes = [8, 128], strides = [1, 1]} : vector<8x384xf32> to vector<8x128xf32>
    %435 = vector.extract_strided_slice %417 {offsets = [0, 256], sizes = [8, 128], strides = [1, 1]} : vector<8x384xf32> to vector<8x128xf32>
    %436 = arith.addf %435, %259 : vector<8x128xf32>
    %437 = arith.mulf %425, %436 : vector<8x128xf32>
    %438 = arith.addf %434, %437 : vector<8x128xf32>
    %439 = math.tanh %438 : vector<8x128xf32>
    %cst_75 = arith.constant 1.000000e+00 : f32
    %440 = vector.broadcast %cst_75 : f32 to vector<8x128xf32>
    %441 = arith.subf %440, %433 : vector<8x128xf32>
    %442 = arith.mulf %441, %439 : vector<8x128xf32>
    %443 = arith.mulf %433, %414 : vector<8x128xf32>
    %444 = arith.addf %442, %443 : vector<8x128xf32>
    %445 = vector.extract_strided_slice %263 {offsets = [6, 0, 0], sizes = [1, 8, 384], strides = [1, 1, 1]} : vector<8x8x384xf32> to vector<1x8x384xf32>
    %446 = vector.shape_cast %445 : vector<1x8x384xf32> to vector<8x384xf32>
    %cst_76 = arith.constant dense<0.000000e+00> : vector<8x384xf32>
    %447 = tpu.matmul %444, %255, %cst_76 {dimension_numbers = #tpu.dot_dimension_numbers<[1], [0], [0], [1], [0, 0, 1, 1], [], []>} : vector<8x128xf32>, vector<128x384xf32>, vector<8x384xf32> -> vector<8x384xf32>
    %448 = vector.extract_strided_slice %446 {offsets = [0, 0], sizes = [8, 128], strides = [1, 1]} : vector<8x384xf32> to vector<8x128xf32>
    %449 = vector.extract_strided_slice %447 {offsets = [0, 0], sizes = [8, 128], strides = [1, 1]} : vector<8x384xf32> to vector<8x128xf32>
    %450 = arith.addf %448, %449 : vector<8x128xf32>
    %451 = arith.negf %450 : vector<8x128xf32>
    %452 = math.exp %451 : vector<8x128xf32>
    %cst_77 = arith.constant 1.000000e+00 : f32
    %453 = vector.broadcast %cst_77 : f32 to vector<8x128xf32>
    %454 = arith.addf %453, %452 : vector<8x128xf32>
    %455 = arith.divf %453, %454 : vector<8x128xf32>
    %456 = vector.extract_strided_slice %446 {offsets = [0, 128], sizes = [8, 128], strides = [1, 1]} : vector<8x384xf32> to vector<8x128xf32>
    %457 = vector.extract_strided_slice %447 {offsets = [0, 128], sizes = [8, 128], strides = [1, 1]} : vector<8x384xf32> to vector<8x128xf32>
    %458 = arith.addf %456, %457 : vector<8x128xf32>
    %459 = arith.negf %458 : vector<8x128xf32>
    %460 = math.exp %459 : vector<8x128xf32>
    %cst_78 = arith.constant 1.000000e+00 : f32
    %461 = vector.broadcast %cst_78 : f32 to vector<8x128xf32>
    %462 = arith.addf %461, %460 : vector<8x128xf32>
    %463 = arith.divf %461, %462 : vector<8x128xf32>
    %464 = vector.extract_strided_slice %446 {offsets = [0, 256], sizes = [8, 128], strides = [1, 1]} : vector<8x384xf32> to vector<8x128xf32>
    %465 = vector.extract_strided_slice %447 {offsets = [0, 256], sizes = [8, 128], strides = [1, 1]} : vector<8x384xf32> to vector<8x128xf32>
    %466 = arith.addf %465, %259 : vector<8x128xf32>
    %467 = arith.mulf %455, %466 : vector<8x128xf32>
    %468 = arith.addf %464, %467 : vector<8x128xf32>
    %469 = math.tanh %468 : vector<8x128xf32>
    %cst_79 = arith.constant 1.000000e+00 : f32
    %470 = vector.broadcast %cst_79 : f32 to vector<8x128xf32>
    %471 = arith.subf %470, %463 : vector<8x128xf32>
    %472 = arith.mulf %471, %469 : vector<8x128xf32>
    %473 = arith.mulf %463, %444 : vector<8x128xf32>
    %474 = arith.addf %472, %473 : vector<8x128xf32>
    %475 = vector.extract_strided_slice %263 {offsets = [7, 0, 0], sizes = [1, 8, 384], strides = [1, 1, 1]} : vector<8x8x384xf32> to vector<1x8x384xf32>
    %476 = vector.shape_cast %475 : vector<1x8x384xf32> to vector<8x384xf32>
    %cst_80 = arith.constant dense<0.000000e+00> : vector<8x384xf32>
    %477 = tpu.matmul %474, %255, %cst_80 {dimension_numbers = #tpu.dot_dimension_numbers<[1], [0], [0], [1], [0, 0, 1, 1], [], []>} : vector<8x128xf32>, vector<128x384xf32>, vector<8x384xf32> -> vector<8x384xf32>
    %478 = vector.extract_strided_slice %476 {offsets = [0, 0], sizes = [8, 128], strides = [1, 1]} : vector<8x384xf32> to vector<8x128xf32>
    %479 = vector.extract_strided_slice %477 {offsets = [0, 0], sizes = [8, 128], strides = [1, 1]} : vector<8x384xf32> to vector<8x128xf32>
    %480 = arith.addf %478, %479 : vector<8x128xf32>
    %481 = arith.negf %480 : vector<8x128xf32>
    %482 = math.exp %481 : vector<8x128xf32>
    %cst_81 = arith.constant 1.000000e+00 : f32
    %483 = vector.broadcast %cst_81 : f32 to vector<8x128xf32>
    %484 = arith.addf %483, %482 : vector<8x128xf32>
    %485 = arith.divf %483, %484 : vector<8x128xf32>
    %486 = vector.extract_strided_slice %476 {offsets = [0, 128], sizes = [8, 128], strides = [1, 1]} : vector<8x384xf32> to vector<8x128xf32>
    %487 = vector.extract_strided_slice %477 {offsets = [0, 128], sizes = [8, 128], strides = [1, 1]} : vector<8x384xf32> to vector<8x128xf32>
    %488 = arith.addf %486, %487 : vector<8x128xf32>
    %489 = arith.negf %488 : vector<8x128xf32>
    %490 = math.exp %489 : vector<8x128xf32>
    %cst_82 = arith.constant 1.000000e+00 : f32
    %491 = vector.broadcast %cst_82 : f32 to vector<8x128xf32>
    %492 = arith.addf %491, %490 : vector<8x128xf32>
    %493 = arith.divf %491, %492 : vector<8x128xf32>
    %494 = vector.extract_strided_slice %476 {offsets = [0, 256], sizes = [8, 128], strides = [1, 1]} : vector<8x384xf32> to vector<8x128xf32>
    %495 = vector.extract_strided_slice %477 {offsets = [0, 256], sizes = [8, 128], strides = [1, 1]} : vector<8x384xf32> to vector<8x128xf32>
    %496 = arith.addf %495, %259 : vector<8x128xf32>
    %497 = arith.mulf %485, %496 : vector<8x128xf32>
    %498 = arith.addf %494, %497 : vector<8x128xf32>
    %499 = math.tanh %498 : vector<8x128xf32>
    %cst_83 = arith.constant 1.000000e+00 : f32
    %500 = vector.broadcast %cst_83 : f32 to vector<8x128xf32>
    %501 = arith.subf %500, %493 : vector<8x128xf32>
    %502 = arith.mulf %501, %499 : vector<8x128xf32>
    %503 = arith.mulf %493, %474 : vector<8x128xf32>
    %504 = arith.addf %502, %503 : vector<8x128xf32>
    %c0_84 = arith.constant 0 : index
    %c0_85 = arith.constant 0 : index
    %505 = vector.load %arg8[%c0_84, %c0_85] : memref<8x128xf32, #tpu.memory_space<vmem>>, vector<8x128xf32>
    tpu.vector_store %arg8[%c0_84, %c0_85], %504 {strides = array<i32>} : memref<8x128xf32, #tpu.memory_space<vmem>>, vector<8x128xf32>,
    return
  }
  func.func @transform_0(%arg0: i32) -> (i32, i32, i32) {
    %c0_i32 = arith.constant 0 : i32
    %c0_i32_0 = arith.constant 0 : i32
    %c0_i32_1 = arith.constant 0 : i32
    return %c0_i32, %arg0, %c0_i32_0 : i32, i32, i32
  }
  func.func @transform_1(%arg0: i32) -> (i32, i32) {
    %c0_i32 = arith.constant 0 : i32
    %c0_i32_0 = arith.constant 0 : i32
    %c0_i32_1 = arith.constant 0 : i32
    return %c0_i32, %c0_i32_0 : i32, i32
  }
  func.func @transform_2(%arg0: i32) -> (i32, i32) {
    %c0_i32 = arith.constant 0 : i32
    %c0_i32_0 = arith.constant 0 : i32
    %c0_i32_1 = arith.constant 0 : i32
    return %c0_i32, %c0_i32_0 : i32, i32
  }
  func.func @transform_3(%arg0: i32) -> (i32, i32) {
    %c0_i32 = arith.constant 0 : i32
    %c0_i32_0 = arith.constant 0 : i32
    %c0_i32_1 = arith.constant 0 : i32
    return %c0_i32, %c0_i32_0 : i32, i32
  }
  func.func @transform_4(%arg0: i32) -> (i32, i32) {
    %c0_i32 = arith.constant 0 : i32
    %c0_i32_0 = arith.constant 0 : i32
    %c0_i32_1 = arith.constant 0 : i32
    return %c0_i32, %c0_i32_0 : i32, i32
  }
  func.func @transform_5(%arg0: i32) -> (i32, i32) {
    %c0_i32 = arith.constant 0 : i32
    %c0_i32_0 = arith.constant 0 : i32
    %c0_i32_1 = arith.constant 0 : i32
    return %c0_i32, %c0_i32_0 : i32, i32
  }
  func.func @transform_6(%arg0: i32) -> (i32, i32) {
    %c0_i32 = arith.constant 0 : i32
    %c0_i32_0 = arith.constant 0 : i32
    %c0_i32_1 = arith.constant 0 : i32
    return %c0_i32, %c0_i32_0 : i32, i32
  }
  func.func @transform_7(%arg0: i32) -> (i32, i32) {
    %c0_i32 = arith.constant 0 : i32
    %c0_i32_0 = arith.constant 0 : i32
    return %arg0, %c0_i32 : i32, i32
  }
}

</mosaic_0001>

<llo_original>
// kernel: tpu_custom_call.1
$region0: #{tpu_custom_call.1}
  #allocation0 [shape = 'u32[]', space=smem, size = 0x4, offset = 0x4, fixed_abs, tag = 'smem constant byte address 0x4 - core index']
  #allocation1 [shape = 'u32[144,128]{1,0:T(1,128)}', space=vmem, size = 0x12000, scoped, tag = 'internal scratch']
  %s0 = inlined_call_operand.hbm [shape: f32[8,8,16], index: 0, kind: input, shape index: {}]
  %s1 = inlined_call_operand.hbm [shape: f32[16,384], index: 1, kind: input, shape index: {}]
  %s2 = inlined_call_operand.hbm [shape: f32[128,384], index: 2, kind: input, shape index: {}]
  %s3 = inlined_call_operand.vmem [shape: f32[2,384], index: 3, kind: input, shape index: {}]
  %s4 = inlined_call_operand.hbm [shape: f32[128,384], index: 4, kind: input, shape index: {}]
  %s5 = inlined_call_operand.hbm [shape: f32[128,384], index: 5, kind: input, shape index: {}]
  %s6 = inlined_call_operand.vmem [shape: f32[2,384], index: 6, kind: input, shape index: {}]
  %s7 = inlined_call_operand.hbm [shape: f32[8,128], index: 7, kind: output, shape index: {}]
  %s8 = sld [smem:[#allocation0]]
  $region58: #{tpu_custom_call.1} parent=0
    _
  %s10 = ssub.s32 1, %s8
  %s11 = scalar_select 0, %s10, %s8
  $region1: #{tpu_custom_call.1} parent=0
    #allocation2 [shape = 'u8[32768]{0}', space=vmem, size = 0x8000, scoped, tag = 'input window, operand 0, single buffered']
    #allocation3 [shape = 's32[1]{0}', space=sflag, size = 0x4, scoped, tag = 'scoped memory for tpu_custom_call.1']
    #allocation4 [shape = 's32[1]{0}', space=sflag, size = 0x4, scoped, tag = 'scoped memory for tpu_custom_call.1']
    #allocation5 [shape = 'u8[24576]{0}', space=vmem, size = 0x6000, scoped, tag = 'input window, operand 1, single buffered']
    #allocation6 [shape = 's32[1]{0}', space=sflag, size = 0x4, scoped, tag = 'scoped memory for tpu_custom_call.1']
    #allocation7 [shape = 'u8[196608]{0}', space=vmem, size = 0x30000, scoped, tag = 'input window, operand 2, single buffered']
    #allocation8 [shape = 'u8[196608]{0}', space=vmem, size = 0x30000, scoped, tag = 'input window, operand 4, single buffered']
    #allocation9 [shape = 's32[1]{0}', space=sflag, size = 0x4, scoped, tag = 'scoped memory for tpu_custom_call.1']
    #allocation10 [shape = 'u8[196608]{0}', space=vmem, size = 0x30000, scoped, tag = 'input window, operand 5, single buffered']
    #allocation11 [shape = 'u8[4096]{0}', space=vmem, size = 0x1000, scoped, tag = 'output window, operand 0, single buffered']
    %12 = vsyncpa [#allocation3], 0
    %13 = vsyncpa [#allocation6], 0
    %14 = vsyncpa [#allocation9], 0
    %15 = vsyncpa [#allocation4], 0
    // Predicated region
    $region2: #{tpu_custom_call.1} parent=1 // pred_check
      _
    $region3: #{tpu_custom_call.1} parent=1 // pred_check_branch
      %17 = sbr.rel (0) target = $region5
    $region4: #{tpu_custom_call.1} parent=1 // pred_region
      %s19 = ssub.s32 1024, 1024
      %20 = vsyncadd [#allocation3], %s19
      %s21 = sshll.u32 [#allocation2], 4
      %s22 = int_to_ptr.vmem [resolvable:$true] %s21
      %27 = dma.hbm_to_vmem [thread:$0]  %s0, 1024, %s22, [#allocation3], 128, 128, 8
    $region5: #{tpu_custom_call.1} parent=1 // pred_fallthru
      _
    // Predicated region
    $region6: #{tpu_custom_call.1} parent=1 // pred_check
      _
    $region7: #{tpu_custom_call.1} parent=1 // pred_check_branch
      %29 = sbr.rel (0) target = $region9
    $region8: #{tpu_custom_call.1} parent=1 // pred_region
      %s31 = ssub.s32 768, 768
      %32 = vsyncadd [#allocation6], %s31
      %s33 = sshll.u32 [#allocation5], 4
      %s34 = int_to_ptr.vmem [resolvable:$true] %s33
      %39 = dma.hbm_to_vmem [thread:$0]  %s1, 768, %s34, [#allocation6], 384, 384, 24
    $region9: #{tpu_custom_call.1} parent=1 // pred_fallthru
      _
    // Predicated region
    $region10: #{tpu_custom_call.1} parent=1 // pred_check
      _
    $region11: #{tpu_custom_call.1} parent=1 // pred_check_branch
      %41 = sbr.rel (0) target = $region13
    $region12: #{tpu_custom_call.1} parent=1 // pred_region
      %s43 = ssub.s32 6144, 6144
      %44 = vsyncadd [#allocation6], %s43
      %s45 = sshll.u32 [#allocation7], 4
      %s46 = int_to_ptr.vmem [resolvable:$true] %s45
      %51 = dma.hbm_to_vmem [thread:$0]  %s2, 6144, %s46, [#allocation6], 384, 384, 24
    $region13: #{tpu_custom_call.1} parent=1 // pred_fallthru
      _
    // Predicated region
    $region14: #{tpu_custom_call.1} parent=1 // pred_check
      _
    $region15: #{tpu_custom_call.1} parent=1 // pred_check_branch
      %53 = sbr.rel (0) target = $region17
    $region16: #{tpu_custom_call.1} parent=1 // pred_region
      _
    $region17: #{tpu_custom_call.1} parent=1 // pred_fallthru
      _
    // Predicated region
    $region18: #{tpu_custom_call.1} parent=1 // pred_check
      _
    $region19: #{tpu_custom_call.1} parent=1 // pred_check_branch
      %55 = sbr.rel (0) target = $region21
    $region20: #{tpu_custom_call.1} parent=1 // pred_region
      %s57 = ssub.s32 6144, 6144
      %58 = vsyncadd [#allocation9], %s57
      %s59 = sshll.u32 [#allocation8], 4
      %s60 = int_to_ptr.vmem [resolvable:$true] %s59
      %65 = dma.hbm_to_vmem [thread:$0]  %s4, 6144, %s60, [#allocation9], 384, 384, 24
    $region21: #{tpu_custom_call.1} parent=1 // pred_fallthru
      _
    // Predicated region
    $region22: #{tpu_custom_call.1} parent=1 // pred_check
      _
    $region23: #{tpu_custom_call.1} parent=1 // pred_check_branch
      %67 = sbr.rel (0) target = $region25
    $region24: #{tpu_custom_call.1} parent=1 // pred_region
      %s69 = ssub.s32 6144, 6144
      %70 = vsyncadd [#allocation9], %s69
      %s71 = sshll.u32 [#allocation10], 4
      %s72 = int_to_ptr.vmem [resolvable:$true] %s71
      %77 = dma.hbm_to_vmem [thread:$0]  %s5, 6144, %s72, [#allocation9], 384, 384, 24
    $region25: #{tpu_custom_call.1} parent=1 // pred_fallthru
      _
    // Predicated region
    $region26: #{tpu_custom_call.1} parent=1 // pred_check
      _
    $region27: #{tpu_custom_call.1} parent=1 // pred_check_branch
      %79 = sbr.rel (0) target = $region29
    $region28: #{tpu_custom_call.1} parent=1 // pred_region
      _
    $region29: #{tpu_custom_call.1} parent=1 // pred_fallthru
      _
    // Predicated region
    $region30: #{tpu_custom_call.1} parent=1 // pred_check
      _
    $region31: #{tpu_custom_call.1} parent=1 // pred_check_branch
      %81 = sbr.rel (0) target = $region33
    $region32: #{tpu_custom_call.1} parent=1 // pred_region
      %82 = dma.done [#allocation3], 1024
    $region33: #{tpu_custom_call.1} parent=1 // pred_fallthru
      _
    // Predicated region
    $region34: #{tpu_custom_call.1} parent=1 // pred_check
      _
    $region35: #{tpu_custom_call.1} parent=1 // pred_check_branch
      %84 = sbr.rel (0) target = $region37
    $region36: #{tpu_custom_call.1} parent=1 // pred_region
      %85 = dma.done [#allocation6], 768
    $region37: #{tpu_custom_call.1} parent=1 // pred_fallthru
      _
    // Predicated region
    $region38: #{tpu_custom_call.1} parent=1 // pred_check
      _
    $region39: #{tpu_custom_call.1} parent=1 // pred_check_branch
      %87 = sbr.rel (0) target = $region41
    $region40: #{tpu_custom_call.1} parent=1 // pred_region
      %88 = dma.done [#allocation6], 6144
    $region41: #{tpu_custom_call.1} parent=1 // pred_fallthru
      _
    // Predicated region
    $region42: #{tpu_custom_call.1} parent=1 // pred_check
      _
    $region43: #{tpu_custom_call.1} parent=1 // pred_check_branch
      %90 = sbr.rel (0) target = $region45
    $region44: #{tpu_custom_call.1} parent=1 // pred_region
      %91 = dma.done [#allocation9], 6144
    $region45: #{tpu_custom_call.1} parent=1 // pred_fallthru
      _
    // Predicated region
    $region46: #{tpu_custom_call.1} parent=1 // pred_check
      _
    $region47: #{tpu_custom_call.1} parent=1 // pred_check_branch
      %93 = sbr.rel (0) target = $region49
    $region48: #{tpu_custom_call.1} parent=1 // pred_region
      %94 = dma.done [#allocation9], 6144
    $region49: #{tpu_custom_call.1} parent=1 // pred_fallthru
      _
    %v95 = vld [vmem:[#allocation2] sm:$0xff]
    %v96 = vld [vmem:[#allocation2 + $0x8] sm:$0xff]
    %v97 = vld [vmem:[#allocation2 + $0x10] sm:$0xff]
    %v98 = vld [vmem:[#allocation2 + $0x18] sm:$0xff]
    %v99 = vld [vmem:[#allocation2 + $0x20] sm:$0xff]
    %v100 = vld [vmem:[#allocation2 + $0x28] sm:$0xff]
    %v101 = vld [vmem:[#allocation2 + $0x30] sm:$0xff]
    %v102 = vld [vmem:[#allocation2 + $0x38] sm:$0xff]
    %v103 = vld [vmem:[#allocation5] sm:$0xff]
    %v104 = vld [vmem:[#allocation5 + $0x8] sm:$0xff]
    %v105 = vld [vmem:[#allocation5 + $0x10] sm:$0xff]
    %v106 = vld [vmem:[#allocation5 + $0x18] sm:$0xff]
    %v107 = vld [vmem:[#allocation5 + $0x20] sm:$0xff]
    %v108 = vld [vmem:[#allocation5 + $0x28] sm:$0xff]
    %v109 = vld [vmem:[#allocation7] sm:$0xff]
    %v110 = vld [vmem:[#allocation7 + $0x8] sm:$0xff]
    %v111 = vld [vmem:[#allocation7 + $0x10] sm:$0xff]
    %v112 = vld [vmem:[#allocation7 + $0x18] sm:$0xff]
    %v113 = vld [vmem:[#allocation7 + $0x20] sm:$0xff]
    %v114 = vld [vmem:[#allocation7 + $0x28] sm:$0xff]
    %v115 = vld [vmem:[#allocation7 + $0x30] sm:$0xff]
    %v116 = vld [vmem:[#allocation7 + $0x38] sm:$0xff]
    %v117 = vld [vmem:[#allocation7 + $0x40] sm:$0xff]
    %v118 = vld [vmem:[#allocation7 + $0x48] sm:$0xff]
    %v119 = vld [vmem:[#allocation7 + $0x50] sm:$0xff]
    %v120 = vld [vmem:[#allocation7 + $0x58] sm:$0xff]
    %v121 = vld [vmem:[#allocation7 + $0x60] sm:$0xff]
    %v122 = vld [vmem:[#allocation7 + $0x68] sm:$0xff]
    %v123 = vld [vmem:[#allocation7 + $0x70] sm:$0xff]
    %v124 = vld [vmem:[#allocation7 + $0x78] sm:$0xff]
    %v125 = vld [vmem:[#allocation7 + $0x80] sm:$0xff]
    %v126 = vld [vmem:[#allocation7 + $0x88] sm:$0xff]
    %v127 = vld [vmem:[#allocation7 + $0x90] sm:$0xff]
    %v128 = vld [vmem:[#allocation7 + $0x98] sm:$0xff]
    %v129 = vld [vmem:[#allocation7 + $0xa0] sm:$0xff]
    %v130 = vld [vmem:[#allocation7 + $0xa8] sm:$0xff]
    %v131 = vld [vmem:[#allocation7 + $0xb0] sm:$0xff]
    %v132 = vld [vmem:[#allocation7 + $0xb8] sm:$0xff]
    %v133 = vld [vmem:[#allocation7 + $0xc0] sm:$0xff]
    %v134 = vld [vmem:[#allocation7 + $0xc8] sm:$0xff]
    %v135 = vld [vmem:[#allocation7 + $0xd0] sm:$0xff]
    %v136 = vld [vmem:[#allocation7 + $0xd8] sm:$0xff]
    %v137 = vld [vmem:[#allocation7 + $0xe0] sm:$0xff]
    %v138 = vld [vmem:[#allocation7 + $0xe8] sm:$0xff]
    %v139 = vld [vmem:[#allocation7 + $0xf0] sm:$0xff]
    %v140 = vld [vmem:[#allocation7 + $0xf8] sm:$0xff]
    %v141 = vld [vmem:[#allocation7 + $0x100] sm:$0xff]
    %v142 = vld [vmem:[#allocation7 + $0x108] sm:$0xff]
    %v143 = vld [vmem:[#allocation7 + $0x110] sm:$0xff]
    %v144 = vld [vmem:[#allocation7 + $0x118] sm:$0xff]
    %v145 = vld [vmem:[#allocation7 + $0x120] sm:$0xff]
    %v146 = vld [vmem:[#allocation7 + $0x128] sm:$0xff]
    %v147 = vld [vmem:[#allocation7 + $0x130] sm:$0xff]
    %v148 = vld [vmem:[#allocation7 + $0x138] sm:$0xff]
    %v149 = vld [vmem:[#allocation7 + $0x140] sm:$0xff]
    %v150 = vld [vmem:[#allocation7 + $0x148] sm:$0xff]
    %v151 = vld [vmem:[#allocation7 + $0x150] sm:$0xff]
    %v152 = vld [vmem:[#allocation7 + $0x158] sm:$0xff]
    %v153 = vld [vmem:[#allocation7 + $0x160] sm:$0xff]
    %v154 = vld [vmem:[#allocation7 + $0x168] sm:$0xff]
    %v155 = vld [vmem:[#allocation7 + $0x170] sm:$0xff]
    %v156 = vld [vmem:[#allocation7 + $0x178] sm:$0xff]
    %v157 = vld [vmem:[%s3] ss:$2 sm:$0x7]
    %v158 = vld [vmem:[%s3 + $0x1] sm:$0x1]
    %v159 = vlaneseq
    %v160 = vshrl.u32 %v159, 7
    %v161 = vsub.s32 0, %v160
    %v162 = vrot.slane %v158, %v161
    %v164 = vlaneseq
    %v165 = vshrl.u32 %v164, 7
    %v166 = vsub.s32 0, %v165
    %v167 = vrot.slane %v157, %v166
    %v168 = vlaneseq
    %v169 = vshrl.u32 %v168, 7
    %v170 = vsub.s32 1, %v169
    %v171 = vrot.slane %v157, %v170
    %v172 = vlaneseq
    %v173 = vshrl.u32 %v172, 7
    %v174 = vsub.s32 2, %v173
    %v175 = vrot.slane %v157, %v174
    %vm179 = vcmask 130048
    %v181 = vsel %vm179, %v95, 0
    %v184 = vsel %vm179, %v96, 0
    %v187 = vsel %vm179, %v97, 0
    %v190 = vsel %vm179, %v98, 0
    %v193 = vsel %vm179, %v99, 0
    %v196 = vsel %vm179, %v100, 0
    %v199 = vsel %vm179, %v101, 0
    %v202 = vsel %vm179, %v102, 0
    %204 = vmatprep.subr.mxu0 %v104
    %205 = vmatpush1.msra.mxu0 %v103
    %206 = vmatprep.subr.mxu0 %v107
    %207 = vmatpush1.msra.mxu0 %v106
    %208 = vmatprep.subr.mxu0 0.0
    %209 = vmatpush1.msra.mxu0 0.0
    %210 = vmatprep.subr.mxu0 0.0
    %211 = vmatpush1.msra.mxu0 0.0
    %212 = vmatprep.subr.mxu0 0.0
    %213 = vmatpush1.msra.mxu0 0.0
    %214 = vmatprep.subr.mxu0 0.0
    %215 = vmatpush1.msra.mxu0 0.0
    %216 = vmatprep.subr.mxu0 0.0
    %217 = vmatpush1.msra.mxu0 0.0
    %218 = vmatprep.subr.mxu0 0.0
    %219 = vmatpush1.msra.mxu0 0.0
    %220 = vmatprep.subr.mxu0 0.0
    %221 = vmatpush1.msra.mxu0 0.0
    %222 = vmatprep.subr.mxu0 0.0
    %223 = vmatpush1.msra.mxu0 0.0
    %224 = vmatprep.subr.mxu0 0.0
    %225 = vmatpush1.msra.mxu0 0.0
    %226 = vmatprep.subr.mxu0 0.0
    %227 = vmatpush1.msra.mxu0 0.0
    %228 = vmatprep.subr.mxu0 0.0
    %229 = vmatpush1.msra.mxu0 0.0
    %230 = vmatprep.subr.mxu0 0.0
    %231 = vmatpush1.msra.mxu0 0.0
    %232 = vmatprep.subr.mxu0 0.0
    %233 = vmatpush1.msra.mxu0 0.0
    %234 = vmatprep.subr.mxu0 0.0
    %235 = vmatpush1.msra.mxu0 0.0
    %236 = vmatprep.subr.mxu0 0.0
    %237 = vmatpush1.msra.mxu0 0.0
    %238 = vmatprep.subr.mxu0 0.0
    %239 = vmatpush1.msra.mxu0 0.0
    %240 = vmatprep.subr.mxu0 0.0
    %241 = vmatpush1.msra.mxu0 0.0
    %242 = vmatprep.subr.mxu0 0.0
    %243 = vmatpush1.msra.mxu0 0.0
    %244 = vmatprep.subr.mxu0 0.0
    %245 = vmatpush1.msra.mxu0 0.0
    %246 = vmatprep.subr.mxu0 0.0
    %247 = vmatpush1.msra.mxu0 0.0
    %248 = vmatprep.subr.mxu0 0.0
    %249 = vmatpush1.msra.mxu0 0.0
    %250 = vmatprep.subr.mxu0 0.0
    %251 = vmatpush1.msra.mxu0 0.0
    %252 = vmatprep.subr.mxu0 0.0
    %253 = vmatpush1.msra.mxu0 0.0
    %254 = vmatprep.subr.mxu0 0.0
    %255 = vmatpush1.msra.mxu0 0.0
    %256 = vmatprep.subr.mxu0 0.0
    %257 = vmatpush1.msra.mxu0 0.0
    %258 = vmatprep.subr.mxu0 0.0
    %259 = vmatpush1.msra.mxu0 0.0
    %260 = vmatprep.subr.mxu0 0.0
    %261 = vmatpush1.msra.mxu0 0.0
    %262 = vmatprep.subr.mxu0 0.0
    %263 = vmatpush1.msra.mxu0 0.0
    %264 = vmatprep.subr.mxu0 0.0
    %265 = vmatpush1.msra.mxu0 0.0
    %266 = vmatprep.subr.mxu0 0.0
    %267 = vmatpush1.msra.mxu0 0.0
    %268 = vmatprep.mubr.f32.mxu0 0.0
    %269 = vmatmul.mubr.f32.gmra.mrb[0].mxu0 %v181
    %v270 = vpop.f32.mrb[0].mxu0
    %v271 = vadd.f32 %v167, %v270
    %v272 = vpop.f32.mrb[0].mxu0
    %v273 = vadd.f32 %v171, %v272
    %274 = vmatprep.mubr.f32.mxu0 0.0
    %275 = vmatmul.mubr.f32.gmra.mrb[0].mxu0 %v184
    %v276 = vpop.f32.mrb[0].mxu0
    %v277 = vadd.f32 %v167, %v276
    %v278 = vpop.f32.mrb[0].mxu0
    %v279 = vadd.f32 %v171, %v278
    %280 = vmatprep.mubr.f32.mxu0 0.0
    %281 = vmatmul.mubr.f32.gmra.mrb[0].mxu0 %v187
    %v282 = vpop.f32.mrb[0].mxu0
    %v283 = vadd.f32 %v167, %v282
    %v284 = vpop.f32.mrb[0].mxu0
    %v285 = vadd.f32 %v171, %v284
    %286 = vmatprep.mubr.f32.mxu0 0.0
    %287 = vmatmul.mubr.f32.gmra.mrb[0].mxu0 %v190
    %v288 = vpop.f32.mrb[0].mxu0
    %v289 = vadd.f32 %v167, %v288
    %v290 = vpop.f32.mrb[0].mxu0
    %v291 = vadd.f32 %v171, %v290
    %292 = vmatprep.mubr.f32.mxu0 0.0
    %293 = vmatmul.mubr.f32.gmra.mrb[0].mxu0 %v193
    %v294 = vpop.f32.mrb[0].mxu0
    %v295 = vadd.f32 %v167, %v294
    %v296 = vpop.f32.mrb[0].mxu0
    %v297 = vadd.f32 %v171, %v296
    %298 = vmatprep.mubr.f32.mxu0 0.0
    %299 = vmatmul.mubr.f32.gmra.mrb[0].mxu0 %v196
    %v300 = vpop.f32.mrb[0].mxu0
    %v301 = vadd.f32 %v167, %v300
    %v302 = vpop.f32.mrb[0].mxu0
    %v303 = vadd.f32 %v171, %v302
    %304 = vmatprep.mubr.f32.mxu0 0.0
    %305 = vmatmul.mubr.f32.gmra.mrb[0].mxu0 %v199
    %v306 = vpop.f32.mrb[0].mxu0
    %v307 = vadd.f32 %v167, %v306
    %v308 = vpop.f32.mrb[0].mxu0
    %v309 = vadd.f32 %v171, %v308
    %310 = vmatprep.mubr.f32.mxu0 0.0
    %311 = vmatmul.mubr.f32.gmra.mrb[0].mxu0 %v202
    %v312 = vpop.f32.mrb[0].mxu0
    %v313 = vadd.f32 %v167, %v312
    %v314 = vpop.f32.mrb[0].mxu0
    %v315 = vadd.f32 %v171, %v314
    %316 = vdwg.mxu0
    %317 = vmatprep.subr.mxu0 0.0
    %318 = vmatpush1.msra.mxu0 %v105
    %319 = vmatprep.subr.mxu0 0.0
    %320 = vmatpush1.msra.mxu0 %v108
    %321 = vmatprep.subr.mxu0 0.0
    %322 = vmatpush1.msra.mxu0 0.0
    %323 = vmatprep.subr.mxu0 0.0
    %324 = vmatpush1.msra.mxu0 0.0
    %325 = vmatprep.subr.mxu0 0.0
    %326 = vmatpush1.msra.mxu0 0.0
    %327 = vmatprep.subr.mxu0 0.0
    %328 = vmatpush1.msra.mxu0 0.0
    %329 = vmatprep.subr.mxu0 0.0
    %330 = vmatpush1.msra.mxu0 0.0
    %331 = vmatprep.subr.mxu0 0.0
    %332 = vmatpush1.msra.mxu0 0.0
    %333 = vmatprep.subr.mxu0 0.0
    %334 = vmatpush1.msra.mxu0 0.0
    %335 = vmatprep.subr.mxu0 0.0
    %336 = vmatpush1.msra.mxu0 0.0
    %337 = vmatprep.subr.mxu0 0.0
    %338 = vmatpush1.msra.mxu0 0.0
    %339 = vmatprep.subr.mxu0 0.0
    %340 = vmatpush1.msra.mxu0 0.0
    %341 = vmatprep.subr.mxu0 0.0
    %342 = vmatpush1.msra.mxu0 0.0
    %343 = vmatprep.subr.mxu0 0.0
    %344 = vmatpush1.msra.mxu0 0.0
    %345 = vmatprep.subr.mxu0 0.0
    %346 = vmatpush1.msra.mxu0 0.0
    %347 = vmatprep.subr.mxu0 0.0
    %348 = vmatpush1.msra.mxu0 0.0
    %349 = vmatprep.subr.mxu0 0.0
    %350 = vmatpush1.msra.mxu0 0.0
    %351 = vmatprep.subr.mxu0 0.0
    %352 = vmatpush1.msra.mxu0 0.0
    %353 = vmatprep.subr.mxu0 0.0
    %354 = vmatpush1.msra.mxu0 0.0
    %355 = vmatprep.subr.mxu0 0.0
    %356 = vmatpush1.msra.mxu0 0.0
    %357 = vmatprep.subr.mxu0 0.0
    %358 = vmatpush1.msra.mxu0 0.0
    %359 = vmatprep.subr.mxu0 0.0
    %360 = vmatpush1.msra.mxu0 0.0
    %361 = vmatprep.subr.mxu0 0.0
    %362 = vmatpush1.msra.mxu0 0.0
    %363 = vmatprep.subr.mxu0 0.0
    %364 = vmatpush1.msra.mxu0 0.0
    %365 = vmatprep.subr.mxu0 0.0
    %366 = vmatpush1.msra.mxu0 0.0
    %367 = vmatprep.subr.mxu0 0.0
    %368 = vmatpush1.msra.mxu0 0.0
    %369 = vmatprep.subr.mxu0 0.0
    %370 = vmatpush1.msra.mxu0 0.0
    %371 = vmatprep.subr.mxu0 0.0
    %372 = vmatpush1.msra.mxu0 0.0
    %373 = vmatprep.subr.mxu0 0.0
    %374 = vmatpush1.msra.mxu0 0.0
    %375 = vmatprep.subr.mxu0 0.0
    %376 = vmatpush1.msra.mxu0 0.0
    %377 = vmatprep.subr.mxu0 0.0
    %378 = vmatpush1.msra.mxu0 0.0
    %379 = vmatprep.subr.mxu0 0.0
    %380 = vmatpush1.msra.mxu0 0.0
    %381 = vmatprep.mubr.f32.mxu0 0.0
    %382 = vmatmul.mubr.f32.gmra.mrb[0].mxu0 %v181
    %v383 = vpop.f32.mrb[0].mxu0
    %v384 = vadd.f32 %v175, %v383
    %v385 = vpop.f32.mrb[0].mxu0
    %386 = vmatprep.mubr.f32.mxu0 0.0
    %387 = vmatmul.mubr.f32.gmra.mrb[0].mxu0 %v184
    %v388 = vpop.f32.mrb[0].mxu0
    %v389 = vadd.f32 %v175, %v388
    %v390 = vpop.f32.mrb[0].mxu0
    %391 = vmatprep.mubr.f32.mxu0 0.0
    %392 = vmatmul.mubr.f32.gmra.mrb[0].mxu0 %v187
    %v393 = vpop.f32.mrb[0].mxu0
    %v394 = vadd.f32 %v175, %v393
    %v395 = vpop.f32.mrb[0].mxu0
    %396 = vmatprep.mubr.f32.mxu0 0.0
    %397 = vmatmul.mubr.f32.gmra.mrb[0].mxu0 %v190
    %v398 = vpop.f32.mrb[0].mxu0
    %v399 = vadd.f32 %v175, %v398
    %v400 = vpop.f32.mrb[0].mxu0
    %401 = vmatprep.mubr.f32.mxu0 0.0
    %402 = vmatmul.mubr.f32.gmra.mrb[0].mxu0 %v193
    %v403 = vpop.f32.mrb[0].mxu0
    %v404 = vadd.f32 %v175, %v403
    %v405 = vpop.f32.mrb[0].mxu0
    %406 = vmatprep.mubr.f32.mxu0 0.0
    %407 = vmatmul.mubr.f32.gmra.mrb[0].mxu0 %v196
    %v408 = vpop.f32.mrb[0].mxu0
    %v409 = vadd.f32 %v175, %v408
    %v410 = vpop.f32.mrb[0].mxu0
    %411 = vmatprep.mubr.f32.mxu0 0.0
    %412 = vmatmul.mubr.f32.gmra.mrb[0].mxu0 %v199
    %v413 = vpop.f32.mrb[0].mxu0
    %v414 = vadd.f32 %v175, %v413
    %v415 = vpop.f32.mrb[0].mxu0
    %416 = vmatprep.mubr.f32.mxu0 0.0
    %417 = vmatmul.mubr.f32.gmra.mrb[0].mxu0 %v202
    %v418 = vpop.f32.mrb[0].mxu0
    %v419 = vadd.f32 %v175, %v418
    %v420 = vpop.f32.mrb[0].mxu0
    %421 = vdwg.mxu0
    %422 = vmatprep.subr.mxu0 %v110
    %423 = vmatpush1.msra.mxu0 %v109
    %424 = vmatprep.subr.mxu0 %v113
    %425 = vmatpush1.msra.mxu0 %v112
    %426 = vmatprep.subr.mxu0 %v116
    %427 = vmatpush1.msra.mxu0 %v115
    %428 = vmatprep.subr.mxu0 %v119
    %429 = vmatpush1.msra.mxu0 %v118
    %430 = vmatprep.subr.mxu0 %v122
    %431 = vmatpush1.msra.mxu0 %v121
    %432 = vmatprep.subr.mxu0 %v125
    %433 = vmatpush1.msra.mxu0 %v124
    %434 = vmatprep.subr.mxu0 %v128
    %435 = vmatpush1.msra.mxu0 %v127
    %436 = vmatprep.subr.mxu0 %v131
    %437 = vmatpush1.msra.mxu0 %v130
    %438 = vmatprep.subr.mxu0 %v134
    %439 = vmatpush1.msra.mxu0 %v133
    %440 = vmatprep.subr.mxu0 %v137
    %441 = vmatpush1.msra.mxu0 %v136
    %442 = vmatprep.subr.mxu0 %v140
    %443 = vmatpush1.msra.mxu0 %v139
    %444 = vmatprep.subr.mxu0 %v143
    %445 = vmatpush1.msra.mxu0 %v142
    %446 = vmatprep.subr.mxu0 %v146
    %447 = vmatpush1.msra.mxu0 %v145
    %448 = vmatprep.subr.mxu0 %v149
    %449 = vmatpush1.msra.mxu0 %v148
    %450 = vmatprep.subr.mxu0 %v152
    %451 = vmatpush1.msra.mxu0 %v151
    %452 = vmatprep.subr.mxu0 %v155
    %453 = vmatpush1.msra.mxu0 %v154
    %454 = vmatprep.subr.mxu0 0.0
    %455 = vmatpush1.msra.mxu0 0.0
    %456 = vmatprep.subr.mxu0 0.0
    %457 = vmatpush1.msra.mxu0 0.0
    %458 = vmatprep.subr.mxu0 0.0
    %459 = vmatpush1.msra.mxu0 0.0
    %460 = vmatprep.subr.mxu0 0.0
    %461 = vmatpush1.msra.mxu0 0.0
    %462 = vmatprep.subr.mxu0 0.0
    %463 = vmatpush1.msra.mxu0 0.0
    %464 = vmatprep.subr.mxu0 0.0
    %465 = vmatpush1.msra.mxu0 0.0
    %466 = vmatprep.subr.mxu0 0.0
    %467 = vmatpush1.msra.mxu0 0.0
    %468 = vmatprep.subr.mxu0 0.0
    %469 = vmatpush1.msra.mxu0 0.0
    %470 = vmatprep.subr.mxu0 0.0
    %471 = vmatpush1.msra.mxu0 0.0
    %472 = vmatprep.subr.mxu0 0.0
    %473 = vmatpush1.msra.mxu0 0.0
    %474 = vmatprep.subr.mxu0 0.0
    %475 = vmatpush1.msra.mxu0 0.0
    %476 = vmatprep.subr.mxu0 0.0
    %477 = vmatpush1.msra.mxu0 0.0
    %478 = vmatprep.subr.mxu0 0.0
    %479 = vmatpush1.msra.mxu0 0.0
    %480 = vmatprep.subr.mxu0 0.0
    %481 = vmatpush1.msra.mxu0 0.0
    %482 = vmatprep.subr.mxu0 0.0
    %483 = vmatpush1.msra.mxu0 0.0
    %484 = vmatprep.subr.mxu0 0.0
    %485 = vmatpush1.msra.mxu0 0.0
    %486 = vmatprep.mubr.f32.mxu0 0.0
    %487 = vmatmul.mubr.f32.gmra.mrb[0].mxu0 0.0
    %v488 = vpop.f32.mrb[0].mxu0
    %v489 = vadd.f32 0.0, %v488
    %v490 = vpop.f32.mrb[0].mxu0
    %v491 = vadd.f32 0.0, %v490
    %492 = vdwg.mxu0
    %493 = vmatprep.subr.mxu0 0.0
    %494 = vmatpush1.msra.mxu0 %v111
    %495 = vmatprep.subr.mxu0 0.0
    %496 = vmatpush1.msra.mxu0 %v114
    %497 = vmatprep.subr.mxu0 0.0
    %498 = vmatpush1.msra.mxu0 %v117
    %499 = vmatprep.subr.mxu0 0.0
    %500 = vmatpush1.msra.mxu0 %v120
    %501 = vmatprep.subr.mxu0 0.0
    %502 = vmatpush1.msra.mxu0 %v123
    %503 = vmatprep.subr.mxu0 0.0
    %504 = vmatpush1.msra.mxu0 %v126
    %505 = vmatprep.subr.mxu0 0.0
    %506 = vmatpush1.msra.mxu0 %v129
    %507 = vmatprep.subr.mxu0 0.0
    %508 = vmatpush1.msra.mxu0 %v132
    %509 = vmatprep.subr.mxu0 0.0
    %510 = vmatpush1.msra.mxu0 %v135
    %511 = vmatprep.subr.mxu0 0.0
    %512 = vmatpush1.msra.mxu0 %v138
    %513 = vmatprep.subr.mxu0 0.0
    %514 = vmatpush1.msra.mxu0 %v141
    %515 = vmatprep.subr.mxu0 0.0
    %516 = vmatpush1.msra.mxu0 %v144
    %517 = vmatprep.subr.mxu0 0.0
    %518 = vmatpush1.msra.mxu0 %v147
    %519 = vmatprep.subr.mxu0 0.0
    %520 = vmatpush1.msra.mxu0 %v150
    %521 = vmatprep.subr.mxu0 0.0
    %522 = vmatpush1.msra.mxu0 %v153
    %523 = vmatprep.subr.mxu0 0.0
    %524 = vmatpush1.msra.mxu0 %v156
    %525 = vmatprep.subr.mxu0 0.0
    %526 = vmatpush1.msra.mxu0 0.0
    %527 = vmatprep.subr.mxu0 0.0
    %528 = vmatpush1.msra.mxu0 0.0
    %529 = vmatprep.subr.mxu0 0.0
    %530 = vmatpush1.msra.mxu0 0.0
    %531 = vmatprep.subr.mxu0 0.0
    %532 = vmatpush1.msra.mxu0 0.0
    %533 = vmatprep.subr.mxu0 0.0
    %534 = vmatpush1.msra.mxu0 0.0
    %535 = vmatprep.subr.mxu0 0.0
    %536 = vmatpush1.msra.mxu0 0.0
    %537 = vmatprep.subr.mxu0 0.0
    %538 = vmatpush1.msra.mxu0 0.0
    %539 = vmatprep.subr.mxu0 0.0
    %540 = vmatpush1.msra.mxu0 0.0
    %541 = vmatprep.subr.mxu0 0.0
    %542 = vmatpush1.msra.mxu0 0.0
    %543 = vmatprep.subr.mxu0 0.0
    %544 = vmatpush1.msra.mxu0 0.0
    %545 = vmatprep.subr.mxu0 0.0
    %546 = vmatpush1.msra.mxu0 0.0
    %547 = vmatprep.subr.mxu0 0.0
    %548 = vmatpush1.msra.mxu0 0.0
    %549 = vmatprep.subr.mxu0 0.0
    %550 = vmatpush1.msra.mxu0 0.0
    %551 = vmatprep.subr.mxu0 0.0
    %552 = vmatpush1.msra.mxu0 0.0
    %553 = vmatprep.subr.mxu0 0.0
    %554 = vmatpush1.msra.mxu0 0.0
    %555 = vmatprep.subr.mxu0 0.0
    %556 = vmatpush1.msra.mxu0 0.0
    %557 = vmatprep.mubr.f32.mxu0 0.0
    %558 = vmatmul.mubr.f32.gmra.mrb[0].mxu0 0.0
    %v559 = vpop.f32.mrb[0].mxu0
    %v560 = vadd.f32 0.0, %v559
    %v561 = vpop.f32.mrb[0].mxu0
    %562 = vdwg.mxu0
    %v563 = vadd.f32 %v271, %v489
    %v564 = vxor.u32 %v563, 2147483648
    %v565 = vmul.f32 %v564, 1.442695
    %v566 = vpow.pop %v565
    %v567 = vadd.f32 %v566, 1.0
    %v568 = vrcp.pop %v567
    %v569 = vmul.f32 1.0, %v568
    %v570 = vadd.f32 %v273, %v491
    %v571 = vxor.u32 %v570, 2147483648
    %v572 = vmul.f32 %v571, 1.442695
    %v573 = vpow.pop %v572
    %v574 = vadd.f32 %v573, 1.0
    %v575 = vrcp.pop %v574
    %v576 = vmul.f32 1.0, %v575
    %v577 = vadd.f32 %v560, %v162
    %v578 = vmul.f32 %v569, %v577
    %v579 = vadd.f32 %v384, %v578
    %v580 = vtanh.pop %v579
    %v581 = vsub.f32 1.0, %v576
    %v582 = vmul.f32 %v581, %v580
    %v583 = vmul.f32 %v576, 0.0
    %v584 = vadd.f32 %v582, %v583
    %585 = vmatprep.subr.mxu0 %v110
    %586 = vmatpush1.msra.mxu0 %v109
    %587 = vmatprep.subr.mxu0 %v113
    %588 = vmatpush1.msra.mxu0 %v112
    %589 = vmatprep.subr.mxu0 %v116
    %590 = vmatpush1.msra.mxu0 %v115
    %591 = vmatprep.subr.mxu0 %v119
    %592 = vmatpush1.msra.mxu0 %v118
    %593 = vmatprep.subr.mxu0 %v122
    %594 = vmatpush1.msra.mxu0 %v121
    %595 = vmatprep.subr.mxu0 %v125
    %596 = vmatpush1.msra.mxu0 %v124
    %597 = vmatprep.subr.mxu0 %v128
    %598 = vmatpush1.msra.mxu0 %v127
    %599 = vmatprep.subr.mxu0 %v131
    %600 = vmatpush1.msra.mxu0 %v130
    %601 = vmatprep.subr.mxu0 %v134
    %602 = vmatpush1.msra.mxu0 %v133
    %603 = vmatprep.subr.mxu0 %v137
    %604 = vmatpush1.msra.mxu0 %v136
    %605 = vmatprep.subr.mxu0 %v140
    %606 = vmatpush1.msra.mxu0 %v139
    %607 = vmatprep.subr.mxu0 %v143
    %608 = vmatpush1.msra.mxu0 %v142
    %609 = vmatprep.subr.mxu0 %v146
    %610 = vmatpush1.msra.mxu0 %v145
    %611 = vmatprep.subr.mxu0 %v149
    %612 = vmatpush1.msra.mxu0 %v148
    %613 = vmatprep.subr.mxu0 %v152
    %614 = vmatpush1.msra.mxu0 %v151
    %615 = vmatprep.subr.mxu0 %v155
    %616 = vmatpush1.msra.mxu0 %v154
    %617 = vmatprep.subr.mxu0 0.0
    %618 = vmatpush1.msra.mxu0 0.0
    %619 = vmatprep.subr.mxu0 0.0
    %620 = vmatpush1.msra.mxu0 0.0
    %621 = vmatprep.subr.mxu0 0.0
    %622 = vmatpush1.msra.mxu0 0.0
    %623 = vmatprep.subr.mxu0 0.0
    %624 = vmatpush1.msra.mxu0 0.0
    %625 = vmatprep.subr.mxu0 0.0
    %626 = vmatpush1.msra.mxu0 0.0
    %627 = vmatprep.subr.mxu0 0.0
    %628 = vmatpush1.msra.mxu0 0.0
    %629 = vmatprep.subr.mxu0 0.0
    %630 = vmatpush1.msra.mxu0 0.0
    %631 = vmatprep.subr.mxu0 0.0
    %632 = vmatpush1.msra.mxu0 0.0
    %633 = vmatprep.subr.mxu0 0.0
    %634 = vmatpush1.msra.mxu0 0.0
    %635 = vmatprep.subr.mxu0 0.0
    %636 = vmatpush1.msra.mxu0 0.0
    %637 = vmatprep.subr.mxu0 0.0
    %638 = vmatpush1.msra.mxu0 0.0
    %639 = vmatprep.subr.mxu0 0.0
    %640 = vmatpush1.msra.mxu0 0.0
    %641 = vmatprep.subr.mxu0 0.0
    %642 = vmatpush1.msra.mxu0 0.0
    %643 = vmatprep.subr.mxu0 0.0
    %644 = vmatpush1.msra.mxu0 0.0
    %645 = vmatprep.subr.mxu0 0.0
    %646 = vmatpush1.msra.mxu0 0.0
    %647 = vmatprep.subr.mxu0 0.0
    %648 = vmatpush1.msra.mxu0 0.0
    %649 = vmatprep.mubr.f32.mxu0 0.0
    %650 = vmatmul.mubr.f32.gmra.mrb[0].mxu0 %v584
    %v651 = vpop.f32.mrb[0].mxu0
    %v652 = vadd.f32 0.0, %v651
    %v653 = vpop.f32.mrb[0].mxu0
    %v654 = vadd.f32 0.0, %v653
    %655 = vdwg.mxu0
    %656 = vmatprep.subr.mxu0 0.0
    %657 = vmatpush1.msra.mxu0 %v111
    %658 = vmatprep.subr.mxu0 0.0
    %659 = vmatpush1.msra.mxu0 %v114
    %660 = vmatprep.subr.mxu0 0.0
    %661 = vmatpush1.msra.mxu0 %v117
    %662 = vmatprep.subr.mxu0 0.0
    %663 = vmatpush1.msra.mxu0 %v120
    %664 = vmatprep.subr.mxu0 0.0
    %665 = vmatpush1.msra.mxu0 %v123
    %666 = vmatprep.subr.mxu0 0.0
    %667 = vmatpush1.msra.mxu0 %v126
    %668 = vmatprep.subr.mxu0 0.0
    %669 = vmatpush1.msra.mxu0 %v129
    %670 = vmatprep.subr.mxu0 0.0
    %671 = vmatpush1.msra.mxu0 %v132
    %672 = vmatprep.subr.mxu0 0.0
    %673 = vmatpush1.msra.mxu0 %v135
    %674 = vmatprep.subr.mxu0 0.0
    %675 = vmatpush1.msra.mxu0 %v138
    %676 = vmatprep.subr.mxu0 0.0
    %677 = vmatpush1.msra.mxu0 %v141
    %678 = vmatprep.subr.mxu0 0.0
    %679 = vmatpush1.msra.mxu0 %v144
    %680 = vmatprep.subr.mxu0 0.0
    %681 = vmatpush1.msra.mxu0 %v147
    %682 = vmatprep.subr.mxu0 0.0
    %683 = vmatpush1.msra.mxu0 %v150
    %684 = vmatprep.subr.mxu0 0.0
    %685 = vmatpush1.msra.mxu0 %v153
    %686 = vmatprep.subr.mxu0 0.0
    %687 = vmatpush1.msra.mxu0 %v156
    %688 = vmatprep.subr.mxu0 0.0
    %689 = vmatpush1.msra.mxu0 0.0
    %690 = vmatprep.subr.mxu0 0.0
    %691 = vmatpush1.msra.mxu0 0.0
    %692 = vmatprep.subr.mxu0 0.0
    %693 = vmatpush1.msra.mxu0 0.0
    %694 = vmatprep.subr.mxu0 0.0
    %695 = vmatpush1.msra.mxu0 0.0
    %696 = vmatprep.subr.mxu0 0.0
    %697 = vmatpush1.msra.mxu0 0.0
    %698 = vmatprep.subr.mxu0 0.0
    %699 = vmatpush1.msra.mxu0 0.0
    %700 = vmatprep.subr.mxu0 0.0
    %701 = vmatpush1.msra.mxu0 0.0
    %702 = vmatprep.subr.mxu0 0.0
    %703 = vmatpush1.msra.mxu0 0.0
    %704 = vmatprep.subr.mxu0 0.0
    %705 = vmatpush1.msra.mxu0 0.0
    %706 = vmatprep.subr.mxu0 0.0
    %707 = vmatpush1.msra.mxu0 0.0
    %708 = vmatprep.subr.mxu0 0.0
    %709 = vmatpush1.msra.mxu0 0.0
    %710 = vmatprep.subr.mxu0 0.0
    %711 = vmatpush1.msra.mxu0 0.0
    %712 = vmatprep.subr.mxu0 0.0
    %713 = vmatpush1.msra.mxu0 0.0
    %714 = vmatprep.subr.mxu0 0.0
    %715 = vmatpush1.msra.mxu0 0.0
    %716 = vmatprep.subr.mxu0 0.0
    %717 = vmatpush1.msra.mxu0 0.0
    %718 = vmatprep.subr.mxu0 0.0
    %719 = vmatpush1.msra.mxu0 0.0
    %720 = vmatprep.mubr.f32.mxu0 0.0
    %721 = vmatmul.mubr.f32.gmra.mrb[0].mxu0 %v584
    %v722 = vpop.f32.mrb[0].mxu0
    %v723 = vadd.f32 0.0, %v722
    %v724 = vpop.f32.mrb[0].mxu0
    %725 = vdwg.mxu0
    %v726 = vadd.f32 %v277, %v652
    %v727 = vxor.u32 %v726, 2147483648
    %v728 = vmul.f32 %v727, 1.442695
    %v729 = vpow.pop %v728
    %v730 = vadd.f32 %v729, 1.0
    %v731 = vrcp.pop %v730
    %v732 = vmul.f32 1.0, %v731
    %v733 = vadd.f32 %v279, %v654
    %v734 = vxor.u32 %v733, 2147483648
    %v735 = vmul.f32 %v734, 1.442695
    %v736 = vpow.pop %v735
    %v737 = vadd.f32 %v736, 1.0
    %v738 = vrcp.pop %v737
    %v739 = vmul.f32 1.0, %v738
    %v740 = vadd.f32 %v723, %v162
    %v741 = vmul.f32 %v732, %v740
    %v742 = vadd.f32 %v389, %v741
    %v743 = vtanh.pop %v742
    %v744 = vsub.f32 1.0, %v739
    %v745 = vmul.f32 %v744, %v743
    %v746 = vmul.f32 %v739, %v584
    %v747 = vadd.f32 %v745, %v746
    %748 = vmatprep.subr.mxu0 %v110
    %749 = vmatpush1.msra.mxu0 %v109
    %750 = vmatprep.subr.mxu0 %v113
    %751 = vmatpush1.msra.mxu0 %v112
    %752 = vmatprep.subr.mxu0 %v116
    %753 = vmatpush1.msra.mxu0 %v115
    %754 = vmatprep.subr.mxu0 %v119
    %755 = vmatpush1.msra.mxu0 %v118
    %756 = vmatprep.subr.mxu0 %v122
    %757 = vmatpush1.msra.mxu0 %v121
    %758 = vmatprep.subr.mxu0 %v125
    %759 = vmatpush1.msra.mxu0 %v124
    %760 = vmatprep.subr.mxu0 %v128
    %761 = vmatpush1.msra.mxu0 %v127
    %762 = vmatprep.subr.mxu0 %v131
    %763 = vmatpush1.msra.mxu0 %v130
    %764 = vmatprep.subr.mxu0 %v134
    %765 = vmatpush1.msra.mxu0 %v133
    %766 = vmatprep.subr.mxu0 %v137
    %767 = vmatpush1.msra.mxu0 %v136
    %768 = vmatprep.subr.mxu0 %v140
    %769 = vmatpush1.msra.mxu0 %v139
    %770 = vmatprep.subr.mxu0 %v143
    %771 = vmatpush1.msra.mxu0 %v142
    %772 = vmatprep.subr.mxu0 %v146
    %773 = vmatpush1.msra.mxu0 %v145
    %774 = vmatprep.subr.mxu0 %v149
    %775 = vmatpush1.msra.mxu0 %v148
    %776 = vmatprep.subr.mxu0 %v152
    %777 = vmatpush1.msra.mxu0 %v151
    %778 = vmatprep.subr.mxu0 %v155
    %779 = vmatpush1.msra.mxu0 %v154
    %780 = vmatprep.subr.mxu0 0.0
    %781 = vmatpush1.msra.mxu0 0.0
    %782 = vmatprep.subr.mxu0 0.0
    %783 = vmatpush1.msra.mxu0 0.0
    %784 = vmatprep.subr.mxu0 0.0
    %785 = vmatpush1.msra.mxu0 0.0
    %786 = vmatprep.subr.mxu0 0.0
    %787 = vmatpush1.msra.mxu0 0.0
    %788 = vmatprep.subr.mxu0 0.0
    %789 = vmatpush1.msra.mxu0 0.0
    %790 = vmatprep.subr.mxu0 0.0
    %791 = vmatpush1.msra.mxu0 0.0
    %792 = vmatprep.subr.mxu0 0.0
    %793 = vmatpush1.msra.mxu0 0.0
    %794 = vmatprep.subr.mxu0 0.0
    %795 = vmatpush1.msra.mxu0 0.0
    %796 = vmatprep.subr.mxu0 0.0
    %797 = vmatpush1.msra.mxu0 0.0
    %798 = vmatprep.subr.mxu0 0.0
    %799 = vmatpush1.msra.mxu0 0.0
    %800 = vmatprep.subr.mxu0 0.0
    %801 = vmatpush1.msra.mxu0 0.0
    %802 = vmatprep.subr.mxu0 0.0
    %803 = vmatpush1.msra.mxu0 0.0
    %804 = vmatprep.subr.mxu0 0.0
    %805 = vmatpush1.msra.mxu0 0.0
    %806 = vmatprep.subr.mxu0 0.0
    %807 = vmatpush1.msra.mxu0 0.0
    %808 = vmatprep.subr.mxu0 0.0
    %809 = vmatpush1.msra.mxu0 0.0
    %810 = vmatprep.subr.mxu0 0.0
    %811 = vmatpush1.msra.mxu0 0.0
    %812 = vmatprep.mubr.f32.mxu0 0.0
    %813 = vmatmul.mubr.f32.gmra.mrb[0].mxu0 %v747
    %v814 = vpop.f32.mrb[0].mxu0
    %v815 = vadd.f32 0.0, %v814
    %v816 = vpop.f32.mrb[0].mxu0
    %v817 = vadd.f32 0.0, %v816
    %818 = vdwg.mxu0
    %819 = vmatprep.subr.mxu0 0.0
    %820 = vmatpush1.msra.mxu0 %v111
    %821 = vmatprep.subr.mxu0 0.0
    %822 = vmatpush1.msra.mxu0 %v114
    %823 = vmatprep.subr.mxu0 0.0
    %824 = vmatpush1.msra.mxu0 %v117
    %825 = vmatprep.subr.mxu0 0.0
    %826 = vmatpush1.msra.mxu0 %v120
    %827 = vmatprep.subr.mxu0 0.0
    %828 = vmatpush1.msra.mxu0 %v123
    %829 = vmatprep.subr.mxu0 0.0
    %830 = vmatpush1.msra.mxu0 %v126
    %831 = vmatprep.subr.mxu0 0.0
    %832 = vmatpush1.msra.mxu0 %v129
    %833 = vmatprep.subr.mxu0 0.0
    %834 = vmatpush1.msra.mxu0 %v132
    %835 = vmatprep.subr.mxu0 0.0
    %836 = vmatpush1.msra.mxu0 %v135
    %837 = vmatprep.subr.mxu0 0.0
    %838 = vmatpush1.msra.mxu0 %v138
    %839 = vmatprep.subr.mxu0 0.0
    %840 = vmatpush1.msra.mxu0 %v141
    %841 = vmatprep.subr.mxu0 0.0
    %842 = vmatpush1.msra.mxu0 %v144
    %843 = vmatprep.subr.mxu0 0.0
    %844 = vmatpush1.msra.mxu0 %v147
    %845 = vmatprep.subr.mxu0 0.0
    %846 = vmatpush1.msra.mxu0 %v150
    %847 = vmatprep.subr.mxu0 0.0
    %848 = vmatpush1.msra.mxu0 %v153
    %849 = vmatprep.subr.mxu0 0.0
    %850 = vmatpush1.msra.mxu0 %v156
    %851 = vmatprep.subr.mxu0 0.0
    %852 = vmatpush1.msra.mxu0 0.0
    %853 = vmatprep.subr.mxu0 0.0
    %854 = vmatpush1.msra.mxu0 0.0
    %855 = vmatprep.subr.mxu0 0.0
    %856 = vmatpush1.msra.mxu0 0.0
    %857 = vmatprep.subr.mxu0 0.0
    %858 = vmatpush1.msra.mxu0 0.0
    %859 = vmatprep.subr.mxu0 0.0
    %860 = vmatpush1.msra.mxu0 0.0
    %861 = vmatprep.subr.mxu0 0.0
    %862 = vmatpush1.msra.mxu0 0.0
    %863 = vmatprep.subr.mxu0 0.0
    %864 = vmatpush1.msra.mxu0 0.0
    %865 = vmatprep.subr.mxu0 0.0
    %866 = vmatpush1.msra.mxu0 0.0
    %867 = vmatprep.subr.mxu0 0.0
    %868 = vmatpush1.msra.mxu0 0.0
    %869 = vmatprep.subr.mxu0 0.0
    %870 = vmatpush1.msra.mxu0 0.0
    %871 = vmatprep.subr.mxu0 0.0
    %872 = vmatpush1.msra.mxu0 0.0
    %873 = vmatprep.subr.mxu0 0.0
    %874 = vmatpush1.msra.mxu0 0.0
    %875 = vmatprep.subr.mxu0 0.0
    %876 = vmatpush1.msra.mxu0 0.0
    %877 = vmatprep.subr.mxu0 0.0
    %878 = vmatpush1.msra.mxu0 0.0
    %879 = vmatprep.subr.mxu0 0.0
    %880 = vmatpush1.msra.mxu0 0.0
    %881 = vmatprep.subr.mxu0 0.0
    %882 = vmatpush1.msra.mxu0 0.0
    %883 = vmatprep.mubr.f32.mxu0 0.0
    %884 = vmatmul.mubr.f32.gmra.mrb[0].mxu0 %v747
    %v885 = vpop.f32.mrb[0].mxu0
    %v886 = vadd.f32 0.0, %v885
    %v887 = vpop.f32.mrb[0].mxu0
    %888 = vdwg.mxu0
    %v889 = vadd.f32 %v283, %v815
    %v890 = vxor.u32 %v889, 2147483648
    %v891 = vmul.f32 %v890, 1.442695
    %v892 = vpow.pop %v891
    %v893 = vadd.f32 %v892, 1.0
    %v894 = vrcp.pop %v893
    %v895 = vmul.f32 1.0, %v894
    %v896 = vadd.f32 %v285, %v817
    %v897 = vxor.u32 %v896, 2147483648
    %v898 = vmul.f32 %v897, 1.442695
    %v899 = vpow.pop %v898
    %v900 = vadd.f32 %v899, 1.0
    %v901 = vrcp.pop %v900
    %v902 = vmul.f32 1.0, %v901
    %v903 = vadd.f32 %v886, %v162
    %v904 = vmul.f32 %v895, %v903
    %v905 = vadd.f32 %v394, %v904
    %v906 = vtanh.pop %v905
    %v907 = vsub.f32 1.0, %v902
    %v908 = vmul.f32 %v907, %v906
    %v909 = vmul.f32 %v902, %v747
    %v910 = vadd.f32 %v908, %v909
    %911 = vmatprep.subr.mxu0 %v110
    %912 = vmatpush1.msra.mxu0 %v109
    %913 = vmatprep.subr.mxu0 %v113
    %914 = vmatpush1.msra.mxu0 %v112
    %915 = vmatprep.subr.mxu0 %v116
    %916 = vmatpush1.msra.mxu0 %v115
    %917 = vmatprep.subr.mxu0 %v119
    %918 = vmatpush1.msra.mxu0 %v118
    %919 = vmatprep.subr.mxu0 %v122
    %920 = vmatpush1.msra.mxu0 %v121
    %921 = vmatprep.subr.mxu0 %v125
    %922 = vmatpush1.msra.mxu0 %v124
    %923 = vmatprep.subr.mxu0 %v128
    %924 = vmatpush1.msra.mxu0 %v127
    %925 = vmatprep.subr.mxu0 %v131
    %926 = vmatpush1.msra.mxu0 %v130
    %927 = vmatprep.subr.mxu0 %v134
    %928 = vmatpush1.msra.mxu0 %v133
    %929 = vmatprep.subr.mxu0 %v137
    %930 = vmatpush1.msra.mxu0 %v136
    %931 = vmatprep.subr.mxu0 %v140
    %932 = vmatpush1.msra.mxu0 %v139
    %933 = vmatprep.subr.mxu0 %v143
    %934 = vmatpush1.msra.mxu0 %v142
    %935 = vmatprep.subr.mxu0 %v146
    %936 = vmatpush1.msra.mxu0 %v145
    %937 = vmatprep.subr.mxu0 %v149
    %938 = vmatpush1.msra.mxu0 %v148
    %939 = vmatprep.subr.mxu0 %v152
    %940 = vmatpush1.msra.mxu0 %v151
    %941 = vmatprep.subr.mxu0 %v155
    %942 = vmatpush1.msra.mxu0 %v154
    %943 = vmatprep.subr.mxu0 0.0
    %944 = vmatpush1.msra.mxu0 0.0
    %945 = vmatprep.subr.mxu0 0.0
    %946 = vmatpush1.msra.mxu0 0.0
    %947 = vmatprep.subr.mxu0 0.0
    %948 = vmatpush1.msra.mxu0 0.0
    %949 = vmatprep.subr.mxu0 0.0
    %950 = vmatpush1.msra.mxu0 0.0
    %951 = vmatprep.subr.mxu0 0.0
    %952 = vmatpush1.msra.mxu0 0.0
    %953 = vmatprep.subr.mxu0 0.0
    %954 = vmatpush1.msra.mxu0 0.0
    %955 = vmatprep.subr.mxu0 0.0
    %956 = vmatpush1.msra.mxu0 0.0
    %957 = vmatprep.subr.mxu0 0.0
    %958 = vmatpush1.msra.mxu0 0.0
    %959 = vmatprep.subr.mxu0 0.0
    %960 = vmatpush1.msra.mxu0 0.0
    %961 = vmatprep.subr.mxu0 0.0
    %962 = vmatpush1.msra.mxu0 0.0
    %963 = vmatprep.subr.mxu0 0.0
    %964 = vmatpush1.msra.mxu0 0.0
    %965 = vmatprep.subr.mxu0 0.0
    %966 = vmatpush1.msra.mxu0 0.0
    %967 = vmatprep.subr.mxu0 0.0
    %968 = vmatpush1.msra.mxu0 0.0
    %969 = vmatprep.subr.mxu0 0.0
    %970 = vmatpush1.msra.mxu0 0.0
    %971 = vmatprep.subr.mxu0 0.0
    %972 = vmatpush1.msra.mxu0 0.0
    %973 = vmatprep.subr.mxu0 0.0
    %974 = vmatpush1.msra.mxu0 0.0
    %975 = vmatprep.mubr.f32.mxu0 0.0
    %976 = vmatmul.mubr.f32.gmra.mrb[0].mxu0 %v910
    %v977 = vpop.f32.mrb[0].mxu0
    %v978 = vadd.f32 0.0, %v977
    %v979 = vpop.f32.mrb[0].mxu0
    %v980 = vadd.f32 0.0, %v979
    %981 = vdwg.mxu0
    %982 = vmatprep.subr.mxu0 0.0
    %983 = vmatpush1.msra.mxu0 %v111
    %984 = vmatprep.subr.mxu0 0.0
    %985 = vmatpush1.msra.mxu0 %v114
    %986 = vmatprep.subr.mxu0 0.0
    %987 = vmatpush1.msra.mxu0 %v117
    %988 = vmatprep.subr.mxu0 0.0
    %989 = vmatpush1.msra.mxu0 %v120
    %990 = vmatprep.subr.mxu0 0.0
    %991 = vmatpush1.msra.mxu0 %v123
    %992 = vmatprep.subr.mxu0 0.0
    %993 = vmatpush1.msra.mxu0 %v126
    %994 = vmatprep.subr.mxu0 0.0
    %995 = vmatpush1.msra.mxu0 %v129
    %996 = vmatprep.subr.mxu0 0.0
    %997 = vmatpush1.msra.mxu0 %v132
    %998 = vmatprep.subr.mxu0 0.0
    %999 = vmatpush1.msra.mxu0 %v135
    %1000 = vmatprep.subr.mxu0 0.0
    %1001 = vmatpush1.msra.mxu0 %v138
    %1002 = vmatprep.subr.mxu0 0.0
    %1003 = vmatpush1.msra.mxu0 %v141
    %1004 = vmatprep.subr.mxu0 0.0
    %1005 = vmatpush1.msra.mxu0 %v144
    %1006 = vmatprep.subr.mxu0 0.0
    %1007 = vmatpush1.msra.mxu0 %v147
    %1008 = vmatprep.subr.mxu0 0.0
    %1009 = vmatpush1.msra.mxu0 %v150
    %1010 = vmatprep.subr.mxu0 0.0
    %1011 = vmatpush1.msra.mxu0 %v153
    %1012 = vmatprep.subr.mxu0 0.0
    %1013 = vmatpush1.msra.mxu0 %v156
    %1014 = vmatprep.subr.mxu0 0.0
    %1015 = vmatpush1.msra.mxu0 0.0
    %1016 = vmatprep.subr.mxu0 0.0
    %1017 = vmatpush1.msra.mxu0 0.0
    %1018 = vmatprep.subr.mxu0 0.0
    %1019 = vmatpush1.msra.mxu0 0.0
    %1020 = vmatprep.subr.mxu0 0.0
    %1021 = vmatpush1.msra.mxu0 0.0
    %1022 = vmatprep.subr.mxu0 0.0
    %1023 = vmatpush1.msra.mxu0 0.0
    %1024 = vmatprep.subr.mxu0 0.0
    %1025 = vmatpush1.msra.mxu0 0.0
    %1026 = vmatprep.subr.mxu0 0.0
    %1027 = vmatpush1.msra.mxu0 0.0
    %1028 = vmatprep.subr.mxu0 0.0
    %1029 = vmatpush1.msra.mxu0 0.0
    %1030 = vmatprep.subr.mxu0 0.0
    %1031 = vmatpush1.msra.mxu0 0.0
    %1032 = vmatprep.subr.mxu0 0.0
    %1033 = vmatpush1.msra.mxu0 0.0
    %1034 = vmatprep.subr.mxu0 0.0
    %1035 = vmatpush1.msra.mxu0 0.0
    %1036 = vmatprep.subr.mxu0 0.0
    %1037 = vmatpush1.msra.mxu0 0.0
    %1038 = vmatprep.subr.mxu0 0.0
    %1039 = vmatpush1.msra.mxu0 0.0
    %1040 = vmatprep.subr.mxu0 0.0
    %1041 = vmatpush1.msra.mxu0 0.0
    %1042 = vmatprep.subr.mxu0 0.0
    %1043 = vmatpush1.msra.mxu0 0.0
    %1044 = vmatprep.subr.mxu0 0.0
    %1045 = vmatpush1.msra.mxu0 0.0
    %1046 = vmatprep.mubr.f32.mxu0 0.0
    %1047 = vmatmul.mubr.f32.gmra.mrb[0].mxu0 %v910
    %v1048 = vpop.f32.mrb[0].mxu0
    %v1049 = vadd.f32 0.0, %v1048
    %v1050 = vpop.f32.mrb[0].mxu0
    %1051 = vdwg.mxu0
    %v1052 = vadd.f32 %v289, %v978
    %v1053 = vxor.u32 %v1052, 2147483648
    %v1054 = vmul.f32 %v1053, 1.442695
    %v1055 = vpow.pop %v1054
    %v1056 = vadd.f32 %v1055, 1.0
    %v1057 = vrcp.pop %v1056
    %v1058 = vmul.f32 1.0, %v1057
    %v1059 = vadd.f32 %v291, %v980
    %v1060 = vxor.u32 %v1059, 2147483648
    %v1061 = vmul.f32 %v1060, 1.442695
    %v1062 = vpow.pop %v1061
    %v1063 = vadd.f32 %v1062, 1.0
    %v1064 = vrcp.pop %v1063
    %v1065 = vmul.f32 1.0, %v1064
    %v1066 = vadd.f32 %v1049, %v162
    %v1067 = vmul.f32 %v1058, %v1066
    %v1068 = vadd.f32 %v399, %v1067
    %v1069 = vtanh.pop %v1068
    %v1070 = vsub.f32 1.0, %v1065
    %v1071 = vmul.f32 %v1070, %v1069
    %v1072 = vmul.f32 %v1065, %v910
    %v1073 = vadd.f32 %v1071, %v1072
    %1074 = vmatprep.subr.mxu0 %v110
    %1075 = vmatpush1.msra.mxu0 %v109
    %1076 = vmatprep.subr.mxu0 %v113
    %1077 = vmatpush1.msra.mxu0 %v112
    %1078 = vmatprep.subr.mxu0 %v116
    %1079 = vmatpush1.msra.mxu0 %v115
    %1080 = vmatprep.subr.mxu0 %v119
    %1081 = vmatpush1.msra.mxu0 %v118
    %1082 = vmatprep.subr.mxu0 %v122
    %1083 = vmatpush1.msra.mxu0 %v121
    %1084 = vmatprep.subr.mxu0 %v125
    %1085 = vmatpush1.msra.mxu0 %v124
    %1086 = vmatprep.subr.mxu0 %v128
    %1087 = vmatpush1.msra.mxu0 %v127
    %1088 = vmatprep.subr.mxu0 %v131
    %1089 = vmatpush1.msra.mxu0 %v130
    %1090 = vmatprep.subr.mxu0 %v134
    %1091 = vmatpush1.msra.mxu0 %v133
    %1092 = vmatprep.subr.mxu0 %v137
    %1093 = vmatpush1.msra.mxu0 %v136
    %1094 = vmatprep.subr.mxu0 %v140
    %1095 = vmatpush1.msra.mxu0 %v139
    %1096 = vmatprep.subr.mxu0 %v143
    %1097 = vmatpush1.msra.mxu0 %v142
    %1098 = vmatprep.subr.mxu0 %v146
    %1099 = vmatpush1.msra.mxu0 %v145
    %1100 = vmatprep.subr.mxu0 %v149
    %1101 = vmatpush1.msra.mxu0 %v148
    %1102 = vmatprep.subr.mxu0 %v152
    %1103 = vmatpush1.msra.mxu0 %v151
    %1104 = vmatprep.subr.mxu0 %v155
    %1105 = vmatpush1.msra.mxu0 %v154
    %1106 = vmatprep.subr.mxu0 0.0
    %1107 = vmatpush1.msra.mxu0 0.0
    %1108 = vmatprep.subr.mxu0 0.0
    %1109 = vmatpush1.msra.mxu0 0.0
    %1110 = vmatprep.subr.mxu0 0.0
    %1111 = vmatpush1.msra.mxu0 0.0
    %1112 = vmatprep.subr.mxu0 0.0
    %1113 = vmatpush1.msra.mxu0 0.0
    %1114 = vmatprep.subr.mxu0 0.0
    %1115 = vmatpush1.msra.mxu0 0.0
    %1116 = vmatprep.subr.mxu0 0.0
    %1117 = vmatpush1.msra.mxu0 0.0
    %1118 = vmatprep.subr.mxu0 0.0
    %1119 = vmatpush1.msra.mxu0 0.0
    %1120 = vmatprep.subr.mxu0 0.0
    %1121 = vmatpush1.msra.mxu0 0.0
    %1122 = vmatprep.subr.mxu0 0.0
    %1123 = vmatpush1.msra.mxu0 0.0
    %1124 = vmatprep.subr.mxu0 0.0
    %1125 = vmatpush1.msra.mxu0 0.0
    %1126 = vmatprep.subr.mxu0 0.0
    %1127 = vmatpush1.msra.mxu0 0.0
    %1128 = vmatprep.subr.mxu0 0.0
    %1129 = vmatpush1.msra.mxu0 0.0
    %1130 = vmatprep.subr.mxu0 0.0
    %1131 = vmatpush1.msra.mxu0 0.0
    %1132 = vmatprep.subr.mxu0 0.0
    %1133 = vmatpush1.msra.mxu0 0.0
    %1134 = vmatprep.subr.mxu0 0.0
    %1135 = vmatpush1.msra.mxu0 0.0
    %1136 = vmatprep.subr.mxu0 0.0
    %1137 = vmatpush1.msra.mxu0 0.0
    %1138 = vmatprep.mubr.f32.mxu0 0.0
    %1139 = vmatmul.mubr.f32.gmra.mrb[0].mxu0 %v1073
    %v1140 = vpop.f32.mrb[0].mxu0
    %v1141 = vadd.f32 0.0, %v1140
    %v1142 = vpop.f32.mrb[0].mxu0
    %v1143 = vadd.f32 0.0, %v1142
    %1144 = vdwg.mxu0
    %1145 = vmatprep.subr.mxu0 0.0
    %1146 = vmatpush1.msra.mxu0 %v111
    %1147 = vmatprep.subr.mxu0 0.0
    %1148 = vmatpush1.msra.mxu0 %v114
    %1149 = vmatprep.subr.mxu0 0.0
    %1150 = vmatpush1.msra.mxu0 %v117
    %1151 = vmatprep.subr.mxu0 0.0
    %1152 = vmatpush1.msra.mxu0 %v120
    %1153 = vmatprep.subr.mxu0 0.0
    %1154 = vmatpush1.msra.mxu0 %v123
    %1155 = vmatprep.subr.mxu0 0.0
    %1156 = vmatpush1.msra.mxu0 %v126
    %1157 = vmatprep.subr.mxu0 0.0
    %1158 = vmatpush1.msra.mxu0 %v129
    %1159 = vmatprep.subr.mxu0 0.0
    %1160 = vmatpush1.msra.mxu0 %v132
    %1161 = vmatprep.subr.mxu0 0.0
    %1162 = vmatpush1.msra.mxu0 %v135
    %1163 = vmatprep.subr.mxu0 0.0
    %1164 = vmatpush1.msra.mxu0 %v138
    %1165 = vmatprep.subr.mxu0 0.0
    %1166 = vmatpush1.msra.mxu0 %v141
    %1167 = vmatprep.subr.mxu0 0.0
    %1168 = vmatpush1.msra.mxu0 %v144
    %1169 = vmatprep.subr.mxu0 0.0
    %1170 = vmatpush1.msra.mxu0 %v147
    %1171 = vmatprep.subr.mxu0 0.0
    %1172 = vmatpush1.msra.mxu0 %v150
    %1173 = vmatprep.subr.mxu0 0.0
    %1174 = vmatpush1.msra.mxu0 %v153
    %1175 = vmatprep.subr.mxu0 0.0
    %1176 = vmatpush1.msra.mxu0 %v156
    %1177 = vmatprep.subr.mxu0 0.0
    %1178 = vmatpush1.msra.mxu0 0.0
    %1179 = vmatprep.subr.mxu0 0.0
    %1180 = vmatpush1.msra.mxu0 0.0
    %1181 = vmatprep.subr.mxu0 0.0
    %1182 = vmatpush1.msra.mxu0 0.0
    %1183 = vmatprep.subr.mxu0 0.0
    %1184 = vmatpush1.msra.mxu0 0.0
    %1185 = vmatprep.subr.mxu0 0.0
    %1186 = vmatpush1.msra.mxu0 0.0
    %1187 = vmatprep.subr.mxu0 0.0
    %1188 = vmatpush1.msra.mxu0 0.0
    %1189 = vmatprep.subr.mxu0 0.0
    %1190 = vmatpush1.msra.mxu0 0.0
    %1191 = vmatprep.subr.mxu0 0.0
    %1192 = vmatpush1.msra.mxu0 0.0
    %1193 = vmatprep.subr.mxu0 0.0
    %1194 = vmatpush1.msra.mxu0 0.0
    %1195 = vmatprep.subr.mxu0 0.0
    %1196 = vmatpush1.msra.mxu0 0.0
    %1197 = vmatprep.subr.mxu0 0.0
    %1198 = vmatpush1.msra.mxu0 0.0
    %1199 = vmatprep.subr.mxu0 0.0
    %1200 = vmatpush1.msra.mxu0 0.0
    %1201 = vmatprep.subr.mxu0 0.0
    %1202 = vmatpush1.msra.mxu0 0.0
    %1203 = vmatprep.subr.mxu0 0.0
    %1204 = vmatpush1.msra.mxu0 0.0
    %1205 = vmatprep.subr.mxu0 0.0
    %1206 = vmatpush1.msra.mxu0 0.0
    %1207 = vmatprep.subr.mxu0 0.0
    %1208 = vmatpush1.msra.mxu0 0.0
    %1209 = vmatprep.mubr.f32.mxu0 0.0
    %1210 = vmatmul.mubr.f32.gmra.mrb[0].mxu0 %v1073
    %v1211 = vpop.f32.mrb[0].mxu0
    %v1212 = vadd.f32 0.0, %v1211
    %v1213 = vpop.f32.mrb[0].mxu0
    %1214 = vdwg.mxu0
    %v1215 = vadd.f32 %v295, %v1141
    %v1216 = vxor.u32 %v1215, 2147483648
    %v1217 = vmul.f32 %v1216, 1.442695
    %v1218 = vpow.pop %v1217
    %v1219 = vadd.f32 %v1218, 1.0
    %v1220 = vrcp.pop %v1219
    %v1221 = vmul.f32 1.0, %v1220
    %v1222 = vadd.f32 %v297, %v1143
    %v1223 = vxor.u32 %v1222, 2147483648
    %v1224 = vmul.f32 %v1223, 1.442695
    %v1225 = vpow.pop %v1224
    %v1226 = vadd.f32 %v1225, 1.0
    %v1227 = vrcp.pop %v1226
    %v1228 = vmul.f32 1.0, %v1227
    %v1229 = vadd.f32 %v1212, %v162
    %v1230 = vmul.f32 %v1221, %v1229
    %v1231 = vadd.f32 %v404, %v1230
    %v1232 = vtanh.pop %v1231
    %v1233 = vsub.f32 1.0, %v1228
    %v1234 = vmul.f32 %v1233, %v1232
    %v1235 = vmul.f32 %v1228, %v1073
    %v1236 = vadd.f32 %v1234, %v1235
    %1237 = vmatprep.subr.mxu0 %v110
    %1238 = vmatpush1.msra.mxu0 %v109
    %1239 = vmatprep.subr.mxu0 %v113
    %1240 = vmatpush1.msra.mxu0 %v112
    %1241 = vmatprep.subr.mxu0 %v116
    %1242 = vmatpush1.msra.mxu0 %v115
    %1243 = vmatprep.subr.mxu0 %v119
    %1244 = vmatpush1.msra.mxu0 %v118
    %1245 = vmatprep.subr.mxu0 %v122
    %1246 = vmatpush1.msra.mxu0 %v121
    %1247 = vmatprep.subr.mxu0 %v125
    %1248 = vmatpush1.msra.mxu0 %v124
    %1249 = vmatprep.subr.mxu0 %v128
    %1250 = vmatpush1.msra.mxu0 %v127
    %1251 = vmatprep.subr.mxu0 %v131
    %1252 = vmatpush1.msra.mxu0 %v130
    %1253 = vmatprep.subr.mxu0 %v134
    %1254 = vmatpush1.msra.mxu0 %v133
    %1255 = vmatprep.subr.mxu0 %v137
    %1256 = vmatpush1.msra.mxu0 %v136
    %1257 = vmatprep.subr.mxu0 %v140
    %1258 = vmatpush1.msra.mxu0 %v139
    %1259 = vmatprep.subr.mxu0 %v143
    %1260 = vmatpush1.msra.mxu0 %v142
    %1261 = vmatprep.subr.mxu0 %v146
    %1262 = vmatpush1.msra.mxu0 %v145
    %1263 = vmatprep.subr.mxu0 %v149
    %1264 = vmatpush1.msra.mxu0 %v148
    %1265 = vmatprep.subr.mxu0 %v152
    %1266 = vmatpush1.msra.mxu0 %v151
    %1267 = vmatprep.subr.mxu0 %v155
    %1268 = vmatpush1.msra.mxu0 %v154
    %1269 = vmatprep.subr.mxu0 0.0
    %1270 = vmatpush1.msra.mxu0 0.0
    %1271 = vmatprep.subr.mxu0 0.0
    %1272 = vmatpush1.msra.mxu0 0.0
    %1273 = vmatprep.subr.mxu0 0.0
    %1274 = vmatpush1.msra.mxu0 0.0
    %1275 = vmatprep.subr.mxu0 0.0
    %1276 = vmatpush1.msra.mxu0 0.0
    %1277 = vmatprep.subr.mxu0 0.0
    %1278 = vmatpush1.msra.mxu0 0.0
    %1279 = vmatprep.subr.mxu0 0.0
    %1280 = vmatpush1.msra.mxu0 0.0
    %1281 = vmatprep.subr.mxu0 0.0
    %1282 = vmatpush1.msra.mxu0 0.0
    %1283 = vmatprep.subr.mxu0 0.0
    %1284 = vmatpush1.msra.mxu0 0.0
    %1285 = vmatprep.subr.mxu0 0.0
    %1286 = vmatpush1.msra.mxu0 0.0
    %1287 = vmatprep.subr.mxu0 0.0
    %1288 = vmatpush1.msra.mxu0 0.0
    %1289 = vmatprep.subr.mxu0 0.0
    %1290 = vmatpush1.msra.mxu0 0.0
    %1291 = vmatprep.subr.mxu0 0.0
    %1292 = vmatpush1.msra.mxu0 0.0
    %1293 = vmatprep.subr.mxu0 0.0
    %1294 = vmatpush1.msra.mxu0 0.0
    %1295 = vmatprep.subr.mxu0 0.0
    %1296 = vmatpush1.msra.mxu0 0.0
    %1297 = vmatprep.subr.mxu0 0.0
    %1298 = vmatpush1.msra.mxu0 0.0
    %1299 = vmatprep.subr.mxu0 0.0
    %1300 = vmatpush1.msra.mxu0 0.0
    %1301 = vmatprep.mubr.f32.mxu0 0.0
    %1302 = vmatmul.mubr.f32.gmra.mrb[0].mxu0 %v1236
    %v1303 = vpop.f32.mrb[0].mxu0
    %v1304 = vadd.f32 0.0, %v1303
    %v1305 = vpop.f32.mrb[0].mxu0
    %v1306 = vadd.f32 0.0, %v1305
    %1307 = vdwg.mxu0
    %1308 = vmatprep.subr.mxu0 0.0
    %1309 = vmatpush1.msra.mxu0 %v111
    %1310 = vmatprep.subr.mxu0 0.0
    %1311 = vmatpush1.msra.mxu0 %v114
    %1312 = vmatprep.subr.mxu0 0.0
    %1313 = vmatpush1.msra.mxu0 %v117
    %1314 = vmatprep.subr.mxu0 0.0
    %1315 = vmatpush1.msra.mxu0 %v120
    %1316 = vmatprep.subr.mxu0 0.0
    %1317 = vmatpush1.msra.mxu0 %v123
    %1318 = vmatprep.subr.mxu0 0.0
    %1319 = vmatpush1.msra.mxu0 %v126
    %1320 = vmatprep.subr.mxu0 0.0
    %1321 = vmatpush1.msra.mxu0 %v129
    %1322 = vmatprep.subr.mxu0 0.0
    %1323 = vmatpush1.msra.mxu0 %v132
    %1324 = vmatprep.subr.mxu0 0.0
    %1325 = vmatpush1.msra.mxu0 %v135
    %1326 = vmatprep.subr.mxu0 0.0
    %1327 = vmatpush1.msra.mxu0 %v138
    %1328 = vmatprep.subr.mxu0 0.0
    %1329 = vmatpush1.msra.mxu0 %v141
    %1330 = vmatprep.subr.mxu0 0.0
    %1331 = vmatpush1.msra.mxu0 %v144
    %1332 = vmatprep.subr.mxu0 0.0
    %1333 = vmatpush1.msra.mxu0 %v147
    %1334 = vmatprep.subr.mxu0 0.0
    %1335 = vmatpush1.msra.mxu0 %v150
    %1336 = vmatprep.subr.mxu0 0.0
    %1337 = vmatpush1.msra.mxu0 %v153
    %1338 = vmatprep.subr.mxu0 0.0
    %1339 = vmatpush1.msra.mxu0 %v156
    %1340 = vmatprep.subr.mxu0 0.0
    %1341 = vmatpush1.msra.mxu0 0.0
    %1342 = vmatprep.subr.mxu0 0.0
    %1343 = vmatpush1.msra.mxu0 0.0
    %1344 = vmatprep.subr.mxu0 0.0
    %1345 = vmatpush1.msra.mxu0 0.0
    %1346 = vmatprep.subr.mxu0 0.0
    %1347 = vmatpush1.msra.mxu0 0.0
    %1348 = vmatprep.subr.mxu0 0.0
    %1349 = vmatpush1.msra.mxu0 0.0
    %1350 = vmatprep.subr.mxu0 0.0
    %1351 = vmatpush1.msra.mxu0 0.0
    %1352 = vmatprep.subr.mxu0 0.0
    %1353 = vmatpush1.msra.mxu0 0.0
    %1354 = vmatprep.subr.mxu0 0.0
    %1355 = vmatpush1.msra.mxu0 0.0
    %1356 = vmatprep.subr.mxu0 0.0
    %1357 = vmatpush1.msra.mxu0 0.0
    %1358 = vmatprep.subr.mxu0 0.0
    %1359 = vmatpush1.msra.mxu0 0.0
    %1360 = vmatprep.subr.mxu0 0.0
    %1361 = vmatpush1.msra.mxu0 0.0
    %1362 = vmatprep.subr.mxu0 0.0
    %1363 = vmatpush1.msra.mxu0 0.0
    %1364 = vmatprep.subr.mxu0 0.0
    %1365 = vmatpush1.msra.mxu0 0.0
    %1366 = vmatprep.subr.mxu0 0.0
    %1367 = vmatpush1.msra.mxu0 0.0
    %1368 = vmatprep.subr.mxu0 0.0
    %1369 = vmatpush1.msra.mxu0 0.0
    %1370 = vmatprep.subr.mxu0 0.0
    %1371 = vmatpush1.msra.mxu0 0.0
    %1372 = vmatprep.mubr.f32.mxu0 0.0
    %1373 = vmatmul.mubr.f32.gmra.mrb[0].mxu0 %v1236
    %v1374 = vpop.f32.mrb[0].mxu0
    %v1375 = vadd.f32 0.0, %v1374
    %v1376 = vpop.f32.mrb[0].mxu0
    %1377 = vdwg.mxu0
    %v1378 = vadd.f32 %v301, %v1304
    %v1379 = vxor.u32 %v1378, 2147483648
    %v1380 = vmul.f32 %v1379, 1.442695
    %v1381 = vpow.pop %v1380
    %v1382 = vadd.f32 %v1381, 1.0
    %v1383 = vrcp.pop %v1382
    %v1384 = vmul.f32 1.0, %v1383
    %v1385 = vadd.f32 %v303, %v1306
    %v1386 = vxor.u32 %v1385, 2147483648
    %v1387 = vmul.f32 %v1386, 1.442695
    %v1388 = vpow.pop %v1387
    %v1389 = vadd.f32 %v1388, 1.0
    %v1390 = vrcp.pop %v1389
    %v1391 = vmul.f32 1.0, %v1390
    %v1392 = vadd.f32 %v1375, %v162
    %v1393 = vmul.f32 %v1384, %v1392
    %v1394 = vadd.f32 %v409, %v1393
    %v1395 = vtanh.pop %v1394
    %v1396 = vsub.f32 1.0, %v1391
    %v1397 = vmul.f32 %v1396, %v1395
    %v1398 = vmul.f32 %v1391, %v1236
    %v1399 = vadd.f32 %v1397, %v1398
    %1400 = vmatprep.subr.mxu0 %v110
    %1401 = vmatpush1.msra.mxu0 %v109
    %1402 = vmatprep.subr.mxu0 %v113
    %1403 = vmatpush1.msra.mxu0 %v112
    %1404 = vmatprep.subr.mxu0 %v116
    %1405 = vmatpush1.msra.mxu0 %v115
    %1406 = vmatprep.subr.mxu0 %v119
    %1407 = vmatpush1.msra.mxu0 %v118
    %1408 = vmatprep.subr.mxu0 %v122
    %1409 = vmatpush1.msra.mxu0 %v121
    %1410 = vmatprep.subr.mxu0 %v125
    %1411 = vmatpush1.msra.mxu0 %v124
    %1412 = vmatprep.subr.mxu0 %v128
    %1413 = vmatpush1.msra.mxu0 %v127
    %1414 = vmatprep.subr.mxu0 %v131
    %1415 = vmatpush1.msra.mxu0 %v130
    %1416 = vmatprep.subr.mxu0 %v134
    %1417 = vmatpush1.msra.mxu0 %v133
    %1418 = vmatprep.subr.mxu0 %v137
    %1419 = vmatpush1.msra.mxu0 %v136
    %1420 = vmatprep.subr.mxu0 %v140
    %1421 = vmatpush1.msra.mxu0 %v139
    %1422 = vmatprep.subr.mxu0 %v143
    %1423 = vmatpush1.msra.mxu0 %v142
    %1424 = vmatprep.subr.mxu0 %v146
    %1425 = vmatpush1.msra.mxu0 %v145
    %1426 = vmatprep.subr.mxu0 %v149
    %1427 = vmatpush1.msra.mxu0 %v148
    %1428 = vmatprep.subr.mxu0 %v152
    %1429 = vmatpush1.msra.mxu0 %v151
    %1430 = vmatprep.subr.mxu0 %v155
    %1431 = vmatpush1.msra.mxu0 %v154
    %1432 = vmatprep.subr.mxu0 0.0
    %1433 = vmatpush1.msra.mxu0 0.0
    %1434 = vmatprep.subr.mxu0 0.0
    %1435 = vmatpush1.msra.mxu0 0.0
    %1436 = vmatprep.subr.mxu0 0.0
    %1437 = vmatpush1.msra.mxu0 0.0
    %1438 = vmatprep.subr.mxu0 0.0
    %1439 = vmatpush1.msra.mxu0 0.0
    %1440 = vmatprep.subr.mxu0 0.0
    %1441 = vmatpush1.msra.mxu0 0.0
    %1442 = vmatprep.subr.mxu0 0.0
    %1443 = vmatpush1.msra.mxu0 0.0
    %1444 = vmatprep.subr.mxu0 0.0
    %1445 = vmatpush1.msra.mxu0 0.0
    %1446 = vmatprep.subr.mxu0 0.0
    %1447 = vmatpush1.msra.mxu0 0.0
    %1448 = vmatprep.subr.mxu0 0.0
    %1449 = vmatpush1.msra.mxu0 0.0
    %1450 = vmatprep.subr.mxu0 0.0
    %1451 = vmatpush1.msra.mxu0 0.0
    %1452 = vmatprep.subr.mxu0 0.0
    %1453 = vmatpush1.msra.mxu0 0.0
    %1454 = vmatprep.subr.mxu0 0.0
    %1455 = vmatpush1.msra.mxu0 0.0
    %1456 = vmatprep.subr.mxu0 0.0
    %1457 = vmatpush1.msra.mxu0 0.0
    %1458 = vmatprep.subr.mxu0 0.0
    %1459 = vmatpush1.msra.mxu0 0.0
    %1460 = vmatprep.subr.mxu0 0.0
    %1461 = vmatpush1.msra.mxu0 0.0
    %1462 = vmatprep.subr.mxu0 0.0
    %1463 = vmatpush1.msra.mxu0 0.0
    %1464 = vmatprep.mubr.f32.mxu0 0.0
    %1465 = vmatmul.mubr.f32.gmra.mrb[0].mxu0 %v1399
    %v1466 = vpop.f32.mrb[0].mxu0
    %v1467 = vadd.f32 0.0, %v1466
    %v1468 = vpop.f32.mrb[0].mxu0
    %v1469 = vadd.f32 0.0, %v1468
    %1470 = vdwg.mxu0
    %1471 = vmatprep.subr.mxu0 0.0
    %1472 = vmatpush1.msra.mxu0 %v111
    %1473 = vmatprep.subr.mxu0 0.0
    %1474 = vmatpush1.msra.mxu0 %v114
    %1475 = vmatprep.subr.mxu0 0.0
    %1476 = vmatpush1.msra.mxu0 %v117
    %1477 = vmatprep.subr.mxu0 0.0
    %1478 = vmatpush1.msra.mxu0 %v120
    %1479 = vmatprep.subr.mxu0 0.0
    %1480 = vmatpush1.msra.mxu0 %v123
    %1481 = vmatprep.subr.mxu0 0.0
    %1482 = vmatpush1.msra.mxu0 %v126
    %1483 = vmatprep.subr.mxu0 0.0
    %1484 = vmatpush1.msra.mxu0 %v129
    %1485 = vmatprep.subr.mxu0 0.0
    %1486 = vmatpush1.msra.mxu0 %v132
    %1487 = vmatprep.subr.mxu0 0.0
    %1488 = vmatpush1.msra.mxu0 %v135
    %1489 = vmatprep.subr.mxu0 0.0
    %1490 = vmatpush1.msra.mxu0 %v138
    %1491 = vmatprep.subr.mxu0 0.0
    %1492 = vmatpush1.msra.mxu0 %v141
    %1493 = vmatprep.subr.mxu0 0.0
    %1494 = vmatpush1.msra.mxu0 %v144
    %1495 = vmatprep.subr.mxu0 0.0
    %1496 = vmatpush1.msra.mxu0 %v147
    %1497 = vmatprep.subr.mxu0 0.0
    %1498 = vmatpush1.msra.mxu0 %v150
    %1499 = vmatprep.subr.mxu0 0.0
    %1500 = vmatpush1.msra.mxu0 %v153
    %1501 = vmatprep.subr.mxu0 0.0
    %1502 = vmatpush1.msra.mxu0 %v156
    %1503 = vmatprep.subr.mxu0 0.0
    %1504 = vmatpush1.msra.mxu0 0.0
    %1505 = vmatprep.subr.mxu0 0.0
    %1506 = vmatpush1.msra.mxu0 0.0
    %1507 = vmatprep.subr.mxu0 0.0
    %1508 = vmatpush1.msra.mxu0 0.0
    %1509 = vmatprep.subr.mxu0 0.0
    %1510 = vmatpush1.msra.mxu0 0.0
    %1511 = vmatprep.subr.mxu0 0.0
    %1512 = vmatpush1.msra.mxu0 0.0
    %1513 = vmatprep.subr.mxu0 0.0
    %1514 = vmatpush1.msra.mxu0 0.0
    %1515 = vmatprep.subr.mxu0 0.0
    %1516 = vmatpush1.msra.mxu0 0.0
    %1517 = vmatprep.subr.mxu0 0.0
    %1518 = vmatpush1.msra.mxu0 0.0
    %1519 = vmatprep.subr.mxu0 0.0
    %1520 = vmatpush1.msra.mxu0 0.0
    %1521 = vmatprep.subr.mxu0 0.0
    %1522 = vmatpush1.msra.mxu0 0.0
    %1523 = vmatprep.subr.mxu0 0.0
    %1524 = vmatpush1.msra.mxu0 0.0
    %1525 = vmatprep.subr.mxu0 0.0
    %1526 = vmatpush1.msra.mxu0 0.0
    %1527 = vmatprep.subr.mxu0 0.0
    %1528 = vmatpush1.msra.mxu0 0.0
    %1529 = vmatprep.subr.mxu0 0.0
    %1530 = vmatpush1.msra.mxu0 0.0
    %1531 = vmatprep.subr.mxu0 0.0
    %1532 = vmatpush1.msra.mxu0 0.0
    %1533 = vmatprep.subr.mxu0 0.0
    %1534 = vmatpush1.msra.mxu0 0.0
    %1535 = vmatprep.mubr.f32.mxu0 0.0
    %1536 = vmatmul.mubr.f32.gmra.mrb[0].mxu0 %v1399
    %v1537 = vpop.f32.mrb[0].mxu0
    %v1538 = vadd.f32 0.0, %v1537
    %v1539 = vpop.f32.mrb[0].mxu0
    %1540 = vdwg.mxu0
    %v1541 = vadd.f32 %v307, %v1467
    %v1542 = vxor.u32 %v1541, 2147483648
    %v1543 = vmul.f32 %v1542, 1.442695
    %v1544 = vpow.pop %v1543
    %v1545 = vadd.f32 %v1544, 1.0
    %v1546 = vrcp.pop %v1545
    %v1547 = vmul.f32 1.0, %v1546
    %v1548 = vadd.f32 %v309, %v1469
    %v1549 = vxor.u32 %v1548, 2147483648
    %v1550 = vmul.f32 %v1549, 1.442695
    %v1551 = vpow.pop %v1550
    %v1552 = vadd.f32 %v1551, 1.0
    %v1553 = vrcp.pop %v1552
    %v1554 = vmul.f32 1.0, %v1553
    %v1555 = vadd.f32 %v1538, %v162
    %v1556 = vmul.f32 %v1547, %v1555
    %v1557 = vadd.f32 %v414, %v1556
    %v1558 = vtanh.pop %v1557
    %v1559 = vsub.f32 1.0, %v1554
    %v1560 = vmul.f32 %v1559, %v1558
    %v1561 = vmul.f32 %v1554, %v1399
    %v1562 = vadd.f32 %v1560, %v1561
    %1563 = vmatprep.subr.mxu0 %v110
    %1564 = vmatpush1.msra.mxu0 %v109
    %1565 = vmatprep.subr.mxu0 %v113
    %1566 = vmatpush1.msra.mxu0 %v112
    %1567 = vmatprep.subr.mxu0 %v116
    %1568 = vmatpush1.msra.mxu0 %v115
    %1569 = vmatprep.subr.mxu0 %v119
    %1570 = vmatpush1.msra.mxu0 %v118
    %1571 = vmatprep.subr.mxu0 %v122
    %1572 = vmatpush1.msra.mxu0 %v121
    %1573 = vmatprep.subr.mxu0 %v125
    %1574 = vmatpush1.msra.mxu0 %v124
    %1575 = vmatprep.subr.mxu0 %v128
    %1576 = vmatpush1.msra.mxu0 %v127
    %1577 = vmatprep.subr.mxu0 %v131
    %1578 = vmatpush1.msra.mxu0 %v130
    %1579 = vmatprep.subr.mxu0 %v134
    %1580 = vmatpush1.msra.mxu0 %v133
    %1581 = vmatprep.subr.mxu0 %v137
    %1582 = vmatpush1.msra.mxu0 %v136
    %1583 = vmatprep.subr.mxu0 %v140
    %1584 = vmatpush1.msra.mxu0 %v139
    %1585 = vmatprep.subr.mxu0 %v143
    %1586 = vmatpush1.msra.mxu0 %v142
    %1587 = vmatprep.subr.mxu0 %v146
    %1588 = vmatpush1.msra.mxu0 %v145
    %1589 = vmatprep.subr.mxu0 %v149
    %1590 = vmatpush1.msra.mxu0 %v148
    %1591 = vmatprep.subr.mxu0 %v152
    %1592 = vmatpush1.msra.mxu0 %v151
    %1593 = vmatprep.subr.mxu0 %v155
    %1594 = vmatpush1.msra.mxu0 %v154
    %1595 = vmatprep.subr.mxu0 0.0
    %1596 = vmatpush1.msra.mxu0 0.0
    %1597 = vmatprep.subr.mxu0 0.0
    %1598 = vmatpush1.msra.mxu0 0.0
    %1599 = vmatprep.subr.mxu0 0.0
    %1600 = vmatpush1.msra.mxu0 0.0
    %1601 = vmatprep.subr.mxu0 0.0
    %1602 = vmatpush1.msra.mxu0 0.0
    %1603 = vmatprep.subr.mxu0 0.0
    %1604 = vmatpush1.msra.mxu0 0.0
    %1605 = vmatprep.subr.mxu0 0.0
    %1606 = vmatpush1.msra.mxu0 0.0
    %1607 = vmatprep.subr.mxu0 0.0
    %1608 = vmatpush1.msra.mxu0 0.0
    %1609 = vmatprep.subr.mxu0 0.0
    %1610 = vmatpush1.msra.mxu0 0.0
    %1611 = vmatprep.subr.mxu0 0.0
    %1612 = vmatpush1.msra.mxu0 0.0
    %1613 = vmatprep.subr.mxu0 0.0
    %1614 = vmatpush1.msra.mxu0 0.0
    %1615 = vmatprep.subr.mxu0 0.0
    %1616 = vmatpush1.msra.mxu0 0.0
    %1617 = vmatprep.subr.mxu0 0.0
    %1618 = vmatpush1.msra.mxu0 0.0
    %1619 = vmatprep.subr.mxu0 0.0
    %1620 = vmatpush1.msra.mxu0 0.0
    %1621 = vmatprep.subr.mxu0 0.0
    %1622 = vmatpush1.msra.mxu0 0.0
    %1623 = vmatprep.subr.mxu0 0.0
    %1624 = vmatpush1.msra.mxu0 0.0
    %1625 = vmatprep.subr.mxu0 0.0
    %1626 = vmatpush1.msra.mxu0 0.0
    %1627 = vmatprep.mubr.f32.mxu0 0.0
    %1628 = vmatmul.mubr.f32.gmra.mrb[0].mxu0 %v1562
    %v1629 = vpop.f32.mrb[0].mxu0
    %v1630 = vadd.f32 0.0, %v1629
    %v1631 = vpop.f32.mrb[0].mxu0
    %v1632 = vadd.f32 0.0, %v1631
    %1633 = vdwg.mxu0
    %1634 = vmatprep.subr.mxu0 0.0
    %1635 = vmatpush1.msra.mxu0 %v111
    %1636 = vmatprep.subr.mxu0 0.0
    %1637 = vmatpush1.msra.mxu0 %v114
    %1638 = vmatprep.subr.mxu0 0.0
    %1639 = vmatpush1.msra.mxu0 %v117
    %1640 = vmatprep.subr.mxu0 0.0
    %1641 = vmatpush1.msra.mxu0 %v120
    %1642 = vmatprep.subr.mxu0 0.0
    %1643 = vmatpush1.msra.mxu0 %v123
    %1644 = vmatprep.subr.mxu0 0.0
    %1645 = vmatpush1.msra.mxu0 %v126
    %1646 = vmatprep.subr.mxu0 0.0
    %1647 = vmatpush1.msra.mxu0 %v129
    %1648 = vmatprep.subr.mxu0 0.0
    %1649 = vmatpush1.msra.mxu0 %v132
    %1650 = vmatprep.subr.mxu0 0.0
    %1651 = vmatpush1.msra.mxu0 %v135
    %1652 = vmatprep.subr.mxu0 0.0
    %1653 = vmatpush1.msra.mxu0 %v138
    %1654 = vmatprep.subr.mxu0 0.0
    %1655 = vmatpush1.msra.mxu0 %v141
    %1656 = vmatprep.subr.mxu0 0.0
    %1657 = vmatpush1.msra.mxu0 %v144
    %1658 = vmatprep.subr.mxu0 0.0
    %1659 = vmatpush1.msra.mxu0 %v147
    %1660 = vmatprep.subr.mxu0 0.0
    %1661 = vmatpush1.msra.mxu0 %v150
    %1662 = vmatprep.subr.mxu0 0.0
    %1663 = vmatpush1.msra.mxu0 %v153
    %1664 = vmatprep.subr.mxu0 0.0
    %1665 = vmatpush1.msra.mxu0 %v156
    %1666 = vmatprep.subr.mxu0 0.0
    %1667 = vmatpush1.msra.mxu0 0.0
    %1668 = vmatprep.subr.mxu0 0.0
    %1669 = vmatpush1.msra.mxu0 0.0
    %1670 = vmatprep.subr.mxu0 0.0
    %1671 = vmatpush1.msra.mxu0 0.0
    %1672 = vmatprep.subr.mxu0 0.0
    %1673 = vmatpush1.msra.mxu0 0.0
    %1674 = vmatprep.subr.mxu0 0.0
    %1675 = vmatpush1.msra.mxu0 0.0
    %1676 = vmatprep.subr.mxu0 0.0
    %1677 = vmatpush1.msra.mxu0 0.0
    %1678 = vmatprep.subr.mxu0 0.0
    %1679 = vmatpush1.msra.mxu0 0.0
    %1680 = vmatprep.subr.mxu0 0.0
    %1681 = vmatpush1.msra.mxu0 0.0
    %1682 = vmatprep.subr.mxu0 0.0
    %1683 = vmatpush1.msra.mxu0 0.0
    %1684 = vmatprep.subr.mxu0 0.0
    %1685 = vmatpush1.msra.mxu0 0.0
    %1686 = vmatprep.subr.mxu0 0.0
    %1687 = vmatpush1.msra.mxu0 0.0
    %1688 = vmatprep.subr.mxu0 0.0
    %1689 = vmatpush1.msra.mxu0 0.0
    %1690 = vmatprep.subr.mxu0 0.0
    %1691 = vmatpush1.msra.mxu0 0.0
    %1692 = vmatprep.subr.mxu0 0.0
    %1693 = vmatpush1.msra.mxu0 0.0
    %1694 = vmatprep.subr.mxu0 0.0
    %1695 = vmatpush1.msra.mxu0 0.0
    %1696 = vmatprep.subr.mxu0 0.0
    %1697 = vmatpush1.msra.mxu0 0.0
    %1698 = vmatprep.mubr.f32.mxu0 0.0
    %1699 = vmatmul.mubr.f32.gmra.mrb[0].mxu0 %v1562
    %v1700 = vpop.f32.mrb[0].mxu0
    %v1701 = vadd.f32 0.0, %v1700
    %v1702 = vpop.f32.mrb[0].mxu0
    %1703 = vdwg.mxu0
    %v1704 = vadd.f32 %v313, %v1630
    %v1705 = vxor.u32 %v1704, 2147483648
    %v1706 = vmul.f32 %v1705, 1.442695
    %v1707 = vpow.pop %v1706
    %v1708 = vadd.f32 %v1707, 1.0
    %v1709 = vrcp.pop %v1708
    %v1710 = vmul.f32 1.0, %v1709
    %v1711 = vadd.f32 %v315, %v1632
    %v1712 = vxor.u32 %v1711, 2147483648
    %v1713 = vmul.f32 %v1712, 1.442695
    %v1714 = vpow.pop %v1713
    %v1715 = vadd.f32 %v1714, 1.0
    %v1716 = vrcp.pop %v1715
    %v1717 = vmul.f32 1.0, %v1716
    %v1718 = vadd.f32 %v1701, %v162
    %v1719 = vmul.f32 %v1710, %v1718
    %v1720 = vadd.f32 %v419, %v1719
    %v1721 = vtanh.pop %v1720
    %v1722 = vsub.f32 1.0, %v1717
    %v1723 = vmul.f32 %v1722, %v1721
    %v1724 = vmul.f32 %v1717, %v1562
    %v1725 = vadd.f32 %v1723, %v1724
    %v1726 = vld [vmem:[#allocation8] sm:$0xff]
    %v1727 = vld [vmem:[#allocation8 + $0x8] sm:$0xff]
    %v1728 = vld [vmem:[#allocation8 + $0x10] sm:$0xff]
    %v1729 = vld [vmem:[#allocation8 + $0x18] sm:$0xff]
    %v1730 = vld [vmem:[#allocation8 + $0x20] sm:$0xff]
    %v1731 = vld [vmem:[#allocation8 + $0x28] sm:$0xff]
    %v1732 = vld [vmem:[#allocation8 + $0x30] sm:$0xff]
    %v1733 = vld [vmem:[#allocation8 + $0x38] sm:$0xff]
    %v1734 = vld [vmem:[#allocation8 + $0x40] sm:$0xff]
    %v1735 = vld [vmem:[#allocation8 + $0x48] sm:$0xff]
    %v1736 = vld [vmem:[#allocation8 + $0x50] sm:$0xff]
    %v1737 = vld [vmem:[#allocation8 + $0x58] sm:$0xff]
    %v1738 = vld [vmem:[#allocation8 + $0x60] sm:$0xff]
    %v1739 = vld [vmem:[#allocation8 + $0x68] sm:$0xff]
    %v1740 = vld [vmem:[#allocation8 + $0x70] sm:$0xff]
    %v1741 = vld [vmem:[#allocation8 + $0x78] sm:$0xff]
    %v1742 = vld [vmem:[#allocation8 + $0x80] sm:$0xff]
    %v1743 = vld [vmem:[#allocation8 + $0x88] sm:$0xff]
    %v1744 = vld [vmem:[#allocation8 + $0x90] sm:$0xff]
    %v1745 = vld [vmem:[#allocation8 + $0x98] sm:$0xff]
    %v1746 = vld [vmem:[#allocation8 + $0xa0] sm:$0xff]
    %v1747 = vld [vmem:[#allocation8 + $0xa8] sm:$0xff]
    %v1748 = vld [vmem:[#allocation8 + $0xb0] sm:$0xff]
    %v1749 = vld [vmem:[#allocation8 + $0xb8] sm:$0xff]
    %v1750 = vld [vmem:[#allocation8 + $0xc0] sm:$0xff]
    %v1751 = vld [vmem:[#allocation8 + $0xc8] sm:$0xff]
    %v1752 = vld [vmem:[#allocation8 + $0xd0] sm:$0xff]
    %v1753 = vld [vmem:[#allocation8 + $0xd8] sm:$0xff]
    %v1754 = vld [vmem:[#allocation8 + $0xe0] sm:$0xff]
    %v1755 = vld [vmem:[#allocation8 + $0xe8] sm:$0xff]
    %v1756 = vld [vmem:[#allocation8 + $0xf0] sm:$0xff]
    %v1757 = vld [vmem:[#allocation8 + $0xf8] sm:$0xff]
    %v1758 = vld [vmem:[#allocation8 + $0x100] sm:$0xff]
    %v1759 = vld [vmem:[#allocation8 + $0x108] sm:$0xff]
    %v1760 = vld [vmem:[#allocation8 + $0x110] sm:$0xff]
    %v1761 = vld [vmem:[#allocation8 + $0x118] sm:$0xff]
    %v1762 = vld [vmem:[#allocation8 + $0x120] sm:$0xff]
    %v1763 = vld [vmem:[#allocation8 + $0x128] sm:$0xff]
    %v1764 = vld [vmem:[#allocation8 + $0x130] sm:$0xff]
    %v1765 = vld [vmem:[#allocation8 + $0x138] sm:$0xff]
    %v1766 = vld [vmem:[#allocation8 + $0x140] sm:$0xff]
    %v1767 = vld [vmem:[#allocation8 + $0x148] sm:$0xff]
    %v1768 = vld [vmem:[#allocation8 + $0x150] sm:$0xff]
    %v1769 = vld [vmem:[#allocation8 + $0x158] sm:$0xff]
    %v1770 = vld [vmem:[#allocation8 + $0x160] sm:$0xff]
    %v1771 = vld [vmem:[#allocation8 + $0x168] sm:$0xff]
    %v1772 = vld [vmem:[#allocation8 + $0x170] sm:$0xff]
    %v1773 = vld [vmem:[#allocation8 + $0x178] sm:$0xff]
    %v1774 = vld [vmem:[#allocation10] sm:$0xff]
    %v1775 = vld [vmem:[#allocation10 + $0x8] sm:$0xff]
    %v1776 = vld [vmem:[#allocation10 + $0x10] sm:$0xff]
    %v1777 = vld [vmem:[#allocation10 + $0x18] sm:$0xff]
    %v1778 = vld [vmem:[#allocation10 + $0x20] sm:$0xff]
    %v1779 = vld [vmem:[#allocation10 + $0x28] sm:$0xff]
    %v1780 = vld [vmem:[#allocation10 + $0x30] sm:$0xff]
    %v1781 = vld [vmem:[#allocation10 + $0x38] sm:$0xff]
    %v1782 = vld [vmem:[#allocation10 + $0x40] sm:$0xff]
    %v1783 = vld [vmem:[#allocation10 + $0x48] sm:$0xff]
    %v1784 = vld [vmem:[#allocation10 + $0x50] sm:$0xff]
    %v1785 = vld [vmem:[#allocation10 + $0x58] sm:$0xff]
    %v1786 = vld [vmem:[#allocation10 + $0x60] sm:$0xff]
    %v1787 = vld [vmem:[#allocation10 + $0x68] sm:$0xff]
    %v1788 = vld [vmem:[#allocation10 + $0x70] sm:$0xff]
    %v1789 = vld [vmem:[#allocation10 + $0x78] sm:$0xff]
    %v1790 = vld [vmem:[#allocation10 + $0x80] sm:$0xff]
    %v1791 = vld [vmem:[#allocation10 + $0x88] sm:$0xff]
    %v1792 = vld [vmem:[#allocation10 + $0x90] sm:$0xff]
    %v1793 = vld [vmem:[#allocation10 + $0x98] sm:$0xff]
    %v1794 = vld [vmem:[#allocation10 + $0xa0] sm:$0xff]
    %v1795 = vld [vmem:[#allocation10 + $0xa8] sm:$0xff]
    %v1796 = vld [vmem:[#allocation10 + $0xb0] sm:$0xff]
    %v1797 = vld [vmem:[#allocation10 + $0xb8] sm:$0xff]
    %v1798 = vld [vmem:[#allocation10 + $0xc0] sm:$0xff]
    %v1799 = vld [vmem:[#allocation10 + $0xc8] sm:$0xff]
    %v1800 = vld [vmem:[#allocation10 + $0xd0] sm:$0xff]
    %v1801 = vld [vmem:[#allocation10 + $0xd8] sm:$0xff]
    %v1802 = vld [vmem:[#allocation10 + $0xe0] sm:$0xff]
    %v1803 = vld [vmem:[#allocation10 + $0xe8] sm:$0xff]
    %v1804 = vld [vmem:[#allocation10 + $0xf0] sm:$0xff]
    %v1805 = vld [vmem:[#allocation10 + $0xf8] sm:$0xff]
    %v1806 = vld [vmem:[#allocation10 + $0x100] sm:$0xff]
    %v1807 = vld [vmem:[#allocation10 + $0x108] sm:$0xff]
    %v1808 = vld [vmem:[#allocation10 + $0x110] sm:$0xff]
    %v1809 = vld [vmem:[#allocation10 + $0x118] sm:$0xff]
    %v1810 = vld [vmem:[#allocation10 + $0x120] sm:$0xff]
    %v1811 = vld [vmem:[#allocation10 + $0x128] sm:$0xff]
    %v1812 = vld [vmem:[#allocation10 + $0x130] sm:$0xff]
    %v1813 = vld [vmem:[#allocation10 + $0x138] sm:$0xff]
    %v1814 = vld [vmem:[#allocation10 + $0x140] sm:$0xff]
    %v1815 = vld [vmem:[#allocation10 + $0x148] sm:$0xff]
    %v1816 = vld [vmem:[#allocation10 + $0x150] sm:$0xff]
    %v1817 = vld [vmem:[#allocation10 + $0x158] sm:$0xff]
    %v1818 = vld [vmem:[#allocation10 + $0x160] sm:$0xff]
    %v1819 = vld [vmem:[#allocation10 + $0x168] sm:$0xff]
    %v1820 = vld [vmem:[#allocation10 + $0x170] sm:$0xff]
    %v1821 = vld [vmem:[#allocation10 + $0x178] sm:$0xff]
    %v1822 = vld [vmem:[%s6] ss:$2 sm:$0x7]
    %v1823 = vld [vmem:[%s6 + $0x1] sm:$0x1]
    %v1824 = vlaneseq
    %v1825 = vshrl.u32 %v1824, 7
    %v1826 = vsub.s32 0, %v1825
    %v1827 = vrot.slane %v1823, %v1826
    %v1829 = vlaneseq
    %v1830 = vshrl.u32 %v1829, 7
    %v1831 = vsub.s32 0, %v1830
    %v1832 = vrot.slane %v1822, %v1831
    %v1833 = vlaneseq
    %v1834 = vshrl.u32 %v1833, 7
    %v1835 = vsub.s32 1, %v1834
    %v1836 = vrot.slane %v1822, %v1835
    %v1837 = vlaneseq
    %v1838 = vshrl.u32 %v1837, 7
    %v1839 = vsub.s32 2, %v1838
    %v1840 = vrot.slane %v1822, %v1839
    %1844 = vmatprep.subr.mxu0 %v1727
    %1845 = vmatpush1.msra.mxu0 %v1726
    %1846 = vmatprep.subr.mxu0 %v1730
    %1847 = vmatpush1.msra.mxu0 %v1729
    %1848 = vmatprep.subr.mxu0 %v1733
    %1849 = vmatpush1.msra.mxu0 %v1732
    %1850 = vmatprep.subr.mxu0 %v1736
    %1851 = vmatpush1.msra.mxu0 %v1735
    %1852 = vmatprep.subr.mxu0 %v1739
    %1853 = vmatpush1.msra.mxu0 %v1738
    %1854 = vmatprep.subr.mxu0 %v1742
    %1855 = vmatpush1.msra.mxu0 %v1741
    %1856 = vmatprep.subr.mxu0 %v1745
    %1857 = vmatpush1.msra.mxu0 %v1744
    %1858 = vmatprep.subr.mxu0 %v1748
    %1859 = vmatpush1.msra.mxu0 %v1747
    %1860 = vmatprep.subr.mxu0 %v1751
    %1861 = vmatpush1.msra.mxu0 %v1750
    %1862 = vmatprep.subr.mxu0 %v1754
    %1863 = vmatpush1.msra.mxu0 %v1753
    %1864 = vmatprep.subr.mxu0 %v1757
    %1865 = vmatpush1.msra.mxu0 %v1756
    %1866 = vmatprep.subr.mxu0 %v1760
    %1867 = vmatpush1.msra.mxu0 %v1759
    %1868 = vmatprep.subr.mxu0 %v1763
    %1869 = vmatpush1.msra.mxu0 %v1762
    %1870 = vmatprep.subr.mxu0 %v1766
    %1871 = vmatpush1.msra.mxu0 %v1765
    %1872 = vmatprep.subr.mxu0 %v1769
    %1873 = vmatpush1.msra.mxu0 %v1768
    %1874 = vmatprep.subr.mxu0 %v1772
    %1875 = vmatpush1.msra.mxu0 %v1771
    %1876 = vmatprep.subr.mxu0 0.0
    %1877 = vmatpush1.msra.mxu0 0.0
    %1878 = vmatprep.subr.mxu0 0.0
    %1879 = vmatpush1.msra.mxu0 0.0
    %1880 = vmatprep.subr.mxu0 0.0
    %1881 = vmatpush1.msra.mxu0 0.0
    %1882 = vmatprep.subr.mxu0 0.0
    %1883 = vmatpush1.msra.mxu0 0.0
    %1884 = vmatprep.subr.mxu0 0.0
    %1885 = vmatpush1.msra.mxu0 0.0
    %1886 = vmatprep.subr.mxu0 0.0
    %1887 = vmatpush1.msra.mxu0 0.0
    %1888 = vmatprep.subr.mxu0 0.0
    %1889 = vmatpush1.msra.mxu0 0.0
    %1890 = vmatprep.subr.mxu0 0.0
    %1891 = vmatpush1.msra.mxu0 0.0
    %1892 = vmatprep.subr.mxu0 0.0
    %1893 = vmatpush1.msra.mxu0 0.0
    %1894 = vmatprep.subr.mxu0 0.0
    %1895 = vmatpush1.msra.mxu0 0.0
    %1896 = vmatprep.subr.mxu0 0.0
    %1897 = vmatpush1.msra.mxu0 0.0
    %1898 = vmatprep.subr.mxu0 0.0
    %1899 = vmatpush1.msra.mxu0 0.0
    %1900 = vmatprep.subr.mxu0 0.0
    %1901 = vmatpush1.msra.mxu0 0.0
    %1902 = vmatprep.subr.mxu0 0.0
    %1903 = vmatpush1.msra.mxu0 0.0
    %1904 = vmatprep.subr.mxu0 0.0
    %1905 = vmatpush1.msra.mxu0 0.0
    %1906 = vmatprep.subr.mxu0 0.0
    %1907 = vmatpush1.msra.mxu0 0.0
    %1908 = vmatprep.mubr.f32.mxu0 0.0
    %1909 = vmatmul.mubr.f32.gmra.mrb[0].mxu0 %v584
    %v1910 = vpop.f32.mrb[0].mxu0
    %v1911 = vadd.f32 %v1832, %v1910
    %v1912 = vpop.f32.mrb[0].mxu0
    %v1913 = vadd.f32 %v1836, %v1912
    %1914 = vmatprep.mubr.f32.mxu0 0.0
    %1915 = vmatmul.mubr.f32.gmra.mrb[0].mxu0 %v747
    %v1916 = vpop.f32.mrb[0].mxu0
    %v1917 = vadd.f32 %v1832, %v1916
    %v1918 = vpop.f32.mrb[0].mxu0
    %v1919 = vadd.f32 %v1836, %v1918
    %1920 = vmatprep.mubr.f32.mxu0 0.0
    %1921 = vmatmul.mubr.f32.gmra.mrb[0].mxu0 %v910
    %v1922 = vpop.f32.mrb[0].mxu0
    %v1923 = vadd.f32 %v1832, %v1922
    %v1924 = vpop.f32.mrb[0].mxu0
    %v1925 = vadd.f32 %v1836, %v1924
    %1926 = vmatprep.mubr.f32.mxu0 0.0
    %1927 = vmatmul.mubr.f32.gmra.mrb[0].mxu0 %v1073
    %v1928 = vpop.f32.mrb[0].mxu0
    %v1929 = vadd.f32 %v1832, %v1928
    %v1930 = vpop.f32.mrb[0].mxu0
    %v1931 = vadd.f32 %v1836, %v1930
    %1932 = vmatprep.mubr.f32.mxu0 0.0
    %1933 = vmatmul.mubr.f32.gmra.mrb[0].mxu0 %v1236
    %v1934 = vpop.f32.mrb[0].mxu0
    %v1935 = vadd.f32 %v1832, %v1934
    %v1936 = vpop.f32.mrb[0].mxu0
    %v1937 = vadd.f32 %v1836, %v1936
    %1938 = vmatprep.mubr.f32.mxu0 0.0
    %1939 = vmatmul.mubr.f32.gmra.mrb[0].mxu0 %v1399
    %v1940 = vpop.f32.mrb[0].mxu0
    %v1941 = vadd.f32 %v1832, %v1940
    %v1942 = vpop.f32.mrb[0].mxu0
    %v1943 = vadd.f32 %v1836, %v1942
    %1944 = vmatprep.mubr.f32.mxu0 0.0
    %1945 = vmatmul.mubr.f32.gmra.mrb[0].mxu0 %v1562
    %v1946 = vpop.f32.mrb[0].mxu0
    %v1947 = vadd.f32 %v1832, %v1946
    %v1948 = vpop.f32.mrb[0].mxu0
    %v1949 = vadd.f32 %v1836, %v1948
    %1950 = vmatprep.mubr.f32.mxu0 0.0
    %1951 = vmatmul.mubr.f32.gmra.mrb[0].mxu0 %v1725
    %v1952 = vpop.f32.mrb[0].mxu0
    %v1953 = vadd.f32 %v1832, %v1952
    %v1954 = vpop.f32.mrb[0].mxu0
    %v1955 = vadd.f32 %v1836, %v1954
    %1956 = vdwg.mxu0
    %1957 = vmatprep.subr.mxu0 0.0
    %1958 = vmatpush1.msra.mxu0 %v1728
    %1959 = vmatprep.subr.mxu0 0.0
    %1960 = vmatpush1.msra.mxu0 %v1731
    %1961 = vmatprep.subr.mxu0 0.0
    %1962 = vmatpush1.msra.mxu0 %v1734
    %1963 = vmatprep.subr.mxu0 0.0
    %1964 = vmatpush1.msra.mxu0 %v1737
    %1965 = vmatprep.subr.mxu0 0.0
    %1966 = vmatpush1.msra.mxu0 %v1740
    %1967 = vmatprep.subr.mxu0 0.0
    %1968 = vmatpush1.msra.mxu0 %v1743
    %1969 = vmatprep.subr.mxu0 0.0
    %1970 = vmatpush1.msra.mxu0 %v1746
    %1971 = vmatprep.subr.mxu0 0.0
    %1972 = vmatpush1.msra.mxu0 %v1749
    %1973 = vmatprep.subr.mxu0 0.0
    %1974 = vmatpush1.msra.mxu0 %v1752
    %1975 = vmatprep.subr.mxu0 0.0
    %1976 = vmatpush1.msra.mxu0 %v1755
    %1977 = vmatprep.subr.mxu0 0.0
    %1978 = vmatpush1.msra.mxu0 %v1758
    %1979 = vmatprep.subr.mxu0 0.0
    %1980 = vmatpush1.msra.mxu0 %v1761
    %1981 = vmatprep.subr.mxu0 0.0
    %1982 = vmatpush1.msra.mxu0 %v1764
    %1983 = vmatprep.subr.mxu0 0.0
    %1984 = vmatpush1.msra.mxu0 %v1767
    %1985 = vmatprep.subr.mxu0 0.0
    %1986 = vmatpush1.msra.mxu0 %v1770
    %1987 = vmatprep.subr.mxu0 0.0
    %1988 = vmatpush1.msra.mxu0 %v1773
    %1989 = vmatprep.subr.mxu0 0.0
    %1990 = vmatpush1.msra.mxu0 0.0
    %1991 = vmatprep.subr.mxu0 0.0
    %1992 = vmatpush1.msra.mxu0 0.0
    %1993 = vmatprep.subr.mxu0 0.0
    %1994 = vmatpush1.msra.mxu0 0.0
    %1995 = vmatprep.subr.mxu0 0.0
    %1996 = vmatpush1.msra.mxu0 0.0
    %1997 = vmatprep.subr.mxu0 0.0
    %1998 = vmatpush1.msra.mxu0 0.0
    %1999 = vmatprep.subr.mxu0 0.0
    %2000 = vmatpush1.msra.mxu0 0.0
    %2001 = vmatprep.subr.mxu0 0.0
    %2002 = vmatpush1.msra.mxu0 0.0
    %2003 = vmatprep.subr.mxu0 0.0
    %2004 = vmatpush1.msra.mxu0 0.0
    %2005 = vmatprep.subr.mxu0 0.0
    %2006 = vmatpush1.msra.mxu0 0.0
    %2007 = vmatprep.subr.mxu0 0.0
    %2008 = vmatpush1.msra.mxu0 0.0
    %2009 = vmatprep.subr.mxu0 0.0
    %2010 = vmatpush1.msra.mxu0 0.0
    %2011 = vmatprep.subr.mxu0 0.0
    %2012 = vmatpush1.msra.mxu0 0.0
    %2013 = vmatprep.subr.mxu0 0.0
    %2014 = vmatpush1.msra.mxu0 0.0
    %2015 = vmatprep.subr.mxu0 0.0
    %2016 = vmatpush1.msra.mxu0 0.0
    %2017 = vmatprep.subr.mxu0 0.0
    %2018 = vmatpush1.msra.mxu0 0.0
    %2019 = vmatprep.subr.mxu0 0.0
    %2020 = vmatpush1.msra.mxu0 0.0
    %2021 = vmatprep.mubr.f32.mxu0 0.0
    %2022 = vmatmul.mubr.f32.gmra.mrb[0].mxu0 %v584
    %v2023 = vpop.f32.mrb[0].mxu0
    %v2024 = vadd.f32 %v1840, %v2023
    %v2025 = vpop.f32.mrb[0].mxu0
    %2026 = vmatprep.mubr.f32.mxu0 0.0
    %2027 = vmatmul.mubr.f32.gmra.mrb[0].mxu0 %v747
    %v2028 = vpop.f32.mrb[0].mxu0
    %v2029 = vadd.f32 %v1840, %v2028
    %v2030 = vpop.f32.mrb[0].mxu0
    %2031 = vmatprep.mubr.f32.mxu0 0.0
    %2032 = vmatmul.mubr.f32.gmra.mrb[0].mxu0 %v910
    %v2033 = vpop.f32.mrb[0].mxu0
    %v2034 = vadd.f32 %v1840, %v2033
    %v2035 = vpop.f32.mrb[0].mxu0
    %2036 = vmatprep.mubr.f32.mxu0 0.0
    %2037 = vmatmul.mubr.f32.gmra.mrb[0].mxu0 %v1073
    %v2038 = vpop.f32.mrb[0].mxu0
    %v2039 = vadd.f32 %v1840, %v2038
    %v2040 = vpop.f32.mrb[0].mxu0
    %2041 = vmatprep.mubr.f32.mxu0 0.0
    %2042 = vmatmul.mubr.f32.gmra.mrb[0].mxu0 %v1236
    %v2043 = vpop.f32.mrb[0].mxu0
    %v2044 = vadd.f32 %v1840, %v2043
    %v2045 = vpop.f32.mrb[0].mxu0
    %2046 = vmatprep.mubr.f32.mxu0 0.0
    %2047 = vmatmul.mubr.f32.gmra.mrb[0].mxu0 %v1399
    %v2048 = vpop.f32.mrb[0].mxu0
    %v2049 = vadd.f32 %v1840, %v2048
    %v2050 = vpop.f32.mrb[0].mxu0
    %2051 = vmatprep.mubr.f32.mxu0 0.0
    %2052 = vmatmul.mubr.f32.gmra.mrb[0].mxu0 %v1562
    %v2053 = vpop.f32.mrb[0].mxu0
    %v2054 = vadd.f32 %v1840, %v2053
    %v2055 = vpop.f32.mrb[0].mxu0
    %2056 = vmatprep.mubr.f32.mxu0 0.0
    %2057 = vmatmul.mubr.f32.gmra.mrb[0].mxu0 %v1725
    %v2058 = vpop.f32.mrb[0].mxu0
    %v2059 = vadd.f32 %v1840, %v2058
    %v2060 = vpop.f32.mrb[0].mxu0
    %2061 = vdwg.mxu0
    %2062 = vmatprep.subr.mxu0 %v1775
    %2063 = vmatpush1.msra.mxu0 %v1774
    %2064 = vmatprep.subr.mxu0 %v1778
    %2065 = vmatpush1.msra.mxu0 %v1777
    %2066 = vmatprep.subr.mxu0 %v1781
    %2067 = vmatpush1.msra.mxu0 %v1780
    %2068 = vmatprep.subr.mxu0 %v1784
    %2069 = vmatpush1.msra.mxu0 %v1783
    %2070 = vmatprep.subr.mxu0 %v1787
    %2071 = vmatpush1.msra.mxu0 %v1786
    %2072 = vmatprep.subr.mxu0 %v1790
    %2073 = vmatpush1.msra.mxu0 %v1789
    %2074 = vmatprep.subr.mxu0 %v1793
    %2075 = vmatpush1.msra.mxu0 %v1792
    %2076 = vmatprep.subr.mxu0 %v1796
    %2077 = vmatpush1.msra.mxu0 %v1795
    %2078 = vmatprep.subr.mxu0 %v1799
    %2079 = vmatpush1.msra.mxu0 %v1798
    %2080 = vmatprep.subr.mxu0 %v1802
    %2081 = vmatpush1.msra.mxu0 %v1801
    %2082 = vmatprep.subr.mxu0 %v1805
    %2083 = vmatpush1.msra.mxu0 %v1804
    %2084 = vmatprep.subr.mxu0 %v1808
    %2085 = vmatpush1.msra.mxu0 %v1807
    %2086 = vmatprep.subr.mxu0 %v1811
    %2087 = vmatpush1.msra.mxu0 %v1810
    %2088 = vmatprep.subr.mxu0 %v1814
    %2089 = vmatpush1.msra.mxu0 %v1813
    %2090 = vmatprep.subr.mxu0 %v1817
    %2091 = vmatpush1.msra.mxu0 %v1816
    %2092 = vmatprep.subr.mxu0 %v1820
    %2093 = vmatpush1.msra.mxu0 %v1819
    %2094 = vmatprep.subr.mxu0 0.0
    %2095 = vmatpush1.msra.mxu0 0.0
    %2096 = vmatprep.subr.mxu0 0.0
    %2097 = vmatpush1.msra.mxu0 0.0
    %2098 = vmatprep.subr.mxu0 0.0
    %2099 = vmatpush1.msra.mxu0 0.0
    %2100 = vmatprep.subr.mxu0 0.0
    %2101 = vmatpush1.msra.mxu0 0.0
    %2102 = vmatprep.subr.mxu0 0.0
    %2103 = vmatpush1.msra.mxu0 0.0
    %2104 = vmatprep.subr.mxu0 0.0
    %2105 = vmatpush1.msra.mxu0 0.0
    %2106 = vmatprep.subr.mxu0 0.0
    %2107 = vmatpush1.msra.mxu0 0.0
    %2108 = vmatprep.subr.mxu0 0.0
    %2109 = vmatpush1.msra.mxu0 0.0
    %2110 = vmatprep.subr.mxu0 0.0
    %2111 = vmatpush1.msra.mxu0 0.0
    %2112 = vmatprep.subr.mxu0 0.0
    %2113 = vmatpush1.msra.mxu0 0.0
    %2114 = vmatprep.subr.mxu0 0.0
    %2115 = vmatpush1.msra.mxu0 0.0
    %2116 = vmatprep.subr.mxu0 0.0
    %2117 = vmatpush1.msra.mxu0 0.0
    %2118 = vmatprep.subr.mxu0 0.0
    %2119 = vmatpush1.msra.mxu0 0.0
    %2120 = vmatprep.subr.mxu0 0.0
    %2121 = vmatpush1.msra.mxu0 0.0
    %2122 = vmatprep.subr.mxu0 0.0
    %2123 = vmatpush1.msra.mxu0 0.0
    %2124 = vmatprep.subr.mxu0 0.0
    %2125 = vmatpush1.msra.mxu0 0.0
    %2126 = vmatprep.mubr.f32.mxu0 0.0
    %2127 = vmatmul.mubr.f32.gmra.mrb[0].mxu0 0.0
    %v2128 = vpop.f32.mrb[0].mxu0
    %v2129 = vadd.f32 0.0, %v2128
    %v2130 = vpop.f32.mrb[0].mxu0
    %v2131 = vadd.f32 0.0, %v2130
    %2132 = vdwg.mxu0
    %2133 = vmatprep.subr.mxu0 0.0
    %2134 = vmatpush1.msra.mxu0 %v1776
    %2135 = vmatprep.subr.mxu0 0.0
    %2136 = vmatpush1.msra.mxu0 %v1779
    %2137 = vmatprep.subr.mxu0 0.0
    %2138 = vmatpush1.msra.mxu0 %v1782
    %2139 = vmatprep.subr.mxu0 0.0
    %2140 = vmatpush1.msra.mxu0 %v1785
    %2141 = vmatprep.subr.mxu0 0.0
    %2142 = vmatpush1.msra.mxu0 %v1788
    %2143 = vmatprep.subr.mxu0 0.0
    %2144 = vmatpush1.msra.mxu0 %v1791
    %2145 = vmatprep.subr.mxu0 0.0
    %2146 = vmatpush1.msra.mxu0 %v1794
    %2147 = vmatprep.subr.mxu0 0.0
    %2148 = vmatpush1.msra.mxu0 %v1797
    %2149 = vmatprep.subr.mxu0 0.0
    %2150 = vmatpush1.msra.mxu0 %v1800
    %2151 = vmatprep.subr.mxu0 0.0
    %2152 = vmatpush1.msra.mxu0 %v1803
    %2153 = vmatprep.subr.mxu0 0.0
    %2154 = vmatpush1.msra.mxu0 %v1806
    %2155 = vmatprep.subr.mxu0 0.0
    %2156 = vmatpush1.msra.mxu0 %v1809
    %2157 = vmatprep.subr.mxu0 0.0
    %2158 = vmatpush1.msra.mxu0 %v1812
    %2159 = vmatprep.subr.mxu0 0.0
    %2160 = vmatpush1.msra.mxu0 %v1815
    %2161 = vmatprep.subr.mxu0 0.0
    %2162 = vmatpush1.msra.mxu0 %v1818
    %2163 = vmatprep.subr.mxu0 0.0
    %2164 = vmatpush1.msra.mxu0 %v1821
    %2165 = vmatprep.subr.mxu0 0.0
    %2166 = vmatpush1.msra.mxu0 0.0
    %2167 = vmatprep.subr.mxu0 0.0
    %2168 = vmatpush1.msra.mxu0 0.0
    %2169 = vmatprep.subr.mxu0 0.0
    %2170 = vmatpush1.msra.mxu0 0.0
    %2171 = vmatprep.subr.mxu0 0.0
    %2172 = vmatpush1.msra.mxu0 0.0
    %2173 = vmatprep.subr.mxu0 0.0
    %2174 = vmatpush1.msra.mxu0 0.0
    %2175 = vmatprep.subr.mxu0 0.0
    %2176 = vmatpush1.msra.mxu0 0.0
    %2177 = vmatprep.subr.mxu0 0.0
    %2178 = vmatpush1.msra.mxu0 0.0
    %2179 = vmatprep.subr.mxu0 0.0
    %2180 = vmatpush1.msra.mxu0 0.0
    %2181 = vmatprep.subr.mxu0 0.0
    %2182 = vmatpush1.msra.mxu0 0.0
    %2183 = vmatprep.subr.mxu0 0.0
    %2184 = vmatpush1.msra.mxu0 0.0
    %2185 = vmatprep.subr.mxu0 0.0
    %2186 = vmatpush1.msra.mxu0 0.0
    %2187 = vmatprep.subr.mxu0 0.0
    %2188 = vmatpush1.msra.mxu0 0.0
    %2189 = vmatprep.subr.mxu0 0.0
    %2190 = vmatpush1.msra.mxu0 0.0
    %2191 = vmatprep.subr.mxu0 0.0
    %2192 = vmatpush1.msra.mxu0 0.0
    %2193 = vmatprep.subr.mxu0 0.0
    %2194 = vmatpush1.msra.mxu0 0.0
    %2195 = vmatprep.subr.mxu0 0.0
    %2196 = vmatpush1.msra.mxu0 0.0
    %2197 = vmatprep.mubr.f32.mxu0 0.0
    %2198 = vmatmul.mubr.f32.gmra.mrb[0].mxu0 0.0
    %v2199 = vpop.f32.mrb[0].mxu0
    %v2200 = vadd.f32 0.0, %v2199
    %v2201 = vpop.f32.mrb[0].mxu0
    %2202 = vdwg.mxu0
    %v2203 = vadd.f32 %v1911, %v2129
    %v2204 = vxor.u32 %v2203, 2147483648
    %v2205 = vmul.f32 %v2204, 1.442695
    %v2206 = vpow.pop %v2205
    %v2207 = vadd.f32 %v2206, 1.0
    %v2208 = vrcp.pop %v2207
    %v2209 = vmul.f32 1.0, %v2208
    %v2210 = vadd.f32 %v1913, %v2131
    %v2211 = vxor.u32 %v2210, 2147483648
    %v2212 = vmul.f32 %v2211, 1.442695
    %v2213 = vpow.pop %v2212
    %v2214 = vadd.f32 %v2213, 1.0
    %v2215 = vrcp.pop %v2214
    %v2216 = vmul.f32 1.0, %v2215
    %v2217 = vadd.f32 %v2200, %v1827
    %v2218 = vmul.f32 %v2209, %v2217
    %v2219 = vadd.f32 %v2024, %v2218
    %v2220 = vtanh.pop %v2219
    %v2221 = vsub.f32 1.0, %v2216
    %v2222 = vmul.f32 %v2221, %v2220
    %v2223 = vmul.f32 %v2216, 0.0
    %v2224 = vadd.f32 %v2222, %v2223
    %2225 = vmatprep.subr.mxu0 %v1775
    %2226 = vmatpush1.msra.mxu0 %v1774
    %2227 = vmatprep.subr.mxu0 %v1778
    %2228 = vmatpush1.msra.mxu0 %v1777
    %2229 = vmatprep.subr.mxu0 %v1781
    %2230 = vmatpush1.msra.mxu0 %v1780
    %2231 = vmatprep.subr.mxu0 %v1784
    %2232 = vmatpush1.msra.mxu0 %v1783
    %2233 = vmatprep.subr.mxu0 %v1787
    %2234 = vmatpush1.msra.mxu0 %v1786
    %2235 = vmatprep.subr.mxu0 %v1790
    %2236 = vmatpush1.msra.mxu0 %v1789
    %2237 = vmatprep.subr.mxu0 %v1793
    %2238 = vmatpush1.msra.mxu0 %v1792
    %2239 = vmatprep.subr.mxu0 %v1796
    %2240 = vmatpush1.msra.mxu0 %v1795
    %2241 = vmatprep.subr.mxu0 %v1799
    %2242 = vmatpush1.msra.mxu0 %v1798
    %2243 = vmatprep.subr.mxu0 %v1802
    %2244 = vmatpush1.msra.mxu0 %v1801
    %2245 = vmatprep.subr.mxu0 %v1805
    %2246 = vmatpush1.msra.mxu0 %v1804
    %2247 = vmatprep.subr.mxu0 %v1808
    %2248 = vmatpush1.msra.mxu0 %v1807
    %2249 = vmatprep.subr.mxu0 %v1811
    %2250 = vmatpush1.msra.mxu0 %v1810
    %2251 = vmatprep.subr.mxu0 %v1814
    %2252 = vmatpush1.msra.mxu0 %v1813
    %2253 = vmatprep.subr.mxu0 %v1817
    %2254 = vmatpush1.msra.mxu0 %v1816
    %2255 = vmatprep.subr.mxu0 %v1820
    %2256 = vmatpush1.msra.mxu0 %v1819
    %2257 = vmatprep.subr.mxu0 0.0
    %2258 = vmatpush1.msra.mxu0 0.0
    %2259 = vmatprep.subr.mxu0 0.0
    %2260 = vmatpush1.msra.mxu0 0.0
    %2261 = vmatprep.subr.mxu0 0.0
    %2262 = vmatpush1.msra.mxu0 0.0
    %2263 = vmatprep.subr.mxu0 0.0
    %2264 = vmatpush1.msra.mxu0 0.0
    %2265 = vmatprep.subr.mxu0 0.0
    %2266 = vmatpush1.msra.mxu0 0.0
    %2267 = vmatprep.subr.mxu0 0.0
    %2268 = vmatpush1.msra.mxu0 0.0
    %2269 = vmatprep.subr.mxu0 0.0
    %2270 = vmatpush1.msra.mxu0 0.0
    %2271 = vmatprep.subr.mxu0 0.0
    %2272 = vmatpush1.msra.mxu0 0.0
    %2273 = vmatprep.subr.mxu0 0.0
    %2274 = vmatpush1.msra.mxu0 0.0
    %2275 = vmatprep.subr.mxu0 0.0
    %2276 = vmatpush1.msra.mxu0 0.0
    %2277 = vmatprep.subr.mxu0 0.0
    %2278 = vmatpush1.msra.mxu0 0.0
    %2279 = vmatprep.subr.mxu0 0.0
    %2280 = vmatpush1.msra.mxu0 0.0
    %2281 = vmatprep.subr.mxu0 0.0
    %2282 = vmatpush1.msra.mxu0 0.0
    %2283 = vmatprep.subr.mxu0 0.0
    %2284 = vmatpush1.msra.mxu0 0.0
    %2285 = vmatprep.subr.mxu0 0.0
    %2286 = vmatpush1.msra.mxu0 0.0
    %2287 = vmatprep.subr.mxu0 0.0
    %2288 = vmatpush1.msra.mxu0 0.0
    %2289 = vmatprep.mubr.f32.mxu0 0.0
    %2290 = vmatmul.mubr.f32.gmra.mrb[0].mxu0 %v2224
    %v2291 = vpop.f32.mrb[0].mxu0
    %v2292 = vadd.f32 0.0, %v2291
    %v2293 = vpop.f32.mrb[0].mxu0
    %v2294 = vadd.f32 0.0, %v2293
    %2295 = vdwg.mxu0
    %2296 = vmatprep.subr.mxu0 0.0
    %2297 = vmatpush1.msra.mxu0 %v1776
    %2298 = vmatprep.subr.mxu0 0.0
    %2299 = vmatpush1.msra.mxu0 %v1779
    %2300 = vmatprep.subr.mxu0 0.0
    %2301 = vmatpush1.msra.mxu0 %v1782
    %2302 = vmatprep.subr.mxu0 0.0
    %2303 = vmatpush1.msra.mxu0 %v1785
    %2304 = vmatprep.subr.mxu0 0.0
    %2305 = vmatpush1.msra.mxu0 %v1788
    %2306 = vmatprep.subr.mxu0 0.0
    %2307 = vmatpush1.msra.mxu0 %v1791
    %2308 = vmatprep.subr.mxu0 0.0
    %2309 = vmatpush1.msra.mxu0 %v1794
    %2310 = vmatprep.subr.mxu0 0.0
    %2311 = vmatpush1.msra.mxu0 %v1797
    %2312 = vmatprep.subr.mxu0 0.0
    %2313 = vmatpush1.msra.mxu0 %v1800
    %2314 = vmatprep.subr.mxu0 0.0
    %2315 = vmatpush1.msra.mxu0 %v1803
    %2316 = vmatprep.subr.mxu0 0.0
    %2317 = vmatpush1.msra.mxu0 %v1806
    %2318 = vmatprep.subr.mxu0 0.0
    %2319 = vmatpush1.msra.mxu0 %v1809
    %2320 = vmatprep.subr.mxu0 0.0
    %2321 = vmatpush1.msra.mxu0 %v1812
    %2322 = vmatprep.subr.mxu0 0.0
    %2323 = vmatpush1.msra.mxu0 %v1815
    %2324 = vmatprep.subr.mxu0 0.0
    %2325 = vmatpush1.msra.mxu0 %v1818
    %2326 = vmatprep.subr.mxu0 0.0
    %2327 = vmatpush1.msra.mxu0 %v1821
    %2328 = vmatprep.subr.mxu0 0.0
    %2329 = vmatpush1.msra.mxu0 0.0
    %2330 = vmatprep.subr.mxu0 0.0
    %2331 = vmatpush1.msra.mxu0 0.0
    %2332 = vmatprep.subr.mxu0 0.0
    %2333 = vmatpush1.msra.mxu0 0.0
    %2334 = vmatprep.subr.mxu0 0.0
    %2335 = vmatpush1.msra.mxu0 0.0
    %2336 = vmatprep.subr.mxu0 0.0
    %2337 = vmatpush1.msra.mxu0 0.0
    %2338 = vmatprep.subr.mxu0 0.0
    %2339 = vmatpush1.msra.mxu0 0.0
    %2340 = vmatprep.subr.mxu0 0.0
    %2341 = vmatpush1.msra.mxu0 0.0
    %2342 = vmatprep.subr.mxu0 0.0
    %2343 = vmatpush1.msra.mxu0 0.0
    %2344 = vmatprep.subr.mxu0 0.0
    %2345 = vmatpush1.msra.mxu0 0.0
    %2346 = vmatprep.subr.mxu0 0.0
    %2347 = vmatpush1.msra.mxu0 0.0
    %2348 = vmatprep.subr.mxu0 0.0
    %2349 = vmatpush1.msra.mxu0 0.0
    %2350 = vmatprep.subr.mxu0 0.0
    %2351 = vmatpush1.msra.mxu0 0.0
    %2352 = vmatprep.subr.mxu0 0.0
    %2353 = vmatpush1.msra.mxu0 0.0
    %2354 = vmatprep.subr.mxu0 0.0
    %2355 = vmatpush1.msra.mxu0 0.0
    %2356 = vmatprep.subr.mxu0 0.0
    %2357 = vmatpush1.msra.mxu0 0.0
    %2358 = vmatprep.subr.mxu0 0.0
    %2359 = vmatpush1.msra.mxu0 0.0
    %2360 = vmatprep.mubr.f32.mxu0 0.0
    %2361 = vmatmul.mubr.f32.gmra.mrb[0].mxu0 %v2224
    %v2362 = vpop.f32.mrb[0].mxu0
    %v2363 = vadd.f32 0.0, %v2362
    %v2364 = vpop.f32.mrb[0].mxu0
    %2365 = vdwg.mxu0
    %v2366 = vadd.f32 %v1917, %v2292
    %v2367 = vxor.u32 %v2366, 2147483648
    %v2368 = vmul.f32 %v2367, 1.442695
    %v2369 = vpow.pop %v2368
    %v2370 = vadd.f32 %v2369, 1.0
    %v2371 = vrcp.pop %v2370
    %v2372 = vmul.f32 1.0, %v2371
    %v2373 = vadd.f32 %v1919, %v2294
    %v2374 = vxor.u32 %v2373, 2147483648
    %v2375 = vmul.f32 %v2374, 1.442695
    %v2376 = vpow.pop %v2375
    %v2377 = vadd.f32 %v2376, 1.0
    %v2378 = vrcp.pop %v2377
    %v2379 = vmul.f32 1.0, %v2378
    %v2380 = vadd.f32 %v2363, %v1827
    %v2381 = vmul.f32 %v2372, %v2380
    %v2382 = vadd.f32 %v2029, %v2381
    %v2383 = vtanh.pop %v2382
    %v2384 = vsub.f32 1.0, %v2379
    %v2385 = vmul.f32 %v2384, %v2383
    %v2386 = vmul.f32 %v2379, %v2224
    %v2387 = vadd.f32 %v2385, %v2386
    %2388 = vmatprep.subr.mxu0 %v1775
    %2389 = vmatpush1.msra.mxu0 %v1774
    %2390 = vmatprep.subr.mxu0 %v1778
    %2391 = vmatpush1.msra.mxu0 %v1777
    %2392 = vmatprep.subr.mxu0 %v1781
    %2393 = vmatpush1.msra.mxu0 %v1780
    %2394 = vmatprep.subr.mxu0 %v1784
    %2395 = vmatpush1.msra.mxu0 %v1783
    %2396 = vmatprep.subr.mxu0 %v1787
    %2397 = vmatpush1.msra.mxu0 %v1786
    %2398 = vmatprep.subr.mxu0 %v1790
    %2399 = vmatpush1.msra.mxu0 %v1789
    %2400 = vmatprep.subr.mxu0 %v1793
    %2401 = vmatpush1.msra.mxu0 %v1792
    %2402 = vmatprep.subr.mxu0 %v1796
    %2403 = vmatpush1.msra.mxu0 %v1795
    %2404 = vmatprep.subr.mxu0 %v1799
    %2405 = vmatpush1.msra.mxu0 %v1798
    %2406 = vmatprep.subr.mxu0 %v1802
    %2407 = vmatpush1.msra.mxu0 %v1801
    %2408 = vmatprep.subr.mxu0 %v1805
    %2409 = vmatpush1.msra.mxu0 %v1804
    %2410 = vmatprep.subr.mxu0 %v1808
    %2411 = vmatpush1.msra.mxu0 %v1807
    %2412 = vmatprep.subr.mxu0 %v1811
    %2413 = vmatpush1.msra.mxu0 %v1810
    %2414 = vmatprep.subr.mxu0 %v1814
    %2415 = vmatpush1.msra.mxu0 %v1813
    %2416 = vmatprep.subr.mxu0 %v1817
    %2417 = vmatpush1.msra.mxu0 %v1816
    %2418 = vmatprep.subr.mxu0 %v1820
    %2419 = vmatpush1.msra.mxu0 %v1819
    %2420 = vmatprep.subr.mxu0 0.0
    %2421 = vmatpush1.msra.mxu0 0.0
    %2422 = vmatprep.subr.mxu0 0.0
    %2423 = vmatpush1.msra.mxu0 0.0
    %2424 = vmatprep.subr.mxu0 0.0
    %2425 = vmatpush1.msra.mxu0 0.0
    %2426 = vmatprep.subr.mxu0 0.0
    %2427 = vmatpush1.msra.mxu0 0.0
    %2428 = vmatprep.subr.mxu0 0.0
    %2429 = vmatpush1.msra.mxu0 0.0
    %2430 = vmatprep.subr.mxu0 0.0
    %2431 = vmatpush1.msra.mxu0 0.0
    %2432 = vmatprep.subr.mxu0 0.0
    %2433 = vmatpush1.msra.mxu0 0.0
    %2434 = vmatprep.subr.mxu0 0.0
    %2435 = vmatpush1.msra.mxu0 0.0
    %2436 = vmatprep.subr.mxu0 0.0
    %2437 = vmatpush1.msra.mxu0 0.0
    %2438 = vmatprep.subr.mxu0 0.0
    %2439 = vmatpush1.msra.mxu0 0.0
    %2440 = vmatprep.subr.mxu0 0.0
    %2441 = vmatpush1.msra.mxu0 0.0
    %2442 = vmatprep.subr.mxu0 0.0
    %2443 = vmatpush1.msra.mxu0 0.0
    %2444 = vmatprep.subr.mxu0 0.0
    %2445 = vmatpush1.msra.mxu0 0.0
    %2446 = vmatprep.subr.mxu0 0.0
    %2447 = vmatpush1.msra.mxu0 0.0
    %2448 = vmatprep.subr.mxu0 0.0
    %2449 = vmatpush1.msra.mxu0 0.0
    %2450 = vmatprep.subr.mxu0 0.0
    %2451 = vmatpush1.msra.mxu0 0.0
    %2452 = vmatprep.mubr.f32.mxu0 0.0
    %2453 = vmatmul.mubr.f32.gmra.mrb[0].mxu0 %v2387
    %v2454 = vpop.f32.mrb[0].mxu0
    %v2455 = vadd.f32 0.0, %v2454
    %v2456 = vpop.f32.mrb[0].mxu0
    %v2457 = vadd.f32 0.0, %v2456
    %2458 = vdwg.mxu0
    %2459 = vmatprep.subr.mxu0 0.0
    %2460 = vmatpush1.msra.mxu0 %v1776
    %2461 = vmatprep.subr.mxu0 0.0
    %2462 = vmatpush1.msra.mxu0 %v1779
    %2463 = vmatprep.subr.mxu0 0.0
    %2464 = vmatpush1.msra.mxu0 %v1782
    %2465 = vmatprep.subr.mxu0 0.0
    %2466 = vmatpush1.msra.mxu0 %v1785
    %2467 = vmatprep.subr.mxu0 0.0
    %2468 = vmatpush1.msra.mxu0 %v1788
    %2469 = vmatprep.subr.mxu0 0.0
    %2470 = vmatpush1.msra.mxu0 %v1791
    %2471 = vmatprep.subr.mxu0 0.0
    %2472 = vmatpush1.msra.mxu0 %v1794
    %2473 = vmatprep.subr.mxu0 0.0
    %2474 = vmatpush1.msra.mxu0 %v1797
    %2475 = vmatprep.subr.mxu0 0.0
    %2476 = vmatpush1.msra.mxu0 %v1800
    %2477 = vmatprep.subr.mxu0 0.0
    %2478 = vmatpush1.msra.mxu0 %v1803
    %2479 = vmatprep.subr.mxu0 0.0
    %2480 = vmatpush1.msra.mxu0 %v1806
    %2481 = vmatprep.subr.mxu0 0.0
    %2482 = vmatpush1.msra.mxu0 %v1809
    %2483 = vmatprep.subr.mxu0 0.0
    %2484 = vmatpush1.msra.mxu0 %v1812
    %2485 = vmatprep.subr.mxu0 0.0
    %2486 = vmatpush1.msra.mxu0 %v1815
    %2487 = vmatprep.subr.mxu0 0.0
    %2488 = vmatpush1.msra.mxu0 %v1818
    %2489 = vmatprep.subr.mxu0 0.0
    %2490 = vmatpush1.msra.mxu0 %v1821
    %2491 = vmatprep.subr.mxu0 0.0
    %2492 = vmatpush1.msra.mxu0 0.0
    %2493 = vmatprep.subr.mxu0 0.0
    %2494 = vmatpush1.msra.mxu0 0.0
    %2495 = vmatprep.subr.mxu0 0.0
    %2496 = vmatpush1.msra.mxu0 0.0
    %2497 = vmatprep.subr.mxu0 0.0
    %2498 = vmatpush1.msra.mxu0 0.0
    %2499 = vmatprep.subr.mxu0 0.0
    %2500 = vmatpush1.msra.mxu0 0.0
    %2501 = vmatprep.subr.mxu0 0.0
    %2502 = vmatpush1.msra.mxu0 0.0
    %2503 = vmatprep.subr.mxu0 0.0
    %2504 = vmatpush1.msra.mxu0 0.0
    %2505 = vmatprep.subr.mxu0 0.0
    %2506 = vmatpush1.msra.mxu0 0.0
    %2507 = vmatprep.subr.mxu0 0.0
    %2508 = vmatpush1.msra.mxu0 0.0
    %2509 = vmatprep.subr.mxu0 0.0
    %2510 = vmatpush1.msra.mxu0 0.0
    %2511 = vmatprep.subr.mxu0 0.0
    %2512 = vmatpush1.msra.mxu0 0.0
    %2513 = vmatprep.subr.mxu0 0.0
    %2514 = vmatpush1.msra.mxu0 0.0
    %2515 = vmatprep.subr.mxu0 0.0
    %2516 = vmatpush1.msra.mxu0 0.0
    %2517 = vmatprep.subr.mxu0 0.0
    %2518 = vmatpush1.msra.mxu0 0.0
    %2519 = vmatprep.subr.mxu0 0.0
    %2520 = vmatpush1.msra.mxu0 0.0
    %2521 = vmatprep.subr.mxu0 0.0
    %2522 = vmatpush1.msra.mxu0 0.0
    %2523 = vmatprep.mubr.f32.mxu0 0.0
    %2524 = vmatmul.mubr.f32.gmra.mrb[0].mxu0 %v2387
    %v2525 = vpop.f32.mrb[0].mxu0
    %v2526 = vadd.f32 0.0, %v2525
    %v2527 = vpop.f32.mrb[0].mxu0
    %2528 = vdwg.mxu0
    %v2529 = vadd.f32 %v1923, %v2455
    %v2530 = vxor.u32 %v2529, 2147483648
    %v2531 = vmul.f32 %v2530, 1.442695
    %v2532 = vpow.pop %v2531
    %v2533 = vadd.f32 %v2532, 1.0
    %v2534 = vrcp.pop %v2533
    %v2535 = vmul.f32 1.0, %v2534
    %v2536 = vadd.f32 %v1925, %v2457
    %v2537 = vxor.u32 %v2536, 2147483648
    %v2538 = vmul.f32 %v2537, 1.442695
    %v2539 = vpow.pop %v2538
    %v2540 = vadd.f32 %v2539, 1.0
    %v2541 = vrcp.pop %v2540
    %v2542 = vmul.f32 1.0, %v2541
    %v2543 = vadd.f32 %v2526, %v1827
    %v2544 = vmul.f32 %v2535, %v2543
    %v2545 = vadd.f32 %v2034, %v2544
    %v2546 = vtanh.pop %v2545
    %v2547 = vsub.f32 1.0, %v2542
    %v2548 = vmul.f32 %v2547, %v2546
    %v2549 = vmul.f32 %v2542, %v2387
    %v2550 = vadd.f32 %v2548, %v2549
    %2551 = vmatprep.subr.mxu0 %v1775
    %2552 = vmatpush1.msra.mxu0 %v1774
    %2553 = vmatprep.subr.mxu0 %v1778
    %2554 = vmatpush1.msra.mxu0 %v1777
    %2555 = vmatprep.subr.mxu0 %v1781
    %2556 = vmatpush1.msra.mxu0 %v1780
    %2557 = vmatprep.subr.mxu0 %v1784
    %2558 = vmatpush1.msra.mxu0 %v1783
    %2559 = vmatprep.subr.mxu0 %v1787
    %2560 = vmatpush1.msra.mxu0 %v1786
    %2561 = vmatprep.subr.mxu0 %v1790
    %2562 = vmatpush1.msra.mxu0 %v1789
    %2563 = vmatprep.subr.mxu0 %v1793
    %2564 = vmatpush1.msra.mxu0 %v1792
    %2565 = vmatprep.subr.mxu0 %v1796
    %2566 = vmatpush1.msra.mxu0 %v1795
    %2567 = vmatprep.subr.mxu0 %v1799
    %2568 = vmatpush1.msra.mxu0 %v1798
    %2569 = vmatprep.subr.mxu0 %v1802
    %2570 = vmatpush1.msra.mxu0 %v1801
    %2571 = vmatprep.subr.mxu0 %v1805
    %2572 = vmatpush1.msra.mxu0 %v1804
    %2573 = vmatprep.subr.mxu0 %v1808
    %2574 = vmatpush1.msra.mxu0 %v1807
    %2575 = vmatprep.subr.mxu0 %v1811
    %2576 = vmatpush1.msra.mxu0 %v1810
    %2577 = vmatprep.subr.mxu0 %v1814
    %2578 = vmatpush1.msra.mxu0 %v1813
    %2579 = vmatprep.subr.mxu0 %v1817
    %2580 = vmatpush1.msra.mxu0 %v1816
    %2581 = vmatprep.subr.mxu0 %v1820
    %2582 = vmatpush1.msra.mxu0 %v1819
    %2583 = vmatprep.subr.mxu0 0.0
    %2584 = vmatpush1.msra.mxu0 0.0
    %2585 = vmatprep.subr.mxu0 0.0
    %2586 = vmatpush1.msra.mxu0 0.0
    %2587 = vmatprep.subr.mxu0 0.0
    %2588 = vmatpush1.msra.mxu0 0.0
    %2589 = vmatprep.subr.mxu0 0.0
    %2590 = vmatpush1.msra.mxu0 0.0
    %2591 = vmatprep.subr.mxu0 0.0
    %2592 = vmatpush1.msra.mxu0 0.0
    %2593 = vmatprep.subr.mxu0 0.0
    %2594 = vmatpush1.msra.mxu0 0.0
    %2595 = vmatprep.subr.mxu0 0.0
    %2596 = vmatpush1.msra.mxu0 0.0
    %2597 = vmatprep.subr.mxu0 0.0
    %2598 = vmatpush1.msra.mxu0 0.0
    %2599 = vmatprep.subr.mxu0 0.0
    %2600 = vmatpush1.msra.mxu0 0.0
    %2601 = vmatprep.subr.mxu0 0.0
    %2602 = vmatpush1.msra.mxu0 0.0
    %2603 = vmatprep.subr.mxu0 0.0
    %2604 = vmatpush1.msra.mxu0 0.0
    %2605 = vmatprep.subr.mxu0 0.0
    %2606 = vmatpush1.msra.mxu0 0.0
    %2607 = vmatprep.subr.mxu0 0.0
    %2608 = vmatpush1.msra.mxu0 0.0
    %2609 = vmatprep.subr.mxu0 0.0
    %2610 = vmatpush1.msra.mxu0 0.0
    %2611 = vmatprep.subr.mxu0 0.0
    %2612 = vmatpush1.msra.mxu0 0.0
    %2613 = vmatprep.subr.mxu0 0.0
    %2614 = vmatpush1.msra.mxu0 0.0
    %2615 = vmatprep.mubr.f32.mxu0 0.0
    %2616 = vmatmul.mubr.f32.gmra.mrb[0].mxu0 %v2550
    %v2617 = vpop.f32.mrb[0].mxu0
    %v2618 = vadd.f32 0.0, %v2617
    %v2619 = vpop.f32.mrb[0].mxu0
    %v2620 = vadd.f32 0.0, %v2619
    %2621 = vdwg.mxu0
    %2622 = vmatprep.subr.mxu0 0.0
    %2623 = vmatpush1.msra.mxu0 %v1776
    %2624 = vmatprep.subr.mxu0 0.0
    %2625 = vmatpush1.msra.mxu0 %v1779
    %2626 = vmatprep.subr.mxu0 0.0
    %2627 = vmatpush1.msra.mxu0 %v1782
    %2628 = vmatprep.subr.mxu0 0.0
    %2629 = vmatpush1.msra.mxu0 %v1785
    %2630 = vmatprep.subr.mxu0 0.0
    %2631 = vmatpush1.msra.mxu0 %v1788
    %2632 = vmatprep.subr.mxu0 0.0
    %2633 = vmatpush1.msra.mxu0 %v1791
    %2634 = vmatprep.subr.mxu0 0.0
    %2635 = vmatpush1.msra.mxu0 %v1794
    %2636 = vmatprep.subr.mxu0 0.0
    %2637 = vmatpush1.msra.mxu0 %v1797
    %2638 = vmatprep.subr.mxu0 0.0
    %2639 = vmatpush1.msra.mxu0 %v1800
    %2640 = vmatprep.subr.mxu0 0.0
    %2641 = vmatpush1.msra.mxu0 %v1803
    %2642 = vmatprep.subr.mxu0 0.0
    %2643 = vmatpush1.msra.mxu0 %v1806
    %2644 = vmatprep.subr.mxu0 0.0
    %2645 = vmatpush1.msra.mxu0 %v1809
    %2646 = vmatprep.subr.mxu0 0.0
    %2647 = vmatpush1.msra.mxu0 %v1812
    %2648 = vmatprep.subr.mxu0 0.0
    %2649 = vmatpush1.msra.mxu0 %v1815
    %2650 = vmatprep.subr.mxu0 0.0
    %2651 = vmatpush1.msra.mxu0 %v1818
    %2652 = vmatprep.subr.mxu0 0.0
    %2653 = vmatpush1.msra.mxu0 %v1821
    %2654 = vmatprep.subr.mxu0 0.0
    %2655 = vmatpush1.msra.mxu0 0.0
    %2656 = vmatprep.subr.mxu0 0.0
    %2657 = vmatpush1.msra.mxu0 0.0
    %2658 = vmatprep.subr.mxu0 0.0
    %2659 = vmatpush1.msra.mxu0 0.0
    %2660 = vmatprep.subr.mxu0 0.0
    %2661 = vmatpush1.msra.mxu0 0.0
    %2662 = vmatprep.subr.mxu0 0.0
    %2663 = vmatpush1.msra.mxu0 0.0
    %2664 = vmatprep.subr.mxu0 0.0
    %2665 = vmatpush1.msra.mxu0 0.0
    %2666 = vmatprep.subr.mxu0 0.0
    %2667 = vmatpush1.msra.mxu0 0.0
    %2668 = vmatprep.subr.mxu0 0.0
    %2669 = vmatpush1.msra.mxu0 0.0
    %2670 = vmatprep.subr.mxu0 0.0
    %2671 = vmatpush1.msra.mxu0 0.0
    %2672 = vmatprep.subr.mxu0 0.0
    %2673 = vmatpush1.msra.mxu0 0.0
    %2674 = vmatprep.subr.mxu0 0.0
    %2675 = vmatpush1.msra.mxu0 0.0
    %2676 = vmatprep.subr.mxu0 0.0
    %2677 = vmatpush1.msra.mxu0 0.0
    %2678 = vmatprep.subr.mxu0 0.0
    %2679 = vmatpush1.msra.mxu0 0.0
    %2680 = vmatprep.subr.mxu0 0.0
    %2681 = vmatpush1.msra.mxu0 0.0
    %2682 = vmatprep.subr.mxu0 0.0
    %2683 = vmatpush1.msra.mxu0 0.0
    %2684 = vmatprep.subr.mxu0 0.0
    %2685 = vmatpush1.msra.mxu0 0.0
    %2686 = vmatprep.mubr.f32.mxu0 0.0
    %2687 = vmatmul.mubr.f32.gmra.mrb[0].mxu0 %v2550
    %v2688 = vpop.f32.mrb[0].mxu0
    %v2689 = vadd.f32 0.0, %v2688
    %v2690 = vpop.f32.mrb[0].mxu0
    %2691 = vdwg.mxu0
    %v2692 = vadd.f32 %v1929, %v2618
    %v2693 = vxor.u32 %v2692, 2147483648
    %v2694 = vmul.f32 %v2693, 1.442695
    %v2695 = vpow.pop %v2694
    %v2696 = vadd.f32 %v2695, 1.0
    %v2697 = vrcp.pop %v2696
    %v2698 = vmul.f32 1.0, %v2697
    %v2699 = vadd.f32 %v1931, %v2620
    %v2700 = vxor.u32 %v2699, 2147483648
    %v2701 = vmul.f32 %v2700, 1.442695
    %v2702 = vpow.pop %v2701
    %v2703 = vadd.f32 %v2702, 1.0
    %v2704 = vrcp.pop %v2703
    %v2705 = vmul.f32 1.0, %v2704
    %v2706 = vadd.f32 %v2689, %v1827
    %v2707 = vmul.f32 %v2698, %v2706
    %v2708 = vadd.f32 %v2039, %v2707
    %v2709 = vtanh.pop %v2708
    %v2710 = vsub.f32 1.0, %v2705
    %v2711 = vmul.f32 %v2710, %v2709
    %v2712 = vmul.f32 %v2705, %v2550
    %v2713 = vadd.f32 %v2711, %v2712
    %2714 = vmatprep.subr.mxu0 %v1775
    %2715 = vmatpush1.msra.mxu0 %v1774
    %2716 = vmatprep.subr.mxu0 %v1778
    %2717 = vmatpush1.msra.mxu0 %v1777
    %2718 = vmatprep.subr.mxu0 %v1781
    %2719 = vmatpush1.msra.mxu0 %v1780
    %2720 = vmatprep.subr.mxu0 %v1784
    %2721 = vmatpush1.msra.mxu0 %v1783
    %2722 = vmatprep.subr.mxu0 %v1787
    %2723 = vmatpush1.msra.mxu0 %v1786
    %2724 = vmatprep.subr.mxu0 %v1790
    %2725 = vmatpush1.msra.mxu0 %v1789
    %2726 = vmatprep.subr.mxu0 %v1793
    %2727 = vmatpush1.msra.mxu0 %v1792
    %2728 = vmatprep.subr.mxu0 %v1796
    %2729 = vmatpush1.msra.mxu0 %v1795
    %2730 = vmatprep.subr.mxu0 %v1799
    %2731 = vmatpush1.msra.mxu0 %v1798
    %2732 = vmatprep.subr.mxu0 %v1802
    %2733 = vmatpush1.msra.mxu0 %v1801
    %2734 = vmatprep.subr.mxu0 %v1805
    %2735 = vmatpush1.msra.mxu0 %v1804
    %2736 = vmatprep.subr.mxu0 %v1808
    %2737 = vmatpush1.msra.mxu0 %v1807
    %2738 = vmatprep.subr.mxu0 %v1811
    %2739 = vmatpush1.msra.mxu0 %v1810
    %2740 = vmatprep.subr.mxu0 %v1814
    %2741 = vmatpush1.msra.mxu0 %v1813
    %2742 = vmatprep.subr.mxu0 %v1817
    %2743 = vmatpush1.msra.mxu0 %v1816
    %2744 = vmatprep.subr.mxu0 %v1820
    %2745 = vmatpush1.msra.mxu0 %v1819
    %2746 = vmatprep.subr.mxu0 0.0
    %2747 = vmatpush1.msra.mxu0 0.0
    %2748 = vmatprep.subr.mxu0 0.0
    %2749 = vmatpush1.msra.mxu0 0.0
    %2750 = vmatprep.subr.mxu0 0.0
    %2751 = vmatpush1.msra.mxu0 0.0
    %2752 = vmatprep.subr.mxu0 0.0
    %2753 = vmatpush1.msra.mxu0 0.0
    %2754 = vmatprep.subr.mxu0 0.0
    %2755 = vmatpush1.msra.mxu0 0.0
    %2756 = vmatprep.subr.mxu0 0.0
    %2757 = vmatpush1.msra.mxu0 0.0
    %2758 = vmatprep.subr.mxu0 0.0
    %2759 = vmatpush1.msra.mxu0 0.0
    %2760 = vmatprep.subr.mxu0 0.0
    %2761 = vmatpush1.msra.mxu0 0.0
    %2762 = vmatprep.subr.mxu0 0.0
    %2763 = vmatpush1.msra.mxu0 0.0
    %2764 = vmatprep.subr.mxu0 0.0
    %2765 = vmatpush1.msra.mxu0 0.0
    %2766 = vmatprep.subr.mxu0 0.0
    %2767 = vmatpush1.msra.mxu0 0.0
    %2768 = vmatprep.subr.mxu0 0.0
    %2769 = vmatpush1.msra.mxu0 0.0
    %2770 = vmatprep.subr.mxu0 0.0
    %2771 = vmatpush1.msra.mxu0 0.0
    %2772 = vmatprep.subr.mxu0 0.0
    %2773 = vmatpush1.msra.mxu0 0.0
    %2774 = vmatprep.subr.mxu0 0.0
    %2775 = vmatpush1.msra.mxu0 0.0
    %2776 = vmatprep.subr.mxu0 0.0
    %2777 = vmatpush1.msra.mxu0 0.0
    %2778 = vmatprep.mubr.f32.mxu0 0.0
    %2779 = vmatmul.mubr.f32.gmra.mrb[0].mxu0 %v2713
    %v2780 = vpop.f32.mrb[0].mxu0
    %v2781 = vadd.f32 0.0, %v2780
    %v2782 = vpop.f32.mrb[0].mxu0
    %v2783 = vadd.f32 0.0, %v2782
    %2784 = vdwg.mxu0
    %2785 = vmatprep.subr.mxu0 0.0
    %2786 = vmatpush1.msra.mxu0 %v1776
    %2787 = vmatprep.subr.mxu0 0.0
    %2788 = vmatpush1.msra.mxu0 %v1779
    %2789 = vmatprep.subr.mxu0 0.0
    %2790 = vmatpush1.msra.mxu0 %v1782
    %2791 = vmatprep.subr.mxu0 0.0
    %2792 = vmatpush1.msra.mxu0 %v1785
    %2793 = vmatprep.subr.mxu0 0.0
    %2794 = vmatpush1.msra.mxu0 %v1788
    %2795 = vmatprep.subr.mxu0 0.0
    %2796 = vmatpush1.msra.mxu0 %v1791
    %2797 = vmatprep.subr.mxu0 0.0
    %2798 = vmatpush1.msra.mxu0 %v1794
    %2799 = vmatprep.subr.mxu0 0.0
    %2800 = vmatpush1.msra.mxu0 %v1797
    %2801 = vmatprep.subr.mxu0 0.0
    %2802 = vmatpush1.msra.mxu0 %v1800
    %2803 = vmatprep.subr.mxu0 0.0
    %2804 = vmatpush1.msra.mxu0 %v1803
    %2805 = vmatprep.subr.mxu0 0.0
    %2806 = vmatpush1.msra.mxu0 %v1806
    %2807 = vmatprep.subr.mxu0 0.0
    %2808 = vmatpush1.msra.mxu0 %v1809
    %2809 = vmatprep.subr.mxu0 0.0
    %2810 = vmatpush1.msra.mxu0 %v1812
    %2811 = vmatprep.subr.mxu0 0.0
    %2812 = vmatpush1.msra.mxu0 %v1815
    %2813 = vmatprep.subr.mxu0 0.0
    %2814 = vmatpush1.msra.mxu0 %v1818
    %2815 = vmatprep.subr.mxu0 0.0
    %2816 = vmatpush1.msra.mxu0 %v1821
    %2817 = vmatprep.subr.mxu0 0.0
    %2818 = vmatpush1.msra.mxu0 0.0
    %2819 = vmatprep.subr.mxu0 0.0
    %2820 = vmatpush1.msra.mxu0 0.0
    %2821 = vmatprep.subr.mxu0 0.0
    %2822 = vmatpush1.msra.mxu0 0.0
    %2823 = vmatprep.subr.mxu0 0.0
    %2824 = vmatpush1.msra.mxu0 0.0
    %2825 = vmatprep.subr.mxu0 0.0
    %2826 = vmatpush1.msra.mxu0 0.0
    %2827 = vmatprep.subr.mxu0 0.0
    %2828 = vmatpush1.msra.mxu0 0.0
    %2829 = vmatprep.subr.mxu0 0.0
    %2830 = vmatpush1.msra.mxu0 0.0
    %2831 = vmatprep.subr.mxu0 0.0
    %2832 = vmatpush1.msra.mxu0 0.0
    %2833 = vmatprep.subr.mxu0 0.0
    %2834 = vmatpush1.msra.mxu0 0.0
    %2835 = vmatprep.subr.mxu0 0.0
    %2836 = vmatpush1.msra.mxu0 0.0
    %2837 = vmatprep.subr.mxu0 0.0
    %2838 = vmatpush1.msra.mxu0 0.0
    %2839 = vmatprep.subr.mxu0 0.0
    %2840 = vmatpush1.msra.mxu0 0.0
    %2841 = vmatprep.subr.mxu0 0.0
    %2842 = vmatpush1.msra.mxu0 0.0
    %2843 = vmatprep.subr.mxu0 0.0
    %2844 = vmatpush1.msra.mxu0 0.0
    %2845 = vmatprep.subr.mxu0 0.0
    %2846 = vmatpush1.msra.mxu0 0.0
    %2847 = vmatprep.subr.mxu0 0.0
    %2848 = vmatpush1.msra.mxu0 0.0
    %2849 = vmatprep.mubr.f32.mxu0 0.0
    %2850 = vmatmul.mubr.f32.gmra.mrb[0].mxu0 %v2713
    %v2851 = vpop.f32.mrb[0].mxu0
    %v2852 = vadd.f32 0.0, %v2851
    %v2853 = vpop.f32.mrb[0].mxu0
    %2854 = vdwg.mxu0
    %v2855 = vadd.f32 %v1935, %v2781
    %v2856 = vxor.u32 %v2855, 2147483648
    %v2857 = vmul.f32 %v2856, 1.442695
    %v2858 = vpow.pop %v2857
    %v2859 = vadd.f32 %v2858, 1.0
    %v2860 = vrcp.pop %v2859
    %v2861 = vmul.f32 1.0, %v2860
    %v2862 = vadd.f32 %v1937, %v2783
    %v2863 = vxor.u32 %v2862, 2147483648
    %v2864 = vmul.f32 %v2863, 1.442695
    %v2865 = vpow.pop %v2864
    %v2866 = vadd.f32 %v2865, 1.0
    %v2867 = vrcp.pop %v2866
    %v2868 = vmul.f32 1.0, %v2867
    %v2869 = vadd.f32 %v2852, %v1827
    %v2870 = vmul.f32 %v2861, %v2869
    %v2871 = vadd.f32 %v2044, %v2870
    %v2872 = vtanh.pop %v2871
    %v2873 = vsub.f32 1.0, %v2868
    %v2874 = vmul.f32 %v2873, %v2872
    %v2875 = vmul.f32 %v2868, %v2713
    %v2876 = vadd.f32 %v2874, %v2875
    %2877 = vmatprep.subr.mxu0 %v1775
    %2878 = vmatpush1.msra.mxu0 %v1774
    %2879 = vmatprep.subr.mxu0 %v1778
    %2880 = vmatpush1.msra.mxu0 %v1777
    %2881 = vmatprep.subr.mxu0 %v1781
    %2882 = vmatpush1.msra.mxu0 %v1780
    %2883 = vmatprep.subr.mxu0 %v1784
    %2884 = vmatpush1.msra.mxu0 %v1783
    %2885 = vmatprep.subr.mxu0 %v1787
    %2886 = vmatpush1.msra.mxu0 %v1786
    %2887 = vmatprep.subr.mxu0 %v1790
    %2888 = vmatpush1.msra.mxu0 %v1789
    %2889 = vmatprep.subr.mxu0 %v1793
    %2890 = vmatpush1.msra.mxu0 %v1792
    %2891 = vmatprep.subr.mxu0 %v1796
    %2892 = vmatpush1.msra.mxu0 %v1795
    %2893 = vmatprep.subr.mxu0 %v1799
    %2894 = vmatpush1.msra.mxu0 %v1798
    %2895 = vmatprep.subr.mxu0 %v1802
    %2896 = vmatpush1.msra.mxu0 %v1801
    %2897 = vmatprep.subr.mxu0 %v1805
    %2898 = vmatpush1.msra.mxu0 %v1804
    %2899 = vmatprep.subr.mxu0 %v1808
    %2900 = vmatpush1.msra.mxu0 %v1807
    %2901 = vmatprep.subr.mxu0 %v1811
    %2902 = vmatpush1.msra.mxu0 %v1810
    %2903 = vmatprep.subr.mxu0 %v1814
    %2904 = vmatpush1.msra.mxu0 %v1813
    %2905 = vmatprep.subr.mxu0 %v1817
    %2906 = vmatpush1.msra.mxu0 %v1816
    %2907 = vmatprep.subr.mxu0 %v1820
    %2908 = vmatpush1.msra.mxu0 %v1819
    %2909 = vmatprep.subr.mxu0 0.0
    %2910 = vmatpush1.msra.mxu0 0.0
    %2911 = vmatprep.subr.mxu0 0.0
    %2912 = vmatpush1.msra.mxu0 0.0
    %2913 = vmatprep.subr.mxu0 0.0
    %2914 = vmatpush1.msra.mxu0 0.0
    %2915 = vmatprep.subr.mxu0 0.0
    %2916 = vmatpush1.msra.mxu0 0.0
    %2917 = vmatprep.subr.mxu0 0.0
    %2918 = vmatpush1.msra.mxu0 0.0
    %2919 = vmatprep.subr.mxu0 0.0
    %2920 = vmatpush1.msra.mxu0 0.0
    %2921 = vmatprep.subr.mxu0 0.0
    %2922 = vmatpush1.msra.mxu0 0.0
    %2923 = vmatprep.subr.mxu0 0.0
    %2924 = vmatpush1.msra.mxu0 0.0
    %2925 = vmatprep.subr.mxu0 0.0
    %2926 = vmatpush1.msra.mxu0 0.0
    %2927 = vmatprep.subr.mxu0 0.0
    %2928 = vmatpush1.msra.mxu0 0.0
    %2929 = vmatprep.subr.mxu0 0.0
    %2930 = vmatpush1.msra.mxu0 0.0
    %2931 = vmatprep.subr.mxu0 0.0
    %2932 = vmatpush1.msra.mxu0 0.0
    %2933 = vmatprep.subr.mxu0 0.0
    %2934 = vmatpush1.msra.mxu0 0.0
    %2935 = vmatprep.subr.mxu0 0.0
    %2936 = vmatpush1.msra.mxu0 0.0
    %2937 = vmatprep.subr.mxu0 0.0
    %2938 = vmatpush1.msra.mxu0 0.0
    %2939 = vmatprep.subr.mxu0 0.0
    %2940 = vmatpush1.msra.mxu0 0.0
    %2941 = vmatprep.mubr.f32.mxu0 0.0
    %2942 = vmatmul.mubr.f32.gmra.mrb[0].mxu0 %v2876
    %v2943 = vpop.f32.mrb[0].mxu0
    %v2944 = vadd.f32 0.0, %v2943
    %v2945 = vpop.f32.mrb[0].mxu0
    %v2946 = vadd.f32 0.0, %v2945
    %2947 = vdwg.mxu0
    %2948 = vmatprep.subr.mxu0 0.0
    %2949 = vmatpush1.msra.mxu0 %v1776
    %2950 = vmatprep.subr.mxu0 0.0
    %2951 = vmatpush1.msra.mxu0 %v1779
    %2952 = vmatprep.subr.mxu0 0.0
    %2953 = vmatpush1.msra.mxu0 %v1782
    %2954 = vmatprep.subr.mxu0 0.0
    %2955 = vmatpush1.msra.mxu0 %v1785
    %2956 = vmatprep.subr.mxu0 0.0
    %2957 = vmatpush1.msra.mxu0 %v1788
    %2958 = vmatprep.subr.mxu0 0.0
    %2959 = vmatpush1.msra.mxu0 %v1791
    %2960 = vmatprep.subr.mxu0 0.0
    %2961 = vmatpush1.msra.mxu0 %v1794
    %2962 = vmatprep.subr.mxu0 0.0
    %2963 = vmatpush1.msra.mxu0 %v1797
    %2964 = vmatprep.subr.mxu0 0.0
    %2965 = vmatpush1.msra.mxu0 %v1800
    %2966 = vmatprep.subr.mxu0 0.0
    %2967 = vmatpush1.msra.mxu0 %v1803
    %2968 = vmatprep.subr.mxu0 0.0
    %2969 = vmatpush1.msra.mxu0 %v1806
    %2970 = vmatprep.subr.mxu0 0.0
    %2971 = vmatpush1.msra.mxu0 %v1809
    %2972 = vmatprep.subr.mxu0 0.0
    %2973 = vmatpush1.msra.mxu0 %v1812
    %2974 = vmatprep.subr.mxu0 0.0
    %2975 = vmatpush1.msra.mxu0 %v1815
    %2976 = vmatprep.subr.mxu0 0.0
    %2977 = vmatpush1.msra.mxu0 %v1818
    %2978 = vmatprep.subr.mxu0 0.0
    %2979 = vmatpush1.msra.mxu0 %v1821
    %2980 = vmatprep.subr.mxu0 0.0
    %2981 = vmatpush1.msra.mxu0 0.0
    %2982 = vmatprep.subr.mxu0 0.0
    %2983 = vmatpush1.msra.mxu0 0.0
    %2984 = vmatprep.subr.mxu0 0.0
    %2985 = vmatpush1.msra.mxu0 0.0
    %2986 = vmatprep.subr.mxu0 0.0
    %2987 = vmatpush1.msra.mxu0 0.0
    %2988 = vmatprep.subr.mxu0 0.0
    %2989 = vmatpush1.msra.mxu0 0.0
    %2990 = vmatprep.subr.mxu0 0.0
    %2991 = vmatpush1.msra.mxu0 0.0
    %2992 = vmatprep.subr.mxu0 0.0
    %2993 = vmatpush1.msra.mxu0 0.0
    %2994 = vmatprep.subr.mxu0 0.0
    %2995 = vmatpush1.msra.mxu0 0.0
    %2996 = vmatprep.subr.mxu0 0.0
    %2997 = vmatpush1.msra.mxu0 0.0
    %2998 = vmatprep.subr.mxu0 0.0
    %2999 = vmatpush1.msra.mxu0 0.0
    %3000 = vmatprep.subr.mxu0 0.0
    %3001 = vmatpush1.msra.mxu0 0.0
    %3002 = vmatprep.subr.mxu0 0.0
    %3003 = vmatpush1.msra.mxu0 0.0
    %3004 = vmatprep.subr.mxu0 0.0
    %3005 = vmatpush1.msra.mxu0 0.0
    %3006 = vmatprep.subr.mxu0 0.0
    %3007 = vmatpush1.msra.mxu0 0.0
    %3008 = vmatprep.subr.mxu0 0.0
    %3009 = vmatpush1.msra.mxu0 0.0
    %3010 = vmatprep.subr.mxu0 0.0
    %3011 = vmatpush1.msra.mxu0 0.0
    %3012 = vmatprep.mubr.f32.mxu0 0.0
    %3013 = vmatmul.mubr.f32.gmra.mrb[0].mxu0 %v2876
    %v3014 = vpop.f32.mrb[0].mxu0
    %v3015 = vadd.f32 0.0, %v3014
    %v3016 = vpop.f32.mrb[0].mxu0
    %3017 = vdwg.mxu0
    %v3018 = vadd.f32 %v1941, %v2944
    %v3019 = vxor.u32 %v3018, 2147483648
    %v3020 = vmul.f32 %v3019, 1.442695
    %v3021 = vpow.pop %v3020
    %v3022 = vadd.f32 %v3021, 1.0
    %v3023 = vrcp.pop %v3022
    %v3024 = vmul.f32 1.0, %v3023
    %v3025 = vadd.f32 %v1943, %v2946
    %v3026 = vxor.u32 %v3025, 2147483648
    %v3027 = vmul.f32 %v3026, 1.442695
    %v3028 = vpow.pop %v3027
    %v3029 = vadd.f32 %v3028, 1.0
    %v3030 = vrcp.pop %v3029
    %v3031 = vmul.f32 1.0, %v3030
    %v3032 = vadd.f32 %v3015, %v1827
    %v3033 = vmul.f32 %v3024, %v3032
    %v3034 = vadd.f32 %v2049, %v3033
    %v3035 = vtanh.pop %v3034
    %v3036 = vsub.f32 1.0, %v3031
    %v3037 = vmul.f32 %v3036, %v3035
    %v3038 = vmul.f32 %v3031, %v2876
    %v3039 = vadd.f32 %v3037, %v3038
    %3040 = vmatprep.subr.mxu0 %v1775
    %3041 = vmatpush1.msra.mxu0 %v1774
    %3042 = vmatprep.subr.mxu0 %v1778
    %3043 = vmatpush1.msra.mxu0 %v1777
    %3044 = vmatprep.subr.mxu0 %v1781
    %3045 = vmatpush1.msra.mxu0 %v1780
    %3046 = vmatprep.subr.mxu0 %v1784
    %3047 = vmatpush1.msra.mxu0 %v1783
    %3048 = vmatprep.subr.mxu0 %v1787
    %3049 = vmatpush1.msra.mxu0 %v1786
    %3050 = vmatprep.subr.mxu0 %v1790
    %3051 = vmatpush1.msra.mxu0 %v1789
    %3052 = vmatprep.subr.mxu0 %v1793
    %3053 = vmatpush1.msra.mxu0 %v1792
    %3054 = vmatprep.subr.mxu0 %v1796
    %3055 = vmatpush1.msra.mxu0 %v1795
    %3056 = vmatprep.subr.mxu0 %v1799
    %3057 = vmatpush1.msra.mxu0 %v1798
    %3058 = vmatprep.subr.mxu0 %v1802
    %3059 = vmatpush1.msra.mxu0 %v1801
    %3060 = vmatprep.subr.mxu0 %v1805
    %3061 = vmatpush1.msra.mxu0 %v1804
    %3062 = vmatprep.subr.mxu0 %v1808
    %3063 = vmatpush1.msra.mxu0 %v1807
    %3064 = vmatprep.subr.mxu0 %v1811
    %3065 = vmatpush1.msra.mxu0 %v1810
    %3066 = vmatprep.subr.mxu0 %v1814
    %3067 = vmatpush1.msra.mxu0 %v1813
    %3068 = vmatprep.subr.mxu0 %v1817
    %3069 = vmatpush1.msra.mxu0 %v1816
    %3070 = vmatprep.subr.mxu0 %v1820
    %3071 = vmatpush1.msra.mxu0 %v1819
    %3072 = vmatprep.subr.mxu0 0.0
    %3073 = vmatpush1.msra.mxu0 0.0
    %3074 = vmatprep.subr.mxu0 0.0
    %3075 = vmatpush1.msra.mxu0 0.0
    %3076 = vmatprep.subr.mxu0 0.0
    %3077 = vmatpush1.msra.mxu0 0.0
    %3078 = vmatprep.subr.mxu0 0.0
    %3079 = vmatpush1.msra.mxu0 0.0
    %3080 = vmatprep.subr.mxu0 0.0
    %3081 = vmatpush1.msra.mxu0 0.0
    %3082 = vmatprep.subr.mxu0 0.0
    %3083 = vmatpush1.msra.mxu0 0.0
    %3084 = vmatprep.subr.mxu0 0.0
    %3085 = vmatpush1.msra.mxu0 0.0
    %3086 = vmatprep.subr.mxu0 0.0
    %3087 = vmatpush1.msra.mxu0 0.0
    %3088 = vmatprep.subr.mxu0 0.0
    %3089 = vmatpush1.msra.mxu0 0.0
    %3090 = vmatprep.subr.mxu0 0.0
    %3091 = vmatpush1.msra.mxu0 0.0
    %3092 = vmatprep.subr.mxu0 0.0
    %3093 = vmatpush1.msra.mxu0 0.0
    %3094 = vmatprep.subr.mxu0 0.0
    %3095 = vmatpush1.msra.mxu0 0.0
    %3096 = vmatprep.subr.mxu0 0.0
    %3097 = vmatpush1.msra.mxu0 0.0
    %3098 = vmatprep.subr.mxu0 0.0
    %3099 = vmatpush1.msra.mxu0 0.0
    %3100 = vmatprep.subr.mxu0 0.0
    %3101 = vmatpush1.msra.mxu0 0.0
    %3102 = vmatprep.subr.mxu0 0.0
    %3103 = vmatpush1.msra.mxu0 0.0
    %3104 = vmatprep.mubr.f32.mxu0 0.0
    %3105 = vmatmul.mubr.f32.gmra.mrb[0].mxu0 %v3039
    %v3106 = vpop.f32.mrb[0].mxu0
    %v3107 = vadd.f32 0.0, %v3106
    %v3108 = vpop.f32.mrb[0].mxu0
    %v3109 = vadd.f32 0.0, %v3108
    %3110 = vdwg.mxu0
    %3111 = vmatprep.subr.mxu0 0.0
    %3112 = vmatpush1.msra.mxu0 %v1776
    %3113 = vmatprep.subr.mxu0 0.0
    %3114 = vmatpush1.msra.mxu0 %v1779
    %3115 = vmatprep.subr.mxu0 0.0
    %3116 = vmatpush1.msra.mxu0 %v1782
    %3117 = vmatprep.subr.mxu0 0.0
    %3118 = vmatpush1.msra.mxu0 %v1785
    %3119 = vmatprep.subr.mxu0 0.0
    %3120 = vmatpush1.msra.mxu0 %v1788
    %3121 = vmatprep.subr.mxu0 0.0
    %3122 = vmatpush1.msra.mxu0 %v1791
    %3123 = vmatprep.subr.mxu0 0.0
    %3124 = vmatpush1.msra.mxu0 %v1794
    %3125 = vmatprep.subr.mxu0 0.0
    %3126 = vmatpush1.msra.mxu0 %v1797
    %3127 = vmatprep.subr.mxu0 0.0
    %3128 = vmatpush1.msra.mxu0 %v1800
    %3129 = vmatprep.subr.mxu0 0.0
    %3130 = vmatpush1.msra.mxu0 %v1803
    %3131 = vmatprep.subr.mxu0 0.0
    %3132 = vmatpush1.msra.mxu0 %v1806
    %3133 = vmatprep.subr.mxu0 0.0
    %3134 = vmatpush1.msra.mxu0 %v1809
    %3135 = vmatprep.subr.mxu0 0.0
    %3136 = vmatpush1.msra.mxu0 %v1812
    %3137 = vmatprep.subr.mxu0 0.0
    %3138 = vmatpush1.msra.mxu0 %v1815
    %3139 = vmatprep.subr.mxu0 0.0
    %3140 = vmatpush1.msra.mxu0 %v1818
    %3141 = vmatprep.subr.mxu0 0.0
    %3142 = vmatpush1.msra.mxu0 %v1821
    %3143 = vmatprep.subr.mxu0 0.0
    %3144 = vmatpush1.msra.mxu0 0.0
    %3145 = vmatprep.subr.mxu0 0.0
    %3146 = vmatpush1.msra.mxu0 0.0
    %3147 = vmatprep.subr.mxu0 0.0
    %3148 = vmatpush1.msra.mxu0 0.0
    %3149 = vmatprep.subr.mxu0 0.0
    %3150 = vmatpush1.msra.mxu0 0.0
    %3151 = vmatprep.subr.mxu0 0.0
    %3152 = vmatpush1.msra.mxu0 0.0
    %3153 = vmatprep.subr.mxu0 0.0
    %3154 = vmatpush1.msra.mxu0 0.0
    %3155 = vmatprep.subr.mxu0 0.0
    %3156 = vmatpush1.msra.mxu0 0.0
    %3157 = vmatprep.subr.mxu0 0.0
    %3158 = vmatpush1.msra.mxu0 0.0
    %3159 = vmatprep.subr.mxu0 0.0
    %3160 = vmatpush1.msra.mxu0 0.0
    %3161 = vmatprep.subr.mxu0 0.0
    %3162 = vmatpush1.msra.mxu0 0.0
    %3163 = vmatprep.subr.mxu0 0.0
    %3164 = vmatpush1.msra.mxu0 0.0
    %3165 = vmatprep.subr.mxu0 0.0
    %3166 = vmatpush1.msra.mxu0 0.0
    %3167 = vmatprep.subr.mxu0 0.0
    %3168 = vmatpush1.msra.mxu0 0.0
    %3169 = vmatprep.subr.mxu0 0.0
    %3170 = vmatpush1.msra.mxu0 0.0
    %3171 = vmatprep.subr.mxu0 0.0
    %3172 = vmatpush1.msra.mxu0 0.0
    %3173 = vmatprep.subr.mxu0 0.0
    %3174 = vmatpush1.msra.mxu0 0.0
    %3175 = vmatprep.mubr.f32.mxu0 0.0
    %3176 = vmatmul.mubr.f32.gmra.mrb[0].mxu0 %v3039
    %v3177 = vpop.f32.mrb[0].mxu0
    %v3178 = vadd.f32 0.0, %v3177
    %v3179 = vpop.f32.mrb[0].mxu0
    %3180 = vdwg.mxu0
    %v3181 = vadd.f32 %v1947, %v3107
    %v3182 = vxor.u32 %v3181, 2147483648
    %v3183 = vmul.f32 %v3182, 1.442695
    %v3184 = vpow.pop %v3183
    %v3185 = vadd.f32 %v3184, 1.0
    %v3186 = vrcp.pop %v3185
    %v3187 = vmul.f32 1.0, %v3186
    %v3188 = vadd.f32 %v1949, %v3109
    %v3189 = vxor.u32 %v3188, 2147483648
    %v3190 = vmul.f32 %v3189, 1.442695
    %v3191 = vpow.pop %v3190
    %v3192 = vadd.f32 %v3191, 1.0
    %v3193 = vrcp.pop %v3192
    %v3194 = vmul.f32 1.0, %v3193
    %v3195 = vadd.f32 %v3178, %v1827
    %v3196 = vmul.f32 %v3187, %v3195
    %v3197 = vadd.f32 %v2054, %v3196
    %v3198 = vtanh.pop %v3197
    %v3199 = vsub.f32 1.0, %v3194
    %v3200 = vmul.f32 %v3199, %v3198
    %v3201 = vmul.f32 %v3194, %v3039
    %v3202 = vadd.f32 %v3200, %v3201
    %3203 = vmatprep.subr.mxu0 %v1775
    %3204 = vmatpush1.msra.mxu0 %v1774
    %3205 = vmatprep.subr.mxu0 %v1778
    %3206 = vmatpush1.msra.mxu0 %v1777
    %3207 = vmatprep.subr.mxu0 %v1781
    %3208 = vmatpush1.msra.mxu0 %v1780
    %3209 = vmatprep.subr.mxu0 %v1784
    %3210 = vmatpush1.msra.mxu0 %v1783
    %3211 = vmatprep.subr.mxu0 %v1787
    %3212 = vmatpush1.msra.mxu0 %v1786
    %3213 = vmatprep.subr.mxu0 %v1790
    %3214 = vmatpush1.msra.mxu0 %v1789
    %3215 = vmatprep.subr.mxu0 %v1793
    %3216 = vmatpush1.msra.mxu0 %v1792
    %3217 = vmatprep.subr.mxu0 %v1796
    %3218 = vmatpush1.msra.mxu0 %v1795
    %3219 = vmatprep.subr.mxu0 %v1799
    %3220 = vmatpush1.msra.mxu0 %v1798
    %3221 = vmatprep.subr.mxu0 %v1802
    %3222 = vmatpush1.msra.mxu0 %v1801
    %3223 = vmatprep.subr.mxu0 %v1805
    %3224 = vmatpush1.msra.mxu0 %v1804
    %3225 = vmatprep.subr.mxu0 %v1808
    %3226 = vmatpush1.msra.mxu0 %v1807
    %3227 = vmatprep.subr.mxu0 %v1811
    %3228 = vmatpush1.msra.mxu0 %v1810
    %3229 = vmatprep.subr.mxu0 %v1814
    %3230 = vmatpush1.msra.mxu0 %v1813
    %3231 = vmatprep.subr.mxu0 %v1817
    %3232 = vmatpush1.msra.mxu0 %v1816
    %3233 = vmatprep.subr.mxu0 %v1820
    %3234 = vmatpush1.msra.mxu0 %v1819
    %3235 = vmatprep.subr.mxu0 0.0
    %3236 = vmatpush1.msra.mxu0 0.0
    %3237 = vmatprep.subr.mxu0 0.0
    %3238 = vmatpush1.msra.mxu0 0.0
    %3239 = vmatprep.subr.mxu0 0.0
    %3240 = vmatpush1.msra.mxu0 0.0
    %3241 = vmatprep.subr.mxu0 0.0
    %3242 = vmatpush1.msra.mxu0 0.0
    %3243 = vmatprep.subr.mxu0 0.0
    %3244 = vmatpush1.msra.mxu0 0.0
    %3245 = vmatprep.subr.mxu0 0.0
    %3246 = vmatpush1.msra.mxu0 0.0
    %3247 = vmatprep.subr.mxu0 0.0
    %3248 = vmatpush1.msra.mxu0 0.0
    %3249 = vmatprep.subr.mxu0 0.0
    %3250 = vmatpush1.msra.mxu0 0.0
    %3251 = vmatprep.subr.mxu0 0.0
    %3252 = vmatpush1.msra.mxu0 0.0
    %3253 = vmatprep.subr.mxu0 0.0
    %3254 = vmatpush1.msra.mxu0 0.0
    %3255 = vmatprep.subr.mxu0 0.0
    %3256 = vmatpush1.msra.mxu0 0.0
    %3257 = vmatprep.subr.mxu0 0.0
    %3258 = vmatpush1.msra.mxu0 0.0
    %3259 = vmatprep.subr.mxu0 0.0
    %3260 = vmatpush1.msra.mxu0 0.0
    %3261 = vmatprep.subr.mxu0 0.0
    %3262 = vmatpush1.msra.mxu0 0.0
    %3263 = vmatprep.subr.mxu0 0.0
    %3264 = vmatpush1.msra.mxu0 0.0
    %3265 = vmatprep.subr.mxu0 0.0
    %3266 = vmatpush1.msra.mxu0 0.0
    %3267 = vmatprep.mubr.f32.mxu0 0.0
    %3268 = vmatmul.mubr.f32.gmra.mrb[0].mxu0 %v3202
    %v3269 = vpop.f32.mrb[0].mxu0
    %v3270 = vadd.f32 0.0, %v3269
    %v3271 = vpop.f32.mrb[0].mxu0
    %v3272 = vadd.f32 0.0, %v3271
    %3273 = vdwg.mxu0
    %3274 = vmatprep.subr.mxu0 0.0
    %3275 = vmatpush1.msra.mxu0 %v1776
    %3276 = vmatprep.subr.mxu0 0.0
    %3277 = vmatpush1.msra.mxu0 %v1779
    %3278 = vmatprep.subr.mxu0 0.0
    %3279 = vmatpush1.msra.mxu0 %v1782
    %3280 = vmatprep.subr.mxu0 0.0
    %3281 = vmatpush1.msra.mxu0 %v1785
    %3282 = vmatprep.subr.mxu0 0.0
    %3283 = vmatpush1.msra.mxu0 %v1788
    %3284 = vmatprep.subr.mxu0 0.0
    %3285 = vmatpush1.msra.mxu0 %v1791
    %3286 = vmatprep.subr.mxu0 0.0
    %3287 = vmatpush1.msra.mxu0 %v1794
    %3288 = vmatprep.subr.mxu0 0.0
    %3289 = vmatpush1.msra.mxu0 %v1797
    %3290 = vmatprep.subr.mxu0 0.0
    %3291 = vmatpush1.msra.mxu0 %v1800
    %3292 = vmatprep.subr.mxu0 0.0
    %3293 = vmatpush1.msra.mxu0 %v1803
    %3294 = vmatprep.subr.mxu0 0.0
    %3295 = vmatpush1.msra.mxu0 %v1806
    %3296 = vmatprep.subr.mxu0 0.0
    %3297 = vmatpush1.msra.mxu0 %v1809
    %3298 = vmatprep.subr.mxu0 0.0
    %3299 = vmatpush1.msra.mxu0 %v1812
    %3300 = vmatprep.subr.mxu0 0.0
    %3301 = vmatpush1.msra.mxu0 %v1815
    %3302 = vmatprep.subr.mxu0 0.0
    %3303 = vmatpush1.msra.mxu0 %v1818
    %3304 = vmatprep.subr.mxu0 0.0
    %3305 = vmatpush1.msra.mxu0 %v1821
    %3306 = vmatprep.subr.mxu0 0.0
    %3307 = vmatpush1.msra.mxu0 0.0
    %3308 = vmatprep.subr.mxu0 0.0
    %3309 = vmatpush1.msra.mxu0 0.0
    %3310 = vmatprep.subr.mxu0 0.0
    %3311 = vmatpush1.msra.mxu0 0.0
    %3312 = vmatprep.subr.mxu0 0.0
    %3313 = vmatpush1.msra.mxu0 0.0
    %3314 = vmatprep.subr.mxu0 0.0
    %3315 = vmatpush1.msra.mxu0 0.0
    %3316 = vmatprep.subr.mxu0 0.0
    %3317 = vmatpush1.msra.mxu0 0.0
    %3318 = vmatprep.subr.mxu0 0.0
    %3319 = vmatpush1.msra.mxu0 0.0
    %3320 = vmatprep.subr.mxu0 0.0
    %3321 = vmatpush1.msra.mxu0 0.0
    %3322 = vmatprep.subr.mxu0 0.0
    %3323 = vmatpush1.msra.mxu0 0.0
    %3324 = vmatprep.subr.mxu0 0.0
    %3325 = vmatpush1.msra.mxu0 0.0
    %3326 = vmatprep.subr.mxu0 0.0
    %3327 = vmatpush1.msra.mxu0 0.0
    %3328 = vmatprep.subr.mxu0 0.0
    %3329 = vmatpush1.msra.mxu0 0.0
    %3330 = vmatprep.subr.mxu0 0.0
    %3331 = vmatpush1.msra.mxu0 0.0
    %3332 = vmatprep.subr.mxu0 0.0
    %3333 = vmatpush1.msra.mxu0 0.0
    %3334 = vmatprep.subr.mxu0 0.0
    %3335 = vmatpush1.msra.mxu0 0.0
    %3336 = vmatprep.subr.mxu0 0.0
    %3337 = vmatpush1.msra.mxu0 0.0
    %3338 = vmatprep.mubr.f32.mxu0 0.0
    %3339 = vmatmul.mubr.f32.gmra.mrb[0].mxu0 %v3202
    %v3340 = vpop.f32.mrb[0].mxu0
    %v3341 = vadd.f32 0.0, %v3340
    %v3342 = vpop.f32.mrb[0].mxu0
    %3343 = vdwg.mxu0
    %v3344 = vadd.f32 %v1953, %v3270
    %v3345 = vxor.u32 %v3344, 2147483648
    %v3346 = vmul.f32 %v3345, 1.442695
    %v3347 = vpow.pop %v3346
    %v3348 = vadd.f32 %v3347, 1.0
    %v3349 = vrcp.pop %v3348
    %v3350 = vmul.f32 1.0, %v3349
    %v3351 = vadd.f32 %v1955, %v3272
    %v3352 = vxor.u32 %v3351, 2147483648
    %v3353 = vmul.f32 %v3352, 1.442695
    %v3354 = vpow.pop %v3353
    %v3355 = vadd.f32 %v3354, 1.0
    %v3356 = vrcp.pop %v3355
    %v3357 = vmul.f32 1.0, %v3356
    %v3358 = vadd.f32 %v3341, %v1827
    %v3359 = vmul.f32 %v3350, %v3358
    %v3360 = vadd.f32 %v2059, %v3359
    %v3361 = vtanh.pop %v3360
    %v3362 = vsub.f32 1.0, %v3357
    %v3363 = vmul.f32 %v3362, %v3361
    %v3364 = vmul.f32 %v3357, %v3202
    %v3365 = vadd.f32 %v3363, %v3364
    %3366 = vst [vmem:[#allocation11] sm:$0xff] %v3365
    // Predicated region
    $region50: #{tpu_custom_call.1} parent=1 // pred_check
      _
    $region51: #{tpu_custom_call.1} parent=1 // pred_check_branch
      %3368 = sbr.rel (0) target = $region53
    $region52: #{tpu_custom_call.1} parent=1 // pred_region
      %s3370 = ssub.s32 128, 128
      %3371 = vsyncadd [#allocation4], %s3370
      %s3373 = sshll.u32 [#allocation11], 4
      %s3374 = int_to_ptr.vmem [resolvable:$true] %s3373
      %3376 = dma.vmem_to_hbm [thread:$0]  %s3374, 128, %s7, [#allocation4]
    $region53: #{tpu_custom_call.1} parent=1 // pred_fallthru
      _
    // Predicated region
    $region54: #{tpu_custom_call.1} parent=1 // pred_check
      _
    $region55: #{tpu_custom_call.1} parent=1 // pred_check_branch
      %3378 = sbr.rel (0) target = $region57
    $region56: #{tpu_custom_call.1} parent=1 // pred_region
      %3379 = dma.done [#allocation4], 128
    $region57: #{tpu_custom_call.1} parent=1 // pred_fallthru
      _
    %3380 = vsyncpa [#allocation3], 1
    %3381 = vsyncpa [#allocation6], 1
    %3382 = vsyncpa [#allocation9], 1
    %3383 = vsyncpa [#allocation4], 1

</llo_original>
